<compile_context>
chip_gen: v7x
topology: tpu7x:2x2x1
jax: 0.10.0
libtpu: 0.0.40
codegen_flags: <defaults>
</compile_context>

<pallas_src>
import functools
import math

import jax
import jax.numpy as jnp
from jax.experimental import pallas as pl
from jax.experimental.pallas import tpu as pltpu

# MXU-native operand dtype; accumulation stays f32 via preferred_element_type.
_MATMUL_DTYPE = jnp.bfloat16


def _pick_tile(dim, unit, target):
    """Largest multiple of `unit` that divides `dim` and is <= target; full dim otherwise
    (a full-extent block is always legal regardless of the (8,128) rule)."""
    if dim <= target:
        return dim
    t = (target // unit) * unit
    while t >= unit:
        if dim % t == 0:
            return t
        t -= unit
    return dim


# ----------------------------------------------------------------------------- kernels


def _linear_kernel(*refs, activation, nk, has_bias):
    if has_bias:
        x_ref, w_ref, b_ref, o_ref, acc_ref = refs
    else:
        x_ref, w_ref, o_ref, acc_ref = refs
        b_ref = None
    kk = pl.program_id(2)

    @pl.when(kk == 0)
    def _():
        acc_ref[...] = jnp.zeros_like(acc_ref)

    x = x_ref[...].astype(_MATMUL_DTYPE)
    w = w_ref[...].astype(_MATMUL_DTYPE)
    acc_ref[...] += jnp.dot(x, w, preferred_element_type=jnp.float32)

    @pl.when(kk == nk - 1)
    def _():
        acc = acc_ref[...]
        if has_bias:
            acc = acc + b_ref[...]
        if activation == "gelu":
            # exact (erf) GELU -- matches torch.nn.GELU() default
            acc = 0.5 * acc * (1.0 + jax.lax.erf(acc * (1.0 / math.sqrt(2.0))))
        elif activation == "sigmoid":
            acc = jax.nn.sigmoid(acc)
        o_ref[...] = acc.astype(o_ref.dtype)


def linear_pallas(x, w, b=None, activation=None):
    """x: (M, K) @ w: (K, N) [+ b] with optional fused activation -> (M, N)."""
    M, K = x.shape
    N = w.shape[1]
    tm = _pick_tile(M, 8, 256)      # row tile (parallel)
    tn = _pick_tile(N, 128, 512)    # output-lane tile (parallel)
    tk = _pick_tile(K, 128, 512)    # reduction tile (arbitrary, last grid axis)
    gm, gn, gk = M // tm, N // tn, K // tk

    in_specs = [
        pl.BlockSpec((tm, tk), lambda i, j, k: (i, k)),
        pl.BlockSpec((tk, tn), lambda i, j, k: (k, j)),
    ]
    args = [x, w]
    if b is not None:
        in_specs.append(pl.BlockSpec((1, tn), lambda i, j, k: (0, j)))
        args.append(b.reshape(1, N))

    kernel = functools.partial(
        _linear_kernel, activation=activation, nk=gk, has_bias=b is not None
    )
    return pl.pallas_call(
        kernel,
        out_shape=jax.ShapeDtypeStruct((M, N), x.dtype),
        grid=(gm, gn, gk),
        in_specs=in_specs,
        out_specs=pl.BlockSpec((tm, tn), lambda i, j, k: (i, j)),
        scratch_shapes=[pltpu.VMEM((tm, tn), jnp.float32)],
        compiler_params=pltpu.CompilerParams(
            dimension_semantics=("parallel", "parallel", "arbitrary")
        ),
    )(*args)


def _attn_kernel(q_ref, k_ref, v_ref, o_ref, *, n_head, d_head, scale):
    # One batch element per grid step, all heads processed in-kernel.
    for h in range(n_head):
        lo = h * d_head
        qh = q_ref[0, :, lo:lo + d_head].astype(_MATMUL_DTYPE)   # (Nq, Dh)
        kh = k_ref[0, :, lo:lo + d_head].astype(_MATMUL_DTYPE)   # (Nk, Dh)
        vh = v_ref[0, :, lo:lo + d_head].astype(_MATMUL_DTYPE)   # (Nk, Dh)
        s = jax.lax.dot_general(
            qh, kh, (((1,), (1,)), ((), ())), preferred_element_type=jnp.float32
        ) * scale                                                # (Nq, Nk)
        s = s - jnp.max(s, axis=-1, keepdims=True)
        p = jnp.exp(s)
        p = p * pl.reciprocal(jnp.sum(p, axis=-1, keepdims=True), approx=True)
        oh = jnp.dot(p.astype(_MATMUL_DTYPE), vh, preferred_element_type=jnp.float32)
        o_ref[0, :, lo:lo + d_head] = oh.astype(o_ref.dtype)


def attention_pallas(q, k, v, n_head, d_head):
    """q: (B, Nq, H*Dh), k/v: (B, Nk, H*Dh) -> (B, Nq, H*Dh); head split done in-kernel."""
    B, Nq, HD = q.shape
    Nk = k.shape[1]
    kernel = functools.partial(
        _attn_kernel, n_head=n_head, d_head=d_head, scale=1.0 / math.sqrt(d_head)
    )
    return pl.pallas_call(
        kernel,
        out_shape=jax.ShapeDtypeStruct((B, Nq, HD), q.dtype),
        grid=(B,),
        in_specs=[
            pl.BlockSpec((1, Nq, HD), lambda b: (b, 0, 0)),
            pl.BlockSpec((1, Nk, HD), lambda b: (b, 0, 0)),
            pl.BlockSpec((1, Nk, HD), lambda b: (b, 0, 0)),
        ],
        out_specs=pl.BlockSpec((1, Nq, HD), lambda b: (b, 0, 0)),
        compiler_params=pltpu.CompilerParams(dimension_semantics=("parallel",)),
    )(q, k, v)


def _ln_kernel(x_ref, g_ref, b_ref, o_ref, *, eps, pre_scale):
    z = x_ref[...].astype(jnp.float32) * pre_scale
    mu = jnp.mean(z, axis=-1, keepdims=True)
    var = jnp.mean(jnp.square(z - mu), axis=-1, keepdims=True)
    zn = (z - mu) * jax.lax.rsqrt(var + eps)
    o_ref[...] = (zn * g_ref[...] + b_ref[...]).astype(o_ref.dtype)


def layernorm_pallas(x, gamma, beta, eps=1e-5, pre_scale=1.0):
    """LayerNorm(pre_scale * x); x: (M, D)."""
    M, D = x.shape
    tm = _pick_tile(M, 8, 256)
    kernel = functools.partial(_ln_kernel, eps=eps, pre_scale=pre_scale)
    return pl.pallas_call(
        kernel,
        out_shape=jax.ShapeDtypeStruct((M, D), x.dtype),
        grid=(M // tm,),
        in_specs=[
            pl.BlockSpec((tm, D), lambda i: (i, 0)),
            pl.BlockSpec((1, D), lambda i: (0, 0)),
            pl.BlockSpec((1, D), lambda i: (0, 0)),
        ],
        out_specs=pl.BlockSpec((tm, D), lambda i: (i, 0)),
        compiler_params=pltpu.CompilerParams(dimension_semantics=("parallel",)),
    )(x, gamma.reshape(1, D), beta.reshape(1, D))


def _ln_residual_kernel(x_ref, y_ref, g_ref, b_ref, o_ref, *, eps):
    z = x_ref[...].astype(jnp.float32) + y_ref[...].astype(jnp.float32)
    mu = jnp.mean(z, axis=-1, keepdims=True)
    var = jnp.mean(jnp.square(z - mu), axis=-1, keepdims=True)
    zn = (z - mu) * jax.lax.rsqrt(var + eps)
    o_ref[...] = (zn * g_ref[...] + b_ref[...]).astype(o_ref.dtype)


def layernorm_residual_pallas(x, y, gamma, beta, eps=1e-5):
    """LayerNorm(x + y); x, y: (M, D)."""
    M, D = x.shape
    tm = _pick_tile(M, 8, 256)
    kernel = functools.partial(_ln_residual_kernel, eps=eps)
    return pl.pallas_call(
        kernel,
        out_shape=jax.ShapeDtypeStruct((M, D), x.dtype),
        grid=(M // tm,),
        in_specs=[
            pl.BlockSpec((tm, D), lambda i: (i, 0)),
            pl.BlockSpec((tm, D), lambda i: (i, 0)),
            pl.BlockSpec((1, D), lambda i: (0, 0)),
            pl.BlockSpec((1, D), lambda i: (0, 0)),
        ],
        out_specs=pl.BlockSpec((tm, D), lambda i: (i, 0)),
        compiler_params=pltpu.CompilerParams(dimension_semantics=("parallel",)),
    )(x, y, gamma.reshape(1, D), beta.reshape(1, D))


# ------------------------------------------------------------------------- model glue


def multi_head_attention(p, q_in, kv_in, n_head, d_head):
    """q_in: (B, Nq, Dm); kv_in: (B, Nk, Dm) -> (B, Nq, Dm)."""
    B, Nq, Dm = q_in.shape
    Nk = kv_in.shape[1]
    HD = n_head * d_head

    # qkv_bias=False -> biases are identically zero, skip the bias stream entirely.
    if "wqkv" in p:  # self-attention: one fused QKV projection of x
        qkv = linear_pallas(q_in.reshape(B * Nq, Dm), p["wqkv"])
        q = qkv[:, :HD]
        k = qkv[:, HD:2 * HD]
        v = qkv[:, 2 * HD:]
    else:            # cross-attention: Q from qry, fused K/V from ref
        q = linear_pallas(q_in.reshape(B * Nq, Dm), p["wq"])
        kv = linear_pallas(kv_in.reshape(B * Nk, Dm), p["wkv"])
        k = kv[:, :HD]
        v = kv[:, HD:]

    # Keep the head-interleaved (B, N, H*Dh) layout; no XLA reshape/transpose of heads —
    # the head split happens inside the attention kernel via static lane slices.
    q = q.reshape(B, Nq, HD)
    k = k.reshape(B, Nk, HD)
    v = v.reshape(B, Nk, HD)
    out = attention_pallas(q, k, v, n_head, d_head)          # (B, Nq, H*Dh), lane-dense

    out = linear_pallas(out.reshape(B * Nq, HD), p["wproj"], p["bproj"])
    return out.reshape(B, Nq, Dm)


def ffn(p, x2d):
    h = linear_pallas(x2d, p["w1"], p["b1"], activation="gelu")
    return linear_pallas(h, p["w2"], p["b2"])


def attention_block(p, qry, ref, n_head, d_head):
    """Shared body of Cross/SelfAttentionBlock (drop_path = Identity at rate 0)."""
    B, Nq, Dm = qry.shape
    x = multi_head_attention(p["attn"], qry, ref, n_head, d_head)
    x2d = x.reshape(B * Nq, Dm)
    # norm1(x + drop_path(x)) == LayerNorm(2 * x)  (single input stream, scaled in-kernel)
    x2d = layernorm_pallas(x2d, p["n1_g"], p["n1_b"], pre_scale=2.0)
    # norm2(x + drop_path(ffn(x))) == LayerNorm(x + ffn(x))
    h2d = ffn(p["ffn"], x2d)
    x2d = layernorm_residual_pallas(x2d, h2d, p["n2_g"], p["n2_b"])
    return x2d.reshape(B, Nq, Dm)


def copyhead_forward(params, query_emb, refer_emb, n_head, d_head):
    B = query_emb.shape[0]
    Dm = query_emb.shape[-1]
    # prepare_tokens
    cls = jnp.broadcast_to(params["cls_token"], (B, 1, Dm))
    sep = jnp.broadcast_to(params["sep_token"], (B, 1, Dm))
    qry = jnp.concatenate([cls, query_emb], axis=1)
    ref = jnp.concatenate([sep, refer_emb], axis=1)

    # cross-attention block
    x = attention_block(params["co_block"], qry, ref, n_head, d_head)
    # self-attention blocks
    for blk in params["sa_blocks"]:
        x = attention_block(blk, x, x, n_head, d_head)

    # head: Linear(d_model, 1) + Sigmoid on the CLS token
    cls_out = x[:, 0]  # (B, Dm)
    logits = linear_pallas(cls_out, params["head_w"], params["head_b"], activation="sigmoid")
    return logits  # (B, 1)


# --------------------------------------------------------------------- parameter init


def _trunc_normal(key, shape, std=0.02, dtype=jnp.float32):
    return std * jax.random.truncated_normal(key, -2.0, 2.0, shape, dtype)


def init_block_params(key, d_model, n_head, d_head, mlp_ratio, fuse_qkv):
    HD = n_head * d_head
    Dh = d_model * mlp_ratio
    ks = jax.random.split(key, 8)
    wq = _trunc_normal(ks[0], (d_model, HD))
    wk = _trunc_normal(ks[1], (d_model, HD))
    wv = _trunc_normal(ks[2], (d_model, HD))
    if fuse_qkv:
        attn = {"wqkv": jnp.concatenate([wq, wk, wv], axis=1)}   # (Dm, 3*HD)
    else:
        attn = {"wq": wq, "wkv": jnp.concatenate([wk, wv], axis=1)}  # (Dm, HD), (Dm, 2*HD)
    attn["wproj"] = _trunc_normal(ks[3], (HD, d_model))
    attn["bproj"] = jnp.zeros((d_model,), jnp.float32)
    return {
        "attn": attn,
        "n1_g": jnp.ones((d_model,), jnp.float32),
        "n1_b": jnp.zeros((d_model,), jnp.float32),
        "ffn": {
            "w1": _trunc_normal(ks[4], (d_model, Dh)),
            "b1": jnp.zeros((Dh,), jnp.float32),
            "w2": _trunc_normal(ks[5], (Dh, d_model)),
            "b2": jnp.zeros((d_model,), jnp.float32),
        },
        "n2_g": jnp.ones((d_model,), jnp.float32),
        "n2_b": jnp.zeros((d_model,), jnp.float32),
    }


def init_copyhead_params(key, d_model, n_head, d_head, mlp_ratio, depth):
    ks = jax.random.split(key, depth + 4)
    return {
        "cls_token": _trunc_normal(ks[0], (1, 1, d_model)),
        "sep_token": _trunc_normal(ks[1], (1, 1, d_model)),
        "co_block": init_block_params(ks[2], d_model, n_head, d_head, mlp_ratio, fuse_qkv=False),
        "sa_blocks": [
            init_block_params(ks[3 + i], d_model, n_head, d_head, mlp_ratio, fuse_qkv=True)
            for i in range(depth)
        ],
        "head_w": _trunc_normal(ks[3 + depth], (d_model, 1)),
        "head_b": jnp.zeros((1,), jnp.float32),
    }


# --------------------------------------------------------------------------------- run

if __name__ == "__main__":
    # small synthetic config (same structure as CopyHead defaults, scaled down)
    D_MODEL = 64
    N_HEAD = 4
    D_HEAD = 16
    MLP_RATIO = 4
    DEPTH = 2
    BATCH = 2
    SEQ_Q = 7  # -> 8 after cls token
    SEQ_R = 7  # -> 8 after sep token

    root = jax.random.PRNGKey(0)
    kp, kq, kr = jax.random.split(root, 3)
    params = init_copyhead_params(kp, D_MODEL, N_HEAD, D_HEAD, MLP_RATIO, DEPTH)

    query_emb = jax.random.normal(kq, (BATCH, SEQ_Q, D_MODEL), jnp.float32)
    refer_emb = jax.random.normal(kr, (BATCH, SEQ_R, D_MODEL), jnp.float32)

    fwd = jax.jit(functools.partial(copyhead_forward, n_head=N_HEAD, d_head=D_HEAD))
    logits = fwd(params, query_emb, refer_emb)
    jax.block_until_ready(logits)

    assert logits.shape == (BATCH, 1)
    assert bool(jnp.all(jnp.isfinite(logits)))
    assert bool(jnp.all((logits >= 0.0) & (logits <= 1.0)))  # sigmoid output
    print("KERNEL_OK")
</pallas_src>

<mosaic_0001>
module attributes {stable_mosaic.version = 11 : i64} {
  func.func @_linear_kernel(%arg0: i32, %arg1: i32, %arg2: i32, %arg3: memref<16x64xf32, #tpu.memory_space<vmem>>, %arg4: memref<64x128xf32, #tpu.memory_space<vmem>>, %arg5: memref<16x128xf32, #tpu.memory_space<vmem>>, %arg6: memref<16x128xf32, #tpu.memory_space<vmem>>) attributes {dimension_semantics = [#tpu.dimension_semantics<parallel>, #tpu.dimension_semantics<parallel>, #tpu.dimension_semantics<arbitrary>], iteration_bounds = array<i64: 1, 1, 1>, scalar_prefetch = 0 : i64, scratch_operands = 1 : i64, tpu.core_type = #tpu.core_type<tc>, window_params = [{transform_indices = @transform_0, window_bounds = array<i64: 16, 64>}, {transform_indices = @transform_1, window_bounds = array<i64: 64, 128>}, {transform_indices = @transform_2, window_bounds = array<i64: 16, 128>}]} {
    %c0_i32 = arith.constant 0 : i32
    %0 = arith.cmpi eq, %arg2, %c0_i32 : i32
    %1 = arith.extui %0 : i1 to i32
    %c0_i32_0 = arith.constant 0 : i32
    %2 = arith.cmpi ne, %1, %c0_i32_0 : i32
    scf.if %2 {
      %cst_10 = arith.constant 0.000000e+00 : f32
      %14 = vector.broadcast %cst_10 : f32 to vector<16x128xf32>
      %c0_11 = arith.constant 0 : index
      %c0_12 = arith.constant 0 : index
      %15 = vector.load %arg6[%c0_11, %c0_12] : memref<16x128xf32, #tpu.memory_space<vmem>>, vector<16x128xf32>
      tpu.vector_store %arg6[%c0_11, %c0_12], %14 {strides = array<i32>} : memref<16x128xf32, #tpu.memory_space<vmem>>, vector<16x128xf32>,
    } else {
    }
    %c0 = arith.constant 0 : index
    %c0_1 = arith.constant 0 : index
    %3 = vector.load %arg3[%c0, %c0_1] : memref<16x64xf32, #tpu.memory_space<vmem>>, vector<16x64xf32>
    %4 = arith.truncf %3 : vector<16x64xf32> to vector<16x64xbf16>
    %c0_2 = arith.constant 0 : index
    %c0_3 = arith.constant 0 : index
    %5 = vector.load %arg4[%c0_2, %c0_3] : memref<64x128xf32, #tpu.memory_space<vmem>>, vector<64x128xf32>
    %6 = arith.truncf %5 : vector<64x128xf32> to vector<64x128xbf16>
    %c0_4 = arith.constant 0 : index
    %c0_5 = arith.constant 0 : index
    %7 = vector.load %arg6[%c0_4, %c0_5] : memref<16x128xf32, #tpu.memory_space<vmem>>, vector<16x128xf32>
    %cst = arith.constant dense<0.000000e+00> : vector<16x128xf32>
    %8 = tpu.matmul %4, %6, %cst {dimension_numbers = #tpu.dot_dimension_numbers<[1], [0], [0], [1], [0, 0, 1, 1], [], []>} : vector<16x64xbf16>, vector<64x128xbf16>, vector<16x128xf32> -> vector<16x128xf32>
    %9 = arith.addf %7, %8 : vector<16x128xf32>
    %c0_6 = arith.constant 0 : index
    %c0_7 = arith.constant 0 : index
    %10 = vector.load %arg6[%c0_6, %c0_7] : memref<16x128xf32, #tpu.memory_space<vmem>>, vector<16x128xf32>
    tpu.vector_store %arg6[%c0_6, %c0_7], %9 {strides = array<i32>} : memref<16x128xf32, #tpu.memory_space<vmem>>, vector<16x128xf32>,
    %c0_i32_8 = arith.constant 0 : i32
    %11 = arith.cmpi eq, %arg2, %c0_i32_8 : i32
    %12 = arith.extui %11 : i1 to i32
    %c0_i32_9 = arith.constant 0 : i32
    %13 = arith.cmpi ne, %12, %c0_i32_9 : i32
    scf.if %13 {
      %c0_10 = arith.constant 0 : index
      %c0_11 = arith.constant 0 : index
      %14 = vector.load %arg6[%c0_10, %c0_11] : memref<16x128xf32, #tpu.memory_space<vmem>>, vector<16x128xf32>
      %c0_12 = arith.constant 0 : index
      %c0_13 = arith.constant 0 : index
      %15 = vector.load %arg5[%c0_12, %c0_13] : memref<16x128xf32, #tpu.memory_space<vmem>>, vector<16x128xf32>
      tpu.vector_store %arg5[%c0_12, %c0_13], %14 {strides = array<i32>} : memref<16x128xf32, #tpu.memory_space<vmem>>, vector<16x128xf32>,
    } else {
    }
    return
  }
  func.func @transform_0(%arg0: i32, %arg1: i32, %arg2: i32) -> (i32, i32) {
    %c0_i32 = arith.constant 0 : i32
    return %arg0, %arg2 : i32, i32
  }
  func.func @transform_1(%arg0: i32, %arg1: i32, %arg2: i32) -> (i32, i32) {
    %c0_i32 = arith.constant 0 : i32
    return %arg2, %arg1 : i32, i32
  }
  func.func @transform_2(%arg0: i32, %arg1: i32, %arg2: i32) -> (i32, i32) {
    %c0_i32 = arith.constant 0 : i32
    return %arg0, %arg1 : i32, i32
  }
}

module attributes {stable_mosaic.version = 11 : i64} {
  func.func @_linear_kernel(%arg0: i32, %arg1: i32, %arg2: i32, %arg3: memref<16x64xf32, #tpu.memory_space<vmem>>, %arg4: memref<64x64xf32, #tpu.memory_space<vmem>>, %arg5: memref<16x64xf32, #tpu.memory_space<vmem>>, %arg6: memref<16x64xf32, #tpu.memory_space<vmem>>) attributes {dimension_semantics = [#tpu.dimension_semantics<parallel>, #tpu.dimension_semantics<parallel>, #tpu.dimension_semantics<arbitrary>], iteration_bounds = array<i64: 1, 1, 1>, scalar_prefetch = 0 : i64, scratch_operands = 1 : i64, tpu.core_type = #tpu.core_type<tc>, window_params = [{transform_indices = @transform_0, window_bounds = array<i64: 16, 64>}, {transform_indices = @transform_1, window_bounds = array<i64: 64, 64>}, {transform_indices = @transform_2, window_bounds = array<i64: 16, 64>}]} {
    %c0_i32 = arith.constant 0 : i32
    %0 = arith.cmpi eq, %arg2, %c0_i32 : i32
    %1 = arith.extui %0 : i1 to i32
    %c0_i32_0 = arith.constant 0 : i32
    %2 = arith.cmpi ne, %1, %c0_i32_0 : i32
    scf.if %2 {
      %cst_10 = arith.constant 0.000000e+00 : f32
      %14 = vector.broadcast %cst_10 : f32 to vector<16x64xf32>
      %c0_11 = arith.constant 0 : index
      %c0_12 = arith.constant 0 : index
      %15 = vector.load %arg6[%c0_11, %c0_12] : memref<16x64xf32, #tpu.memory_space<vmem>>, vector<16x64xf32>
      tpu.vector_store %arg6[%c0_11, %c0_12], %14 {strides = array<i32>} : memref<16x64xf32, #tpu.memory_space<vmem>>, vector<16x64xf32>,
    } else {
    }
    %c0 = arith.constant 0 : index
    %c0_1 = arith.constant 0 : index
    %3 = vector.load %arg3[%c0, %c0_1] : memref<16x64xf32, #tpu.memory_space<vmem>>, vector<16x64xf32>
    %4 = arith.truncf %3 : vector<16x64xf32> to vector<16x64xbf16>
    %c0_2 = arith.constant 0 : index
    %c0_3 = arith.constant 0 : index
    %5 = vector.load %arg4[%c0_2, %c0_3] : memref<64x64xf32, #tpu.memory_space<vmem>>, vector<64x64xf32>
    %6 = arith.truncf %5 : vector<64x64xf32> to vector<64x64xbf16>
    %c0_4 = arith.constant 0 : index
    %c0_5 = arith.constant 0 : index
    %7 = vector.load %arg6[%c0_4, %c0_5] : memref<16x64xf32, #tpu.memory_space<vmem>>, vector<16x64xf32>
    %cst = arith.constant dense<0.000000e+00> : vector<16x64xf32>
    %8 = tpu.matmul %4, %6, %cst {dimension_numbers = #tpu.dot_dimension_numbers<[1], [0], [0], [1], [0, 0, 1, 1], [], []>} : vector<16x64xbf16>, vector<64x64xbf16>, vector<16x64xf32> -> vector<16x64xf32>
    %9 = arith.addf %7, %8 : vector<16x64xf32>
    %c0_6 = arith.constant 0 : index
    %c0_7 = arith.constant 0 : index
    %10 = vector.load %arg6[%c0_6, %c0_7] : memref<16x64xf32, #tpu.memory_space<vmem>>, vector<16x64xf32>
    tpu.vector_store %arg6[%c0_6, %c0_7], %9 {strides = array<i32>} : memref<16x64xf32, #tpu.memory_space<vmem>>, vector<16x64xf32>,
    %c0_i32_8 = arith.constant 0 : i32
    %11 = arith.cmpi eq, %arg2, %c0_i32_8 : i32
    %12 = arith.extui %11 : i1 to i32
    %c0_i32_9 = arith.constant 0 : i32
    %13 = arith.cmpi ne, %12, %c0_i32_9 : i32
    scf.if %13 {
      %c0_10 = arith.constant 0 : index
      %c0_11 = arith.constant 0 : index
      %14 = vector.load %arg6[%c0_10, %c0_11] : memref<16x64xf32, #tpu.memory_space<vmem>>, vector<16x64xf32>
      %c0_12 = arith.constant 0 : index
      %c0_13 = arith.constant 0 : index
      %15 = vector.load %arg5[%c0_12, %c0_13] : memref<16x64xf32, #tpu.memory_space<vmem>>, vector<16x64xf32>
      tpu.vector_store %arg5[%c0_12, %c0_13], %14 {strides = array<i32>} : memref<16x64xf32, #tpu.memory_space<vmem>>, vector<16x64xf32>,
    } else {
    }
    return
  }
  func.func @transform_0(%arg0: i32, %arg1: i32, %arg2: i32) -> (i32, i32) {
    %c0_i32 = arith.constant 0 : i32
    return %arg0, %arg2 : i32, i32
  }
  func.func @transform_1(%arg0: i32, %arg1: i32, %arg2: i32) -> (i32, i32) {
    %c0_i32 = arith.constant 0 : i32
    return %arg2, %arg1 : i32, i32
  }
  func.func @transform_2(%arg0: i32, %arg1: i32, %arg2: i32) -> (i32, i32) {
    %c0_i32 = arith.constant 0 : i32
    return %arg0, %arg1 : i32, i32
  }
}

module attributes {stable_mosaic.version = 11 : i64} {
  func.func @_linear_kernel(%arg0: i32, %arg1: i32, %arg2: i32, %arg3: memref<16x64xf32, #tpu.memory_space<vmem>>, %arg4: memref<64x64xf32, #tpu.memory_space<vmem>>, %arg5: memref<1x64xf32, #tpu.memory_space<vmem>>, %arg6: memref<16x64xf32, #tpu.memory_space<vmem>>, %arg7: memref<16x64xf32, #tpu.memory_space<vmem>>) attributes {dimension_semantics = [#tpu.dimension_semantics<parallel>, #tpu.dimension_semantics<parallel>, #tpu.dimension_semantics<arbitrary>], iteration_bounds = array<i64: 1, 1, 1>, scalar_prefetch = 0 : i64, scratch_operands = 1 : i64, tpu.core_type = #tpu.core_type<tc>, window_params = [{transform_indices = @transform_0, window_bounds = array<i64: 16, 64>}, {transform_indices = @transform_1, window_bounds = array<i64: 64, 64>}, {transform_indices = @transform_2, window_bounds = array<i64: 1, 64>}, {transform_indices = @transform_3, window_bounds = array<i64: 16, 64>}]} {
    %c0_i32 = arith.constant 0 : i32
    %0 = arith.cmpi eq, %arg2, %c0_i32 : i32
    %1 = arith.extui %0 : i1 to i32
    %c0_i32_0 = arith.constant 0 : i32
    %2 = arith.cmpi ne, %1, %c0_i32_0 : i32
    scf.if %2 {
      %cst_10 = arith.constant 0.000000e+00 : f32
      %14 = vector.broadcast %cst_10 : f32 to vector<16x64xf32>
      %c0_11 = arith.constant 0 : index
      %c0_12 = arith.constant 0 : index
      %15 = vector.load %arg7[%c0_11, %c0_12] : memref<16x64xf32, #tpu.memory_space<vmem>>, vector<16x64xf32>
      tpu.vector_store %arg7[%c0_11, %c0_12], %14 {strides = array<i32>} : memref<16x64xf32, #tpu.memory_space<vmem>>, vector<16x64xf32>,
    } else {
    }
    %c0 = arith.constant 0 : index
    %c0_1 = arith.constant 0 : index
    %3 = vector.load %arg3[%c0, %c0_1] : memref<16x64xf32, #tpu.memory_space<vmem>>, vector<16x64xf32>
    %4 = arith.truncf %3 : vector<16x64xf32> to vector<16x64xbf16>
    %c0_2 = arith.constant 0 : index
    %c0_3 = arith.constant 0 : index
    %5 = vector.load %arg4[%c0_2, %c0_3] : memref<64x64xf32, #tpu.memory_space<vmem>>, vector<64x64xf32>
    %6 = arith.truncf %5 : vector<64x64xf32> to vector<64x64xbf16>
    %c0_4 = arith.constant 0 : index
    %c0_5 = arith.constant 0 : index
    %7 = vector.load %arg7[%c0_4, %c0_5] : memref<16x64xf32, #tpu.memory_space<vmem>>, vector<16x64xf32>
    %cst = arith.constant dense<0.000000e+00> : vector<16x64xf32>
    %8 = tpu.matmul %4, %6, %cst {dimension_numbers = #tpu.dot_dimension_numbers<[1], [0], [0], [1], [0, 0, 1, 1], [], []>} : vector<16x64xbf16>, vector<64x64xbf16>, vector<16x64xf32> -> vector<16x64xf32>
    %9 = arith.addf %7, %8 : vector<16x64xf32>
    %c0_6 = arith.constant 0 : index
    %c0_7 = arith.constant 0 : index
    %10 = vector.load %arg7[%c0_6, %c0_7] : memref<16x64xf32, #tpu.memory_space<vmem>>, vector<16x64xf32>
    tpu.vector_store %arg7[%c0_6, %c0_7], %9 {strides = array<i32>} : memref<16x64xf32, #tpu.memory_space<vmem>>, vector<16x64xf32>,
    %c0_i32_8 = arith.constant 0 : i32
    %11 = arith.cmpi eq, %arg2, %c0_i32_8 : i32
    %12 = arith.extui %11 : i1 to i32
    %c0_i32_9 = arith.constant 0 : i32
    %13 = arith.cmpi ne, %12, %c0_i32_9 : i32
    scf.if %13 {
      %c0_10 = arith.constant 0 : index
      %c0_11 = arith.constant 0 : index
      %14 = vector.load %arg7[%c0_10, %c0_11] : memref<16x64xf32, #tpu.memory_space<vmem>>, vector<16x64xf32>
      %c0_12 = arith.constant 0 : index
      %c0_13 = arith.constant 0 : index
      %15 = vector.load %arg5[%c0_12, %c0_13] : memref<1x64xf32, #tpu.memory_space<vmem>>, vector<1x64xf32>
      %16 = vector.broadcast %15 : vector<1x64xf32> to vector<16x64xf32>
      %17 = arith.addf %14, %16 : vector<16x64xf32>
      %c0_14 = arith.constant 0 : index
      %c0_15 = arith.constant 0 : index
      %18 = vector.load %arg6[%c0_14, %c0_15] : memref<16x64xf32, #tpu.memory_space<vmem>>, vector<16x64xf32>
      tpu.vector_store %arg6[%c0_14, %c0_15], %17 {strides = array<i32>} : memref<16x64xf32, #tpu.memory_space<vmem>>, vector<16x64xf32>,
    } else {
    }
    return
  }
  func.func @transform_0(%arg0: i32, %arg1: i32, %arg2: i32) -> (i32, i32) {
    %c0_i32 = arith.constant 0 : i32
    return %arg0, %arg2 : i32, i32
  }
  func.func @transform_1(%arg0: i32, %arg1: i32, %arg2: i32) -> (i32, i32) {
    %c0_i32 = arith.constant 0 : i32
    return %arg2, %arg1 : i32, i32
  }
  func.func @transform_2(%arg0: i32, %arg1: i32, %arg2: i32) -> (i32, i32) {
    %c0_i32 = arith.constant 0 : i32
    %c0_i32_0 = arith.constant 0 : i32
    return %c0_i32, %arg1 : i32, i32
  }
  func.func @transform_3(%arg0: i32, %arg1: i32, %arg2: i32) -> (i32, i32) {
    %c0_i32 = arith.constant 0 : i32
    return %arg0, %arg1 : i32, i32
  }
}

module attributes {stable_mosaic.version = 11 : i64} {
  func.func @_attn_kernel(%arg0: i32, %arg1: memref<1x8x64xf32, #tpu.memory_space<vmem>>, %arg2: memref<1x8x64xf32, #tpu.memory_space<vmem>>, %arg3: memref<1x8x64xf32, #tpu.memory_space<vmem>>, %arg4: memref<1x8x64xf32, #tpu.memory_space<vmem>>) attributes {dimension_semantics = [#tpu.dimension_semantics<parallel>], iteration_bounds = array<i64: 2>, scalar_prefetch = 0 : i64, scratch_operands = 0 : i64, tpu.core_type = #tpu.core_type<tc>, window_params = [{transform_indices = @transform_0, window_bounds = array<i64: 1, 8, 64>}, {transform_indices = @transform_1, window_bounds = array<i64: 1, 8, 64>}, {transform_indices = @transform_2, window_bounds = array<i64: 1, 8, 64>}, {transform_indices = @transform_3, window_bounds = array<i64: 1, 8, 64>}]} {
    %c0 = arith.constant 0 : index
    %c0_0 = arith.constant 0 : index
    %c0_1 = arith.constant 0 : index
    %0 = vector.load %arg1[%c0, %c0_0, %c0_1] : memref<1x8x64xf32, #tpu.memory_space<vmem>>, vector<1x8x16xf32>
    %1 = vector.shape_cast %0 : vector<1x8x16xf32> to vector<8x16xf32>
    %2 = arith.truncf %1 : vector<8x16xf32> to vector<8x16xbf16>
    %c0_2 = arith.constant 0 : index
    %c0_3 = arith.constant 0 : index
    %c0_4 = arith.constant 0 : index
    %3 = vector.load %arg2[%c0_2, %c0_3, %c0_4] : memref<1x8x64xf32, #tpu.memory_space<vmem>>, vector<1x8x16xf32>
    %4 = vector.shape_cast %3 : vector<1x8x16xf32> to vector<8x16xf32>
    %5 = arith.truncf %4 : vector<8x16xf32> to vector<8x16xbf16>
    %c0_5 = arith.constant 0 : index
    %c0_6 = arith.constant 0 : index
    %c0_7 = arith.constant 0 : index
    %6 = vector.load %arg3[%c0_5, %c0_6, %c0_7] : memref<1x8x64xf32, #tpu.memory_space<vmem>>, vector<1x8x16xf32>
    %7 = vector.shape_cast %6 : vector<1x8x16xf32> to vector<8x16xf32>
    %8 = arith.truncf %7 : vector<8x16xf32> to vector<8x16xbf16>
    %cst = arith.constant dense<0.000000e+00> : vector<8x8xf32>
    %9 = tpu.matmul %2, %5, %cst {dimension_numbers = #tpu.dot_dimension_numbers<[1], [1], [0], [0], [0, 0, 1, 0], [], []>} : vector<8x16xbf16>, vector<8x16xbf16>, vector<8x8xf32> -> vector<8x8xf32>
    %cst_8 = arith.constant 2.500000e-01 : f32
    %10 = vector.broadcast %cst_8 : f32 to vector<8x8xf32>
    %11 = arith.mulf %9, %10 : vector<8x8xf32>
    %cst_9 = arith.constant dense<0xFF800000> : vector<8xf32>
    %12 = vector.multi_reduction <maximumf>, %11, %cst_9 [1] : vector<8x8xf32> to vector<8xf32>
    %13 = vector.shape_cast %12 : vector<8xf32> to vector<8x1xf32>
    %14 = vector.broadcast %13 : vector<8x1xf32> to vector<8x8xf32>
    %15 = arith.subf %11, %14 : vector<8x8xf32>
    %16 = math.exp %15 : vector<8x8xf32>
    %cst_10 = arith.constant dense<0.000000e+00> : vector<8xf32>
    %17 = vector.multi_reduction <add>, %16, %cst_10 [1] : vector<8x8xf32> to vector<8xf32>
    %18 = vector.shape_cast %17 : vector<8xf32> to vector<8x1xf32>
    %19 = tpu.reciprocal %18 {approx = true} : vector<8x1xf32> -> vector<8x1xf32>
    %20 = vector.broadcast %19 : vector<8x1xf32> to vector<8x8xf32>
    %21 = arith.mulf %16, %20 : vector<8x8xf32>
    %22 = arith.truncf %21 : vector<8x8xf32> to vector<8x8xbf16>
    %cst_11 = arith.constant dense<0.000000e+00> : vector<8x16xf32>
    %23 = tpu.matmul %22, %8, %cst_11 {dimension_numbers = #tpu.dot_dimension_numbers<[1], [0], [0], [1], [0, 0, 1, 1], [], []>} : vector<8x8xbf16>, vector<8x16xbf16>, vector<8x16xf32> -> vector<8x16xf32>
    %c0_12 = arith.constant 0 : index
    %c0_13 = arith.constant 0 : index
    %c0_14 = arith.constant 0 : index
    %24 = vector.load %arg4[%c0_12, %c0_13, %c0_14] : memref<1x8x64xf32, #tpu.memory_space<vmem>>, vector<1x8x16xf32>
    %25 = vector.shape_cast %24 : vector<1x8x16xf32> to vector<8x16xf32>
    %26 = vector.shape_cast %23 : vector<8x16xf32> to vector<1x8x16xf32>
    tpu.vector_store %arg4[%c0_12, %c0_13, %c0_14], %26 {strides = array<i32>} : memref<1x8x64xf32, #tpu.memory_space<vmem>>, vector<1x8x16xf32>,
    %c0_15 = arith.constant 0 : index
    %c0_16 = arith.constant 0 : index
    %c16 = arith.constant 16 : index
    %27 = vector.load %arg1[%c0_15, %c0_16, %c16] : memref<1x8x64xf32, #tpu.memory_space<vmem>>, vector<1x8x16xf32>
    %28 = vector.shape_cast %27 : vector<1x8x16xf32> to vector<8x16xf32>
    %29 = arith.truncf %28 : vector<8x16xf32> to vector<8x16xbf16>
    %c0_17 = arith.constant 0 : index
    %c0_18 = arith.constant 0 : index
    %c16_19 = arith.constant 16 : index
    %30 = vector.load %arg2[%c0_17, %c0_18, %c16_19] : memref<1x8x64xf32, #tpu.memory_space<vmem>>, vector<1x8x16xf32>
    %31 = vector.shape_cast %30 : vector<1x8x16xf32> to vector<8x16xf32>
    %32 = arith.truncf %31 : vector<8x16xf32> to vector<8x16xbf16>
    %c0_20 = arith.constant 0 : index
    %c0_21 = arith.constant 0 : index
    %c16_22 = arith.constant 16 : index
    %33 = vector.load %arg3[%c0_20, %c0_21, %c16_22] : memref<1x8x64xf32, #tpu.memory_space<vmem>>, vector<1x8x16xf32>
    %34 = vector.shape_cast %33 : vector<1x8x16xf32> to vector<8x16xf32>
    %35 = arith.truncf %34 : vector<8x16xf32> to vector<8x16xbf16>
    %cst_23 = arith.constant dense<0.000000e+00> : vector<8x8xf32>
    %36 = tpu.matmul %29, %32, %cst_23 {dimension_numbers = #tpu.dot_dimension_numbers<[1], [1], [0], [0], [0, 0, 1, 0], [], []>} : vector<8x16xbf16>, vector<8x16xbf16>, vector<8x8xf32> -> vector<8x8xf32>
    %cst_24 = arith.constant 2.500000e-01 : f32
    %37 = vector.broadcast %cst_24 : f32 to vector<8x8xf32>
    %38 = arith.mulf %36, %37 : vector<8x8xf32>
    %cst_25 = arith.constant dense<0xFF800000> : vector<8xf32>
    %39 = vector.multi_reduction <maximumf>, %38, %cst_25 [1] : vector<8x8xf32> to vector<8xf32>
    %40 = vector.shape_cast %39 : vector<8xf32> to vector<8x1xf32>
    %41 = vector.broadcast %40 : vector<8x1xf32> to vector<8x8xf32>
    %42 = arith.subf %38, %41 : vector<8x8xf32>
    %43 = math.exp %42 : vector<8x8xf32>
    %cst_26 = arith.constant dense<0.000000e+00> : vector<8xf32>
    %44 = vector.multi_reduction <add>, %43, %cst_26 [1] : vector<8x8xf32> to vector<8xf32>
    %45 = vector.shape_cast %44 : vector<8xf32> to vector<8x1xf32>
    %46 = tpu.reciprocal %45 {approx = true} : vector<8x1xf32> -> vector<8x1xf32>
    %47 = vector.broadcast %46 : vector<8x1xf32> to vector<8x8xf32>
    %48 = arith.mulf %43, %47 : vector<8x8xf32>
    %49 = arith.truncf %48 : vector<8x8xf32> to vector<8x8xbf16>
    %cst_27 = arith.constant dense<0.000000e+00> : vector<8x16xf32>
    %50 = tpu.matmul %49, %35, %cst_27 {dimension_numbers = #tpu.dot_dimension_numbers<[1], [0], [0], [1], [0, 0, 1, 1], [], []>} : vector<8x8xbf16>, vector<8x16xbf16>, vector<8x16xf32> -> vector<8x16xf32>
    %c0_28 = arith.constant 0 : index
    %c0_29 = arith.constant 0 : index
    %c16_30 = arith.constant 16 : index
    %51 = vector.load %arg4[%c0_28, %c0_29, %c16_30] : memref<1x8x64xf32, #tpu.memory_space<vmem>>, vector<1x8x16xf32>
    %52 = vector.shape_cast %51 : vector<1x8x16xf32> to vector<8x16xf32>
    %53 = vector.shape_cast %50 : vector<8x16xf32> to vector<1x8x16xf32>
    tpu.vector_store %arg4[%c0_28, %c0_29, %c16_30], %53 {strides = array<i32>} : memref<1x8x64xf32, #tpu.memory_space<vmem>>, vector<1x8x16xf32>,
    %c0_31 = arith.constant 0 : index
    %c0_32 = arith.constant 0 : index
    %c32 = arith.constant 32 : index
    %54 = vector.load %arg1[%c0_31, %c0_32, %c32] : memref<1x8x64xf32, #tpu.memory_space<vmem>>, vector<1x8x16xf32>
    %55 = vector.shape_cast %54 : vector<1x8x16xf32> to vector<8x16xf32>
    %56 = arith.truncf %55 : vector<8x16xf32> to vector<8x16xbf16>
    %c0_33 = arith.constant 0 : index
    %c0_34 = arith.constant 0 : index
    %c32_35 = arith.constant 32 : index
    %57 = vector.load %arg2[%c0_33, %c0_34, %c32_35] : memref<1x8x64xf32, #tpu.memory_space<vmem>>, vector<1x8x16xf32>
    %58 = vector.shape_cast %57 : vector<1x8x16xf32> to vector<8x16xf32>
    %59 = arith.truncf %58 : vector<8x16xf32> to vector<8x16xbf16>
    %c0_36 = arith.constant 0 : index
    %c0_37 = arith.constant 0 : index
    %c32_38 = arith.constant 32 : index
    %60 = vector.load %arg3[%c0_36, %c0_37, %c32_38] : memref<1x8x64xf32, #tpu.memory_space<vmem>>, vector<1x8x16xf32>
    %61 = vector.shape_cast %60 : vector<1x8x16xf32> to vector<8x16xf32>
    %62 = arith.truncf %61 : vector<8x16xf32> to vector<8x16xbf16>
    %cst_39 = arith.constant dense<0.000000e+00> : vector<8x8xf32>
    %63 = tpu.matmul %56, %59, %cst_39 {dimension_numbers = #tpu.dot_dimension_numbers<[1], [1], [0], [0], [0, 0, 1, 0], [], []>} : vector<8x16xbf16>, vector<8x16xbf16>, vector<8x8xf32> -> vector<8x8xf32>
    %cst_40 = arith.constant 2.500000e-01 : f32
    %64 = vector.broadcast %cst_40 : f32 to vector<8x8xf32>
    %65 = arith.mulf %63, %64 : vector<8x8xf32>
    %cst_41 = arith.constant dense<0xFF800000> : vector<8xf32>
    %66 = vector.multi_reduction <maximumf>, %65, %cst_41 [1] : vector<8x8xf32> to vector<8xf32>
    %67 = vector.shape_cast %66 : vector<8xf32> to vector<8x1xf32>
    %68 = vector.broadcast %67 : vector<8x1xf32> to vector<8x8xf32>
    %69 = arith.subf %65, %68 : vector<8x8xf32>
    %70 = math.exp %69 : vector<8x8xf32>
    %cst_42 = arith.constant dense<0.000000e+00> : vector<8xf32>
    %71 = vector.multi_reduction <add>, %70, %cst_42 [1] : vector<8x8xf32> to vector<8xf32>
    %72 = vector.shape_cast %71 : vector<8xf32> to vector<8x1xf32>
    %73 = tpu.reciprocal %72 {approx = true} : vector<8x1xf32> -> vector<8x1xf32>
    %74 = vector.broadcast %73 : vector<8x1xf32> to vector<8x8xf32>
    %75 = arith.mulf %70, %74 : vector<8x8xf32>
    %76 = arith.truncf %75 : vector<8x8xf32> to vector<8x8xbf16>
    %cst_43 = arith.constant dense<0.000000e+00> : vector<8x16xf32>
    %77 = tpu.matmul %76, %62, %cst_43 {dimension_numbers = #tpu.dot_dimension_numbers<[1], [0], [0], [1], [0, 0, 1, 1], [], []>} : vector<8x8xbf16>, vector<8x16xbf16>, vector<8x16xf32> -> vector<8x16xf32>
    %c0_44 = arith.constant 0 : index
    %c0_45 = arith.constant 0 : index
    %c32_46 = arith.constant 32 : index
    %78 = vector.load %arg4[%c0_44, %c0_45, %c32_46] : memref<1x8x64xf32, #tpu.memory_space<vmem>>, vector<1x8x16xf32>
    %79 = vector.shape_cast %78 : vector<1x8x16xf32> to vector<8x16xf32>
    %80 = vector.shape_cast %77 : vector<8x16xf32> to vector<1x8x16xf32>
    tpu.vector_store %arg4[%c0_44, %c0_45, %c32_46], %80 {strides = array<i32>} : memref<1x8x64xf32, #tpu.memory_space<vmem>>, vector<1x8x16xf32>,
    %c0_47 = arith.constant 0 : index
    %c0_48 = arith.constant 0 : index
    %c48 = arith.constant 48 : index
    %81 = vector.load %arg1[%c0_47, %c0_48, %c48] : memref<1x8x64xf32, #tpu.memory_space<vmem>>, vector<1x8x16xf32>
    %82 = vector.shape_cast %81 : vector<1x8x16xf32> to vector<8x16xf32>
    %83 = arith.truncf %82 : vector<8x16xf32> to vector<8x16xbf16>
    %c0_49 = arith.constant 0 : index
    %c0_50 = arith.constant 0 : index
    %c48_51 = arith.constant 48 : index
    %84 = vector.load %arg2[%c0_49, %c0_50, %c48_51] : memref<1x8x64xf32, #tpu.memory_space<vmem>>, vector<1x8x16xf32>
    %85 = vector.shape_cast %84 : vector<1x8x16xf32> to vector<8x16xf32>
    %86 = arith.truncf %85 : vector<8x16xf32> to vector<8x16xbf16>
    %c0_52 = arith.constant 0 : index
    %c0_53 = arith.constant 0 : index
    %c48_54 = arith.constant 48 : index
    %87 = vector.load %arg3[%c0_52, %c0_53, %c48_54] : memref<1x8x64xf32, #tpu.memory_space<vmem>>, vector<1x8x16xf32>
    %88 = vector.shape_cast %87 : vector<1x8x16xf32> to vector<8x16xf32>
    %89 = arith.truncf %88 : vector<8x16xf32> to vector<8x16xbf16>
    %cst_55 = arith.constant dense<0.000000e+00> : vector<8x8xf32>
    %90 = tpu.matmul %83, %86, %cst_55 {dimension_numbers = #tpu.dot_dimension_numbers<[1], [1], [0], [0], [0, 0, 1, 0], [], []>} : vector<8x16xbf16>, vector<8x16xbf16>, vector<8x8xf32> -> vector<8x8xf32>
    %cst_56 = arith.constant 2.500000e-01 : f32
    %91 = vector.broadcast %cst_56 : f32 to vector<8x8xf32>
    %92 = arith.mulf %90, %91 : vector<8x8xf32>
    %cst_57 = arith.constant dense<0xFF800000> : vector<8xf32>
    %93 = vector.multi_reduction <maximumf>, %92, %cst_57 [1] : vector<8x8xf32> to vector<8xf32>
    %94 = vector.shape_cast %93 : vector<8xf32> to vector<8x1xf32>
    %95 = vector.broadcast %94 : vector<8x1xf32> to vector<8x8xf32>
    %96 = arith.subf %92, %95 : vector<8x8xf32>
    %97 = math.exp %96 : vector<8x8xf32>
    %cst_58 = arith.constant dense<0.000000e+00> : vector<8xf32>
    %98 = vector.multi_reduction <add>, %97, %cst_58 [1] : vector<8x8xf32> to vector<8xf32>
    %99 = vector.shape_cast %98 : vector<8xf32> to vector<8x1xf32>
    %100 = tpu.reciprocal %99 {approx = true} : vector<8x1xf32> -> vector<8x1xf32>
    %101 = vector.broadcast %100 : vector<8x1xf32> to vector<8x8xf32>
    %102 = arith.mulf %97, %101 : vector<8x8xf32>
    %103 = arith.truncf %102 : vector<8x8xf32> to vector<8x8xbf16>
    %cst_59 = arith.constant dense<0.000000e+00> : vector<8x16xf32>
    %104 = tpu.matmul %103, %89, %cst_59 {dimension_numbers = #tpu.dot_dimension_numbers<[1], [0], [0], [1], [0, 0, 1, 1], [], []>} : vector<8x8xbf16>, vector<8x16xbf16>, vector<8x16xf32> -> vector<8x16xf32>
    %c0_60 = arith.constant 0 : index
    %c0_61 = arith.constant 0 : index
    %c48_62 = arith.constant 48 : index
    %105 = vector.load %arg4[%c0_60, %c0_61, %c48_62] : memref<1x8x64xf32, #tpu.memory_space<vmem>>, vector<1x8x16xf32>
    %106 = vector.shape_cast %105 : vector<1x8x16xf32> to vector<8x16xf32>
    %107 = vector.shape_cast %104 : vector<8x16xf32> to vector<1x8x16xf32>
    tpu.vector_store %arg4[%c0_60, %c0_61, %c48_62], %107 {strides = array<i32>} : memref<1x8x64xf32, #tpu.memory_space<vmem>>, vector<1x8x16xf32>,
    return
  }
  func.func @transform_0(%arg0: i32) -> (i32, i32, i32) {
    %c0_i32 = arith.constant 0 : i32
    %c0_i32_0 = arith.constant 0 : i32
    %c0_i32_1 = arith.constant 0 : i32
    return %arg0, %c0_i32, %c0_i32_0 : i32, i32, i32
  }
  func.func @transform_1(%arg0: i32) -> (i32, i32, i32) {
    %c0_i32 = arith.constant 0 : i32
    %c0_i32_0 = arith.constant 0 : i32
    %c0_i32_1 = arith.constant 0 : i32
    return %arg0, %c0_i32, %c0_i32_0 : i32, i32, i32
  }
  func.func @transform_2(%arg0: i32) -> (i32, i32, i32) {
    %c0_i32 = arith.constant 0 : i32
    %c0_i32_0 = arith.constant 0 : i32
    %c0_i32_1 = arith.constant 0 : i32
    return %arg0, %c0_i32, %c0_i32_0 : i32, i32, i32
  }
  func.func @transform_3(%arg0: i32) -> (i32, i32, i32) {
    %c0_i32 = arith.constant 0 : i32
    %c0_i32_0 = arith.constant 0 : i32
    %c0_i32_1 = arith.constant 0 : i32
    return %arg0, %c0_i32, %c0_i32_0 : i32, i32, i32
  }
}

module attributes {stable_mosaic.version = 11 : i64} {
  func.func @_ln_kernel(%arg0: i32, %arg1: memref<16x64xf32, #tpu.memory_space<vmem>>, %arg2: memref<1x64xf32, #tpu.memory_space<vmem>>, %arg3: memref<1x64xf32, #tpu.memory_space<vmem>>, %arg4: memref<16x64xf32, #tpu.memory_space<vmem>>) attributes {dimension_semantics = [#tpu.dimension_semantics<parallel>], iteration_bounds = array<i64: 1>, scalar_prefetch = 0 : i64, scratch_operands = 0 : i64, tpu.core_type = #tpu.core_type<tc>, window_params = [{transform_indices = @transform_0, window_bounds = array<i64: 16, 64>}, {pipeline_mode = #tpu.pipeline_mode<synchronous>, transform_indices = @transform_1, window_bounds = array<i64: 1, 64>}, {pipeline_mode = #tpu.pipeline_mode<synchronous>, transform_indices = @transform_2, window_bounds = array<i64: 1, 64>}, {transform_indices = @transform_3, window_bounds = array<i64: 16, 64>}]} {
    %c0 = arith.constant 0 : index
    %c0_0 = arith.constant 0 : index
    %0 = vector.load %arg1[%c0, %c0_0] : memref<16x64xf32, #tpu.memory_space<vmem>>, vector<16x64xf32>
    %cst = arith.constant 2.000000e+00 : f32
    %1 = vector.broadcast %cst : f32 to vector<16x64xf32>
    %2 = arith.mulf %0, %1 : vector<16x64xf32>
    %cst_1 = arith.constant dense<0.000000e+00> : vector<16xf32>
    %3 = vector.multi_reduction <add>, %2, %cst_1 [1] : vector<16x64xf32> to vector<16xf32>
    %4 = vector.shape_cast %3 : vector<16xf32> to vector<16x1xf32>
    %cst_2 = arith.constant 6.400000e+01 : f32
    %5 = vector.broadcast %cst_2 : f32 to vector<16x1xf32>
    %6 = arith.divf %4, %5 : vector<16x1xf32>
    %7 = vector.broadcast %6 : vector<16x1xf32> to vector<16x64xf32>
    %8 = arith.subf %2, %7 : vector<16x64xf32>
    %9 = arith.mulf %8, %8 : vector<16x64xf32>
    %cst_3 = arith.constant dense<0.000000e+00> : vector<16xf32>
    %10 = vector.multi_reduction <add>, %9, %cst_3 [1] : vector<16x64xf32> to vector<16xf32>
    %11 = vector.shape_cast %10 : vector<16xf32> to vector<16x1xf32>
    %cst_4 = arith.constant 6.400000e+01 : f32
    %12 = vector.broadcast %cst_4 : f32 to vector<16x1xf32>
    %13 = arith.divf %11, %12 : vector<16x1xf32>
    %14 = vector.broadcast %6 : vector<16x1xf32> to vector<16x64xf32>
    %15 = arith.subf %2, %14 : vector<16x64xf32>
    %cst_5 = arith.constant 9.99999974E-6 : f32
    %16 = vector.broadcast %cst_5 : f32 to vector<16x1xf32>
    %17 = arith.addf %13, %16 : vector<16x1xf32>
    %18 = math.rsqrt %17 : vector<16x1xf32>
    %19 = vector.broadcast %18 : vector<16x1xf32> to vector<16x64xf32>
    %20 = arith.mulf %15, %19 : vector<16x64xf32>
    %c0_6 = arith.constant 0 : index
    %c0_7 = arith.constant 0 : index
    %21 = vector.load %arg2[%c0_6, %c0_7] : memref<1x64xf32, #tpu.memory_space<vmem>>, vector<1x64xf32>
    %22 = vector.broadcast %21 : vector<1x64xf32> to vector<16x64xf32>
    %23 = arith.mulf %20, %22 : vector<16x64xf32>
    %c0_8 = arith.constant 0 : index
    %c0_9 = arith.constant 0 : index
    %24 = vector.load %arg3[%c0_8, %c0_9] : memref<1x64xf32, #tpu.memory_space<vmem>>, vector<1x64xf32>
    %25 = vector.broadcast %24 : vector<1x64xf32> to vector<16x64xf32>
    %26 = arith.addf %23, %25 : vector<16x64xf32>
    %c0_10 = arith.constant 0 : index
    %c0_11 = arith.constant 0 : index
    %27 = vector.load %arg4[%c0_10, %c0_11] : memref<16x64xf32, #tpu.memory_space<vmem>>, vector<16x64xf32>
    tpu.vector_store %arg4[%c0_10, %c0_11], %26 {strides = array<i32>} : memref<16x64xf32, #tpu.memory_space<vmem>>, vector<16x64xf32>,
    return
  }
  func.func @transform_0(%arg0: i32) -> (i32, i32) {
    %c0_i32 = arith.constant 0 : i32
    %c0_i32_0 = arith.constant 0 : i32
    return %arg0, %c0_i32 : i32, i32
  }
  func.func @transform_1(%arg0: i32) -> (i32, i32) {
    %c0_i32 = arith.constant 0 : i32
    %c0_i32_0 = arith.constant 0 : i32
    %c0_i32_1 = arith.constant 0 : i32
    return %c0_i32, %c0_i32_0 : i32, i32
  }
  func.func @transform_2(%arg0: i32) -> (i32, i32) {
    %c0_i32 = arith.constant 0 : i32
    %c0_i32_0 = arith.constant 0 : i32
    %c0_i32_1 = arith.constant 0 : i32
    return %c0_i32, %c0_i32_0 : i32, i32
  }
  func.func @transform_3(%arg0: i32) -> (i32, i32) {
    %c0_i32 = arith.constant 0 : i32
    %c0_i32_0 = arith.constant 0 : i32
    return %arg0, %c0_i32 : i32, i32
  }
}

module attributes {stable_mosaic.version = 11 : i64} {
  func.func @_linear_kernel(%arg0: i32, %arg1: i32, %arg2: i32, %arg3: memref<16x64xf32, #tpu.memory_space<vmem>>, %arg4: memref<64x256xf32, #tpu.memory_space<vmem>>, %arg5: memref<1x256xf32, #tpu.memory_space<vmem>>, %arg6: memref<16x256xf32, #tpu.memory_space<vmem>>, %arg7: memref<16x256xf32, #tpu.memory_space<vmem>>) attributes {dimension_semantics = [#tpu.dimension_semantics<parallel>, #tpu.dimension_semantics<parallel>, #tpu.dimension_semantics<arbitrary>], iteration_bounds = array<i64: 1, 1, 1>, scalar_prefetch = 0 : i64, scratch_operands = 1 : i64, tpu.core_type = #tpu.core_type<tc>, window_params = [{transform_indices = @transform_0, window_bounds = array<i64: 16, 64>}, {transform_indices = @transform_1, window_bounds = array<i64: 64, 256>}, {transform_indices = @transform_2, window_bounds = array<i64: 1, 256>}, {transform_indices = @transform_3, window_bounds = array<i64: 16, 256>}]} {
    %c0_i32 = arith.constant 0 : i32
    %0 = arith.cmpi eq, %arg2, %c0_i32 : i32
    %1 = arith.extui %0 : i1 to i32
    %c0_i32_0 = arith.constant 0 : i32
    %2 = arith.cmpi ne, %1, %c0_i32_0 : i32
    scf.if %2 {
      %cst_10 = arith.constant 0.000000e+00 : f32
      %14 = vector.broadcast %cst_10 : f32 to vector<16x256xf32>
      %c0_11 = arith.constant 0 : index
      %c0_12 = arith.constant 0 : index
      %15 = vector.load %arg7[%c0_11, %c0_12] : memref<16x256xf32, #tpu.memory_space<vmem>>, vector<16x256xf32>
      tpu.vector_store %arg7[%c0_11, %c0_12], %14 {strides = array<i32>} : memref<16x256xf32, #tpu.memory_space<vmem>>, vector<16x256xf32>,
    } else {
    }
    %c0 = arith.constant 0 : index
    %c0_1 = arith.constant 0 : index
    %3 = vector.load %arg3[%c0, %c0_1] : memref<16x64xf32, #tpu.memory_space<vmem>>, vector<16x64xf32>
    %4 = arith.truncf %3 : vector<16x64xf32> to vector<16x64xbf16>
    %c0_2 = arith.constant 0 : index
    %c0_3 = arith.constant 0 : index
    %5 = vector.load %arg4[%c0_2, %c0_3] : memref<64x256xf32, #tpu.memory_space<vmem>>, vector<64x256xf32>
    %6 = arith.truncf %5 : vector<64x256xf32> to vector<64x256xbf16>
    %c0_4 = arith.constant 0 : index
    %c0_5 = arith.constant 0 : index
    %7 = vector.load %arg7[%c0_4, %c0_5] : memref<16x256xf32, #tpu.memory_space<vmem>>, vector<16x256xf32>
    %cst = arith.constant dense<0.000000e+00> : vector<16x256xf32>
    %8 = tpu.matmul %4, %6, %cst {dimension_numbers = #tpu.dot_dimension_numbers<[1], [0], [0], [1], [0, 0, 1, 1], [], []>} : vector<16x64xbf16>, vector<64x256xbf16>, vector<16x256xf32> -> vector<16x256xf32>
    %9 = arith.addf %7, %8 : vector<16x256xf32>
    %c0_6 = arith.constant 0 : index
    %c0_7 = arith.constant 0 : index
    %10 = vector.load %arg7[%c0_6, %c0_7] : memref<16x256xf32, #tpu.memory_space<vmem>>, vector<16x256xf32>
    tpu.vector_store %arg7[%c0_6, %c0_7], %9 {strides = array<i32>} : memref<16x256xf32, #tpu.memory_space<vmem>>, vector<16x256xf32>,
    %c0_i32_8 = arith.constant 0 : i32
    %11 = arith.cmpi eq, %arg2, %c0_i32_8 : i32
    %12 = arith.extui %11 : i1 to i32
    %c0_i32_9 = arith.constant 0 : i32
    %13 = arith.cmpi ne, %12, %c0_i32_9 : i32
    scf.if %13 {
      %c0_10 = arith.constant 0 : index
      %c0_11 = arith.constant 0 : index
      %14 = vector.load %arg7[%c0_10, %c0_11] : memref<16x256xf32, #tpu.memory_space<vmem>>, vector<16x256xf32>
      %c0_12 = arith.constant 0 : index
      %c0_13 = arith.constant 0 : index
      %15 = vector.load %arg5[%c0_12, %c0_13] : memref<1x256xf32, #tpu.memory_space<vmem>>, vector<1x256xf32>
      %16 = vector.broadcast %15 : vector<1x256xf32> to vector<16x256xf32>
      %17 = arith.addf %14, %16 : vector<16x256xf32>
      %cst_14 = arith.constant 5.000000e-01 : f32
      %18 = vector.broadcast %cst_14 : f32 to vector<16x256xf32>
      %19 = arith.mulf %18, %17 : vector<16x256xf32>
      %cst_15 = arith.constant 0.707106769 : f32
      %20 = vector.broadcast %cst_15 : f32 to vector<16x256xf32>
      %21 = arith.mulf %17, %20 : vector<16x256xf32>
      %22 = math.erf %21 : vector<16x256xf32>
      %cst_16 = arith.constant 1.000000e+00 : f32
      %23 = vector.broadcast %cst_16 : f32 to vector<16x256xf32>
      %24 = arith.addf %23, %22 : vector<16x256xf32>
      %25 = arith.mulf %19, %24 : vector<16x256xf32>
      %c0_17 = arith.constant 0 : index
      %c0_18 = arith.constant 0 : index
      %26 = vector.load %arg6[%c0_17, %c0_18] : memref<16x256xf32, #tpu.memory_space<vmem>>, vector<16x256xf32>
      tpu.vector_store %arg6[%c0_17, %c0_18], %25 {strides = array<i32>} : memref<16x256xf32, #tpu.memory_space<vmem>>, vector<16x256xf32>,
    } else {
    }
    return
  }
  func.func @transform_0(%arg0: i32, %arg1: i32, %arg2: i32) -> (i32, i32) {
    %c0_i32 = arith.constant 0 : i32
    return %arg0, %arg2 : i32, i32
  }
  func.func @transform_1(%arg0: i32, %arg1: i32, %arg2: i32) -> (i32, i32) {
    %c0_i32 = arith.constant 0 : i32
    return %arg2, %arg1 : i32, i32
  }
  func.func @transform_2(%arg0: i32, %arg1: i32, %arg2: i32) -> (i32, i32) {
    %c0_i32 = arith.constant 0 : i32
    %c0_i32_0 = arith.constant 0 : i32
    return %c0_i32, %arg1 : i32, i32
  }
  func.func @transform_3(%arg0: i32, %arg1: i32, %arg2: i32) -> (i32, i32) {
    %c0_i32 = arith.constant 0 : i32
    return %arg0, %arg1 : i32, i32
  }
}

module attributes {stable_mosaic.version = 11 : i64} {
  func.func @_linear_kernel(%arg0: i32, %arg1: i32, %arg2: i32, %arg3: memref<16x256xf32, #tpu.memory_space<vmem>>, %arg4: memref<256x64xf32, #tpu.memory_space<vmem>>, %arg5: memref<1x64xf32, #tpu.memory_space<vmem>>, %arg6: memref<16x64xf32, #tpu.memory_space<vmem>>, %arg7: memref<16x64xf32, #tpu.memory_space<vmem>>) attributes {dimension_semantics = [#tpu.dimension_semantics<parallel>, #tpu.dimension_semantics<parallel>, #tpu.dimension_semantics<arbitrary>], iteration_bounds = array<i64: 1, 1, 1>, scalar_prefetch = 0 : i64, scratch_operands = 1 : i64, tpu.core_type = #tpu.core_type<tc>, window_params = [{transform_indices = @transform_0, window_bounds = array<i64: 16, 256>}, {transform_indices = @transform_1, window_bounds = array<i64: 256, 64>}, {transform_indices = @transform_2, window_bounds = array<i64: 1, 64>}, {transform_indices = @transform_3, window_bounds = array<i64: 16, 64>}]} {
    %c0_i32 = arith.constant 0 : i32
    %0 = arith.cmpi eq, %arg2, %c0_i32 : i32
    %1 = arith.extui %0 : i1 to i32
    %c0_i32_0 = arith.constant 0 : i32
    %2 = arith.cmpi ne, %1, %c0_i32_0 : i32
    scf.if %2 {
      %cst_10 = arith.constant 0.000000e+00 : f32
      %14 = vector.broadcast %cst_10 : f32 to vector<16x64xf32>
      %c0_11 = arith.constant 0 : index
      %c0_12 = arith.constant 0 : index
      %15 = vector.load %arg7[%c0_11, %c0_12] : memref<16x64xf32, #tpu.memory_space<vmem>>, vector<16x64xf32>
      tpu.vector_store %arg7[%c0_11, %c0_12], %14 {strides = array<i32>} : memref<16x64xf32, #tpu.memory_space<vmem>>, vector<16x64xf32>,
    } else {
    }
    %c0 = arith.constant 0 : index
    %c0_1 = arith.constant 0 : index
    %3 = vector.load %arg3[%c0, %c0_1] : memref<16x256xf32, #tpu.memory_space<vmem>>, vector<16x256xf32>
    %4 = arith.truncf %3 : vector<16x256xf32> to vector<16x256xbf16>
    %c0_2 = arith.constant 0 : index
    %c0_3 = arith.constant 0 : index
    %5 = vector.load %arg4[%c0_2, %c0_3] : memref<256x64xf32, #tpu.memory_space<vmem>>, vector<256x64xf32>
    %6 = arith.truncf %5 : vector<256x64xf32> to vector<256x64xbf16>
    %c0_4 = arith.constant 0 : index
    %c0_5 = arith.constant 0 : index
    %7 = vector.load %arg7[%c0_4, %c0_5] : memref<16x64xf32, #tpu.memory_space<vmem>>, vector<16x64xf32>
    %cst = arith.constant dense<0.000000e+00> : vector<16x64xf32>
    %8 = tpu.matmul %4, %6, %cst {dimension_numbers = #tpu.dot_dimension_numbers<[1], [0], [0], [1], [0, 0, 1, 1], [], []>} : vector<16x256xbf16>, vector<256x64xbf16>, vector<16x64xf32> -> vector<16x64xf32>
    %9 = arith.addf %7, %8 : vector<16x64xf32>
    %c0_6 = arith.constant 0 : index
    %c0_7 = arith.constant 0 : index
    %10 = vector.load %arg7[%c0_6, %c0_7] : memref<16x64xf32, #tpu.memory_space<vmem>>, vector<16x64xf32>
    tpu.vector_store %arg7[%c0_6, %c0_7], %9 {strides = array<i32>} : memref<16x64xf32, #tpu.memory_space<vmem>>, vector<16x64xf32>,
    %c0_i32_8 = arith.constant 0 : i32
    %11 = arith.cmpi eq, %arg2, %c0_i32_8 : i32
    %12 = arith.extui %11 : i1 to i32
    %c0_i32_9 = arith.constant 0 : i32
    %13 = arith.cmpi ne, %12, %c0_i32_9 : i32
    scf.if %13 {
      %c0_10 = arith.constant 0 : index
      %c0_11 = arith.constant 0 : index
      %14 = vector.load %arg7[%c0_10, %c0_11] : memref<16x64xf32, #tpu.memory_space<vmem>>, vector<16x64xf32>
      %c0_12 = arith.constant 0 : index
      %c0_13 = arith.constant 0 : index
      %15 = vector.load %arg5[%c0_12, %c0_13] : memref<1x64xf32, #tpu.memory_space<vmem>>, vector<1x64xf32>
      %16 = vector.broadcast %15 : vector<1x64xf32> to vector<16x64xf32>
      %17 = arith.addf %14, %16 : vector<16x64xf32>
      %c0_14 = arith.constant 0 : index
      %c0_15 = arith.constant 0 : index
      %18 = vector.load %arg6[%c0_14, %c0_15] : memref<16x64xf32, #tpu.memory_space<vmem>>, vector<16x64xf32>
      tpu.vector_store %arg6[%c0_14, %c0_15], %17 {strides = array<i32>} : memref<16x64xf32, #tpu.memory_space<vmem>>, vector<16x64xf32>,
    } else {
    }
    return
  }
  func.func @transform_0(%arg0: i32, %arg1: i32, %arg2: i32) -> (i32, i32) {
    %c0_i32 = arith.constant 0 : i32
    return %arg0, %arg2 : i32, i32
  }
  func.func @transform_1(%arg0: i32, %arg1: i32, %arg2: i32) -> (i32, i32) {
    %c0_i32 = arith.constant 0 : i32
    return %arg2, %arg1 : i32, i32
  }
  func.func @transform_2(%arg0: i32, %arg1: i32, %arg2: i32) -> (i32, i32) {
    %c0_i32 = arith.constant 0 : i32
    %c0_i32_0 = arith.constant 0 : i32
    return %c0_i32, %arg1 : i32, i32
  }
  func.func @transform_3(%arg0: i32, %arg1: i32, %arg2: i32) -> (i32, i32) {
    %c0_i32 = arith.constant 0 : i32
    return %arg0, %arg1 : i32, i32
  }
}

module attributes {stable_mosaic.version = 11 : i64} {
  func.func @_ln_residual_kernel(%arg0: i32, %arg1: memref<16x64xf32, #tpu.memory_space<vmem>>, %arg2: memref<16x64xf32, #tpu.memory_space<vmem>>, %arg3: memref<1x64xf32, #tpu.memory_space<vmem>>, %arg4: memref<1x64xf32, #tpu.memory_space<vmem>>, %arg5: memref<16x64xf32, #tpu.memory_space<vmem>>) attributes {dimension_semantics = [#tpu.dimension_semantics<parallel>], iteration_bounds = array<i64: 1>, scalar_prefetch = 0 : i64, scratch_operands = 0 : i64, tpu.core_type = #tpu.core_type<tc>, window_params = [{transform_indices = @transform_0, window_bounds = array<i64: 16, 64>}, {transform_indices = @transform_1, window_bounds = array<i64: 16, 64>}, {pipeline_mode = #tpu.pipeline_mode<synchronous>, transform_indices = @transform_2, window_bounds = array<i64: 1, 64>}, {pipeline_mode = #tpu.pipeline_mode<synchronous>, transform_indices = @transform_3, window_bounds = array<i64: 1, 64>}, {transform_indices = @transform_4, window_bounds = array<i64: 16, 64>}]} {
    %c0 = arith.constant 0 : index
    %c0_0 = arith.constant 0 : index
    %0 = vector.load %arg1[%c0, %c0_0] : memref<16x64xf32, #tpu.memory_space<vmem>>, vector<16x64xf32>
    %c0_1 = arith.constant 0 : index
    %c0_2 = arith.constant 0 : index
    %1 = vector.load %arg2[%c0_1, %c0_2] : memref<16x64xf32, #tpu.memory_space<vmem>>, vector<16x64xf32>
    %2 = arith.addf %0, %1 : vector<16x64xf32>
    %cst = arith.constant dense<0.000000e+00> : vector<16xf32>
    %3 = vector.multi_reduction <add>, %2, %cst [1] : vector<16x64xf32> to vector<16xf32>
    %4 = vector.shape_cast %3 : vector<16xf32> to vector<16x1xf32>
    %cst_3 = arith.constant 6.400000e+01 : f32
    %5 = vector.broadcast %cst_3 : f32 to vector<16x1xf32>
    %6 = arith.divf %4, %5 : vector<16x1xf32>
    %7 = vector.broadcast %6 : vector<16x1xf32> to vector<16x64xf32>
    %8 = arith.subf %2, %7 : vector<16x64xf32>
    %9 = arith.mulf %8, %8 : vector<16x64xf32>
    %cst_4 = arith.constant dense<0.000000e+00> : vector<16xf32>
    %10 = vector.multi_reduction <add>, %9, %cst_4 [1] : vector<16x64xf32> to vector<16xf32>
    %11 = vector.shape_cast %10 : vector<16xf32> to vector<16x1xf32>
    %cst_5 = arith.constant 6.400000e+01 : f32
    %12 = vector.broadcast %cst_5 : f32 to vector<16x1xf32>
    %13 = arith.divf %11, %12 : vector<16x1xf32>
    %14 = vector.broadcast %6 : vector<16x1xf32> to vector<16x64xf32>
    %15 = arith.subf %2, %14 : vector<16x64xf32>
    %cst_6 = arith.constant 9.99999974E-6 : f32
    %16 = vector.broadcast %cst_6 : f32 to vector<16x1xf32>
    %17 = arith.addf %13, %16 : vector<16x1xf32>
    %18 = math.rsqrt %17 : vector<16x1xf32>
    %19 = vector.broadcast %18 : vector<16x1xf32> to vector<16x64xf32>
    %20 = arith.mulf %15, %19 : vector<16x64xf32>
    %c0_7 = arith.constant 0 : index
    %c0_8 = arith.constant 0 : index
    %21 = vector.load %arg3[%c0_7, %c0_8] : memref<1x64xf32, #tpu.memory_space<vmem>>, vector<1x64xf32>
    %22 = vector.broadcast %21 : vector<1x64xf32> to vector<16x64xf32>
    %23 = arith.mulf %20, %22 : vector<16x64xf32>
    %c0_9 = arith.constant 0 : index
    %c0_10 = arith.constant 0 : index
    %24 = vector.load %arg4[%c0_9, %c0_10] : memref<1x64xf32, #tpu.memory_space<vmem>>, vector<1x64xf32>
    %25 = vector.broadcast %24 : vector<1x64xf32> to vector<16x64xf32>
    %26 = arith.addf %23, %25 : vector<16x64xf32>
    %c0_11 = arith.constant 0 : index
    %c0_12 = arith.constant 0 : index
    %27 = vector.load %arg5[%c0_11, %c0_12] : memref<16x64xf32, #tpu.memory_space<vmem>>, vector<16x64xf32>
    tpu.vector_store %arg5[%c0_11, %c0_12], %26 {strides = array<i32>} : memref<16x64xf32, #tpu.memory_space<vmem>>, vector<16x64xf32>,
    return
  }
  func.func @transform_0(%arg0: i32) -> (i32, i32) {
    %c0_i32 = arith.constant 0 : i32
    %c0_i32_0 = arith.constant 0 : i32
    return %arg0, %c0_i32 : i32, i32
  }
  func.func @transform_1(%arg0: i32) -> (i32, i32) {
    %c0_i32 = arith.constant 0 : i32
    %c0_i32_0 = arith.constant 0 : i32
    return %arg0, %c0_i32 : i32, i32
  }
  func.func @transform_2(%arg0: i32) -> (i32, i32) {
    %c0_i32 = arith.constant 0 : i32
    %c0_i32_0 = arith.constant 0 : i32
    %c0_i32_1 = arith.constant 0 : i32
    return %c0_i32, %c0_i32_0 : i32, i32
  }
  func.func @transform_3(%arg0: i32) -> (i32, i32) {
    %c0_i32 = arith.constant 0 : i32
    %c0_i32_0 = arith.constant 0 : i32
    %c0_i32_1 = arith.constant 0 : i32
    return %c0_i32, %c0_i32_0 : i32, i32
  }
  func.func @transform_4(%arg0: i32) -> (i32, i32) {
    %c0_i32 = arith.constant 0 : i32
    %c0_i32_0 = arith.constant 0 : i32
    return %arg0, %c0_i32 : i32, i32
  }
}

module attributes {stable_mosaic.version = 11 : i64} {
  func.func @_linear_kernel(%arg0: i32, %arg1: i32, %arg2: i32, %arg3: memref<16x64xf32, #tpu.memory_space<vmem>>, %arg4: memref<64x192xf32, #tpu.memory_space<vmem>>, %arg5: memref<16x192xf32, #tpu.memory_space<vmem>>, %arg6: memref<16x192xf32, #tpu.memory_space<vmem>>) attributes {dimension_semantics = [#tpu.dimension_semantics<parallel>, #tpu.dimension_semantics<parallel>, #tpu.dimension_semantics<arbitrary>], iteration_bounds = array<i64: 1, 1, 1>, scalar_prefetch = 0 : i64, scratch_operands = 1 : i64, tpu.core_type = #tpu.core_type<tc>, window_params = [{transform_indices = @transform_0, window_bounds = array<i64: 16, 64>}, {transform_indices = @transform_1, window_bounds = array<i64: 64, 192>}, {transform_indices = @transform_2, window_bounds = array<i64: 16, 192>}]} {
    %c0_i32 = arith.constant 0 : i32
    %0 = arith.cmpi eq, %arg2, %c0_i32 : i32
    %1 = arith.extui %0 : i1 to i32
    %c0_i32_0 = arith.constant 0 : i32
    %2 = arith.cmpi ne, %1, %c0_i32_0 : i32
    scf.if %2 {
      %cst_10 = arith.constant 0.000000e+00 : f32
      %14 = vector.broadcast %cst_10 : f32 to vector<16x192xf32>
      %c0_11 = arith.constant 0 : index
      %c0_12 = arith.constant 0 : index
      %15 = vector.load %arg6[%c0_11, %c0_12] : memref<16x192xf32, #tpu.memory_space<vmem>>, vector<16x192xf32>
      tpu.vector_store %arg6[%c0_11, %c0_12], %14 {strides = array<i32>} : memref<16x192xf32, #tpu.memory_space<vmem>>, vector<16x192xf32>,
    } else {
    }
    %c0 = arith.constant 0 : index
    %c0_1 = arith.constant 0 : index
    %3 = vector.load %arg3[%c0, %c0_1] : memref<16x64xf32, #tpu.memory_space<vmem>>, vector<16x64xf32>
    %4 = arith.truncf %3 : vector<16x64xf32> to vector<16x64xbf16>
    %c0_2 = arith.constant 0 : index
    %c0_3 = arith.constant 0 : index
    %5 = vector.load %arg4[%c0_2, %c0_3] : memref<64x192xf32, #tpu.memory_space<vmem>>, vector<64x192xf32>
    %6 = arith.truncf %5 : vector<64x192xf32> to vector<64x192xbf16>
    %c0_4 = arith.constant 0 : index
    %c0_5 = arith.constant 0 : index
    %7 = vector.load %arg6[%c0_4, %c0_5] : memref<16x192xf32, #tpu.memory_space<vmem>>, vector<16x192xf32>
    %cst = arith.constant dense<0.000000e+00> : vector<16x192xf32>
    %8 = tpu.matmul %4, %6, %cst {dimension_numbers = #tpu.dot_dimension_numbers<[1], [0], [0], [1], [0, 0, 1, 1], [], []>} : vector<16x64xbf16>, vector<64x192xbf16>, vector<16x192xf32> -> vector<16x192xf32>
    %9 = arith.addf %7, %8 : vector<16x192xf32>
    %c0_6 = arith.constant 0 : index
    %c0_7 = arith.constant 0 : index
    %10 = vector.load %arg6[%c0_6, %c0_7] : memref<16x192xf32, #tpu.memory_space<vmem>>, vector<16x192xf32>
    tpu.vector_store %arg6[%c0_6, %c0_7], %9 {strides = array<i32>} : memref<16x192xf32, #tpu.memory_space<vmem>>, vector<16x192xf32>,
    %c0_i32_8 = arith.constant 0 : i32
    %11 = arith.cmpi eq, %arg2, %c0_i32_8 : i32
    %12 = arith.extui %11 : i1 to i32
    %c0_i32_9 = arith.constant 0 : i32
    %13 = arith.cmpi ne, %12, %c0_i32_9 : i32
    scf.if %13 {
      %c0_10 = arith.constant 0 : index
      %c0_11 = arith.constant 0 : index
      %14 = vector.load %arg6[%c0_10, %c0_11] : memref<16x192xf32, #tpu.memory_space<vmem>>, vector<16x192xf32>
      %c0_12 = arith.constant 0 : index
      %c0_13 = arith.constant 0 : index
      %15 = vector.load %arg5[%c0_12, %c0_13] : memref<16x192xf32, #tpu.memory_space<vmem>>, vector<16x192xf32>
      tpu.vector_store %arg5[%c0_12, %c0_13], %14 {strides = array<i32>} : memref<16x192xf32, #tpu.memory_space<vmem>>, vector<16x192xf32>,
    } else {
    }
    return
  }
  func.func @transform_0(%arg0: i32, %arg1: i32, %arg2: i32) -> (i32, i32) {
    %c0_i32 = arith.constant 0 : i32
    return %arg0, %arg2 : i32, i32
  }
  func.func @transform_1(%arg0: i32, %arg1: i32, %arg2: i32) -> (i32, i32) {
    %c0_i32 = arith.constant 0 : i32
    return %arg2, %arg1 : i32, i32
  }
  func.func @transform_2(%arg0: i32, %arg1: i32, %arg2: i32) -> (i32, i32) {
    %c0_i32 = arith.constant 0 : i32
    return %arg0, %arg1 : i32, i32
  }
}

module attributes {stable_mosaic.version = 11 : i64} {
  func.func @_linear_kernel(%arg0: i32, %arg1: i32, %arg2: i32, %arg3: memref<2x64xf32, #tpu.memory_space<vmem>>, %arg4: memref<64x1xf32, #tpu.memory_space<vmem>>, %arg5: memref<1x1xf32, #tpu.memory_space<vmem>>, %arg6: memref<2x1xf32, #tpu.memory_space<vmem>>, %arg7: memref<2x1xf32, #tpu.memory_space<vmem>>) attributes {dimension_semantics = [#tpu.dimension_semantics<parallel>, #tpu.dimension_semantics<parallel>, #tpu.dimension_semantics<arbitrary>], iteration_bounds = array<i64: 1, 1, 1>, scalar_prefetch = 0 : i64, scratch_operands = 1 : i64, tpu.core_type = #tpu.core_type<tc>, window_params = [{transform_indices = @transform_0, window_bounds = array<i64: 2, 64>}, {transform_indices = @transform_1, window_bounds = array<i64: 64, 1>}, {transform_indices = @transform_2, window_bounds = array<i64: 1, 1>}, {transform_indices = @transform_3, window_bounds = array<i64: 2, 1>}]} {
    %c0_i32 = arith.constant 0 : i32
    %0 = arith.cmpi eq, %arg2, %c0_i32 : i32
    %1 = arith.extui %0 : i1 to i32
    %c0_i32_0 = arith.constant 0 : i32
    %2 = arith.cmpi ne, %1, %c0_i32_0 : i32
    scf.if %2 {
      %cst_10 = arith.constant 0.000000e+00 : f32
      %14 = vector.broadcast %cst_10 : f32 to vector<2x1xf32>
      %c0_11 = arith.constant 0 : index
      %c0_12 = arith.constant 0 : index
      %15 = vector.load %arg7[%c0_11, %c0_12] : memref<2x1xf32, #tpu.memory_space<vmem>>, vector<2x1xf32>
      tpu.vector_store %arg7[%c0_11, %c0_12], %14 {strides = array<i32>} : memref<2x1xf32, #tpu.memory_space<vmem>>, vector<2x1xf32>,
    } else {
    }
    %c0 = arith.constant 0 : index
    %c0_1 = arith.constant 0 : index
    %3 = vector.load %arg3[%c0, %c0_1] : memref<2x64xf32, #tpu.memory_space<vmem>>, vector<2x64xf32>
    %4 = arith.truncf %3 : vector<2x64xf32> to vector<2x64xbf16>
    %c0_2 = arith.constant 0 : index
    %c0_3 = arith.constant 0 : index
    %5 = vector.load %arg4[%c0_2, %c0_3] : memref<64x1xf32, #tpu.memory_space<vmem>>, vector<64x1xf32>
    %6 = arith.truncf %5 : vector<64x1xf32> to vector<64x1xbf16>
    %c0_4 = arith.constant 0 : index
    %c0_5 = arith.constant 0 : index
    %7 = vector.load %arg7[%c0_4, %c0_5] : memref<2x1xf32, #tpu.memory_space<vmem>>, vector<2x1xf32>
    %cst = arith.constant dense<0.000000e+00> : vector<2x1xf32>
    %8 = tpu.matmul %4, %6, %cst {dimension_numbers = #tpu.dot_dimension_numbers<[1], [0], [0], [1], [0, 0, 1, 1], [], []>} : vector<2x64xbf16>, vector<64x1xbf16>, vector<2x1xf32> -> vector<2x1xf32>
    %9 = arith.addf %7, %8 : vector<2x1xf32>
    %c0_6 = arith.constant 0 : index
    %c0_7 = arith.constant 0 : index
    %10 = vector.load %arg7[%c0_6, %c0_7] : memref<2x1xf32, #tpu.memory_space<vmem>>, vector<2x1xf32>
    tpu.vector_store %arg7[%c0_6, %c0_7], %9 {strides = array<i32>} : memref<2x1xf32, #tpu.memory_space<vmem>>, vector<2x1xf32>,
    %c0_i32_8 = arith.constant 0 : i32
    %11 = arith.cmpi eq, %arg2, %c0_i32_8 : i32
    %12 = arith.extui %11 : i1 to i32
    %c0_i32_9 = arith.constant 0 : i32
    %13 = arith.cmpi ne, %12, %c0_i32_9 : i32
    scf.if %13 {
      %c0_10 = arith.constant 0 : index
      %c0_11 = arith.constant 0 : index
      %14 = vector.load %arg7[%c0_10, %c0_11] : memref<2x1xf32, #tpu.memory_space<vmem>>, vector<2x1xf32>
      %c0_12 = arith.constant 0 : index
      %c0_13 = arith.constant 0 : index
      %15 = vector.load %arg5[%c0_12, %c0_13] : memref<1x1xf32, #tpu.memory_space<vmem>>, vector<1x1xf32>
      %16 = vector.broadcast %15 : vector<1x1xf32> to vector<2x1xf32>
      %17 = arith.addf %14, %16 : vector<2x1xf32>
      %18 = arith.negf %17 : vector<2x1xf32>
      %19 = math.exp %18 : vector<2x1xf32>
      %cst_14 = arith.constant 1.000000e+00 : f32
      %20 = vector.broadcast %cst_14 : f32 to vector<2x1xf32>
      %21 = arith.addf %20, %19 : vector<2x1xf32>
      %22 = arith.divf %20, %21 : vector<2x1xf32>
      %c0_15 = arith.constant 0 : index
      %c0_16 = arith.constant 0 : index
      %23 = vector.load %arg6[%c0_15, %c0_16] : memref<2x1xf32, #tpu.memory_space<vmem>>, vector<2x1xf32>
      tpu.vector_store %arg6[%c0_15, %c0_16], %22 {strides = array<i32>} : memref<2x1xf32, #tpu.memory_space<vmem>>, vector<2x1xf32>,
    } else {
    }
    return
  }
  func.func @transform_0(%arg0: i32, %arg1: i32, %arg2: i32) -> (i32, i32) {
    %c0_i32 = arith.constant 0 : i32
    return %arg0, %arg2 : i32, i32
  }
  func.func @transform_1(%arg0: i32, %arg1: i32, %arg2: i32) -> (i32, i32) {
    %c0_i32 = arith.constant 0 : i32
    return %arg2, %arg1 : i32, i32
  }
  func.func @transform_2(%arg0: i32, %arg1: i32, %arg2: i32) -> (i32, i32) {
    %c0_i32 = arith.constant 0 : i32
    %c0_i32_0 = arith.constant 0 : i32
    return %c0_i32, %arg1 : i32, i32
  }
  func.func @transform_3(%arg0: i32, %arg1: i32, %arg2: i32) -> (i32, i32) {
    %c0_i32 = arith.constant 0 : i32
    return %arg0, %arg1 : i32, i32
  }
}

</mosaic_0001>

<llo_original>
// kernel: copyhead_forward.26
$region0: #{copyhead_forward.26}
  #allocation0 [shape = 'u32[]', space=smem, size = 0x4, offset = 0x4, fixed_abs, tag = 'smem constant byte address 0x4 - core index']
  #allocation1 [shape = 'u32[144,128]{1,0:T(1,128)}', space=vmem, size = 0x12000, scoped, tag = 'internal scratch']
  #allocation2 [shape = 'f32[16,64]{1,0:T(8,128)}', space=vmem, size = 0x2000, scoped, tag = 'scratch operand']
  %s0 = inlined_call_operand.vmem [shape: f32[16,64], index: 0, kind: input, shape index: {}]
  %s1 = inlined_call_operand.vmem [shape: f32[64,64], index: 1, kind: input, shape index: {}]
  %s2 = inlined_call_operand.vmem [shape: f32[1,64], index: 2, kind: input, shape index: {}]
  %s3 = inlined_call_operand.vmem [shape: f32[16,64], index: 3, kind: output, shape index: {}]
  %s4 = sld [smem:[#allocation0]]
  $region30: #{copyhead_forward.26} parent=0
    _
  %s6 = ssub.s32 1, %s4
  %s7 = scalar_select 0, %s6, %s4
  // Predicated region
  $region2: #{copyhead_forward.26} parent=0 // pred_check
    _
  $region3: #{copyhead_forward.26} parent=0 // pred_check_branch
    %9 = sbr.rel (0) target = $region5
  $region4: #{copyhead_forward.26} parent=0 // pred_region
    _
  $region5: #{copyhead_forward.26} parent=0 // pred_fallthru
    _
  // Predicated region
  $region6: #{copyhead_forward.26} parent=0 // pred_check
    _
  $region7: #{copyhead_forward.26} parent=0 // pred_check_branch
    %11 = sbr.rel (0) target = $region9
  $region8: #{copyhead_forward.26} parent=0 // pred_region
    _
  $region9: #{copyhead_forward.26} parent=0 // pred_fallthru
    _
  // Predicated region
  $region10: #{copyhead_forward.26} parent=0 // pred_check
    _
  $region11: #{copyhead_forward.26} parent=0 // pred_check_branch
    %13 = sbr.rel (0) target = $region13
  $region12: #{copyhead_forward.26} parent=0 // pred_region
    _
  $region13: #{copyhead_forward.26} parent=0 // pred_fallthru
    _
  %p15 = scmp.eq.s32.totalorder 0, 0
  // Predicated region
  $region14: #{copyhead_forward.26} parent=0 // pred_check
    %p16 = pneg %p15
  $region15: #{copyhead_forward.26} parent=0 // pred_check_branch
    %18 = sbr.rel (%p16) target = $region17
  $region16: #{copyhead_forward.26} parent=0 // pred_region
    %vm19 = vcmask 523264
    %20 = vst.msk [vmem:[#allocation2] sm:$0xff] %vm19, 0.0
    %21 = vst.msk [vmem:[#allocation2 + $0x8] sm:$0xff] %vm19, 0.0
  $region17: #{copyhead_forward.26} parent=0 // pred_fallthru
    _
  %v22 = vld [vmem:[%s0] sm:$0xff]
  %v23 = vld [vmem:[%s0 + $0x8] sm:$0xff]
  %v24 = vpack.c.bf16 %v23, %v22
  %v25 = vld [vmem:[%s1] sm:$0xff]
  %v26 = vld [vmem:[%s1 + $0x8] sm:$0xff]
  %v27 = vld [vmem:[%s1 + $0x10] sm:$0xff]
  %v28 = vld [vmem:[%s1 + $0x18] sm:$0xff]
  %v29 = vld [vmem:[%s1 + $0x20] sm:$0xff]
  %v30 = vld [vmem:[%s1 + $0x28] sm:$0xff]
  %v31 = vld [vmem:[%s1 + $0x30] sm:$0xff]
  %v32 = vld [vmem:[%s1 + $0x38] sm:$0xff]
  %v33 = vpack.c.bf16 %v26, %v25
  %v34 = vpack.c.bf16 %v28, %v27
  %v35 = vpack.c.bf16 %v30, %v29
  %v36 = vpack.c.bf16 %v32, %v31
  %v37 = vld [vmem:[#allocation2] sm:$0xff]
  %v38 = vld [vmem:[#allocation2 + $0x8] sm:$0xff]
  %vm39 = vcmask 523264
  %v41 = vsel %vm39, %v24, 0
  %43 = vmatprep.subr.bf16.mxu0 0
  %44 = vmatpush1.bf16.msra.mxu0 %v33
  %45 = vmatprep.subr.bf16.mxu0 0
  %46 = vmatpush1.bf16.msra.mxu0 %v34
  %47 = vmatprep.subr.bf16.mxu0 0
  %48 = vmatpush1.bf16.msra.mxu0 %v35
  %49 = vmatprep.subr.bf16.mxu0 0
  %50 = vmatpush1.bf16.msra.mxu0 %v36
  %51 = vmatprep.subr.bf16.mxu0 0
  %52 = vmatpush1.bf16.msra.mxu0 0
  %53 = vmatprep.subr.bf16.mxu0 0
  %54 = vmatpush1.bf16.msra.mxu0 0
  %55 = vmatprep.subr.bf16.mxu0 0
  %56 = vmatpush1.bf16.msra.mxu0 0
  %57 = vmatprep.subr.bf16.mxu0 0
  %58 = vmatpush1.bf16.msra.mxu0 0
  %59 = vmatprep.subr.bf16.mxu0 0
  %60 = vmatpush1.bf16.msra.mxu0 0
  %61 = vmatprep.subr.bf16.mxu0 0
  %62 = vmatpush1.bf16.msra.mxu0 0
  %63 = vmatprep.subr.bf16.mxu0 0
  %64 = vmatpush1.bf16.msra.mxu0 0
  %65 = vmatprep.subr.bf16.mxu0 0
  %66 = vmatpush1.bf16.msra.mxu0 0
  %67 = vmatprep.subr.bf16.mxu0 0
  %68 = vmatpush1.bf16.msra.mxu0 0
  %69 = vmatprep.subr.bf16.mxu0 0
  %70 = vmatpush1.bf16.msra.mxu0 0
  %71 = vmatprep.subr.bf16.mxu0 0
  %72 = vmatpush1.bf16.msra.mxu0 0
  %73 = vmatprep.subr.bf16.mxu0 0
  %74 = vmatpush1.bf16.msra.mxu0 0
  %75 = vmatprep.mubr.bf16.mxu0 0
  %76 = vmatmul.mubr.bf16.gmra.mrb[0].mxu0 %v41
  %v77 = vpop.f32.mrb[0].mxu0
  %v78 = vadd.f32 0.0, %v77
  %v79 = vpop.f32.mrb[0].mxu0
  %v80 = vpop.f32.mrb[0].mxu0
  %v81 = vadd.f32 0.0, %v80
  %v82 = vpop.f32.mrb[0].mxu0
  %83 = vdwg.mxu0
  %v84 = vadd.f32 %v37, %v78
  %v85 = vadd.f32 %v38, %v81
  %86 = vst.msk [vmem:[#allocation2] sm:$0xff] %vm39, %v84
  %87 = vst.msk [vmem:[#allocation2 + $0x8] sm:$0xff] %vm39, %v85
  // Predicated region
  $region18: #{copyhead_forward.26} parent=0 // pred_check
    %p88 = pneg %p15
  $region19: #{copyhead_forward.26} parent=0 // pred_check_branch
    %90 = sbr.rel (%p88) target = $region21
  $region20: #{copyhead_forward.26} parent=0 // pred_region
    %v91 = vld [vmem:[#allocation2] sm:$0xff]
    %v92 = vld [vmem:[#allocation2 + $0x8] sm:$0xff]
    %v93 = vld [vmem:[%s2] sm:$0x1]
    %v95 = vlaneseq
    %v96 = vshrl.u32 %v95, 7
    %v97 = vsub.s32 0, %v96
    %v98 = vrot.slane %v93, %v97
    %v100 = vadd.f32 %v91, %v98
    %v101 = vadd.f32 %v92, %v98
    %102 = vst.msk [vmem:[%s3] sm:$0xff] %vm39, %v100
    %103 = vst.msk [vmem:[%s3 + $0x8] sm:$0xff] %vm39, %v101
  $region21: #{copyhead_forward.26} parent=0 // pred_fallthru
    _
  // Predicated region
  $region22: #{copyhead_forward.26} parent=0 // pred_check
    _
  $region23: #{copyhead_forward.26} parent=0 // pred_check_branch
    %105 = sbr.rel (0) target = $region25
  $region24: #{copyhead_forward.26} parent=0 // pred_region
    _
  $region25: #{copyhead_forward.26} parent=0 // pred_fallthru
    _
  // Predicated region
  $region26: #{copyhead_forward.26} parent=0 // pred_check
    _
  $region27: #{copyhead_forward.26} parent=0 // pred_check_branch
    %107 = sbr.rel (0) target = $region29
  $region28: #{copyhead_forward.26} parent=0 // pred_region
    _
  $region29: #{copyhead_forward.26} parent=0 // pred_fallthru
    _

// kernel: copyhead_forward.23
$region0: #{copyhead_forward.23}
  #allocation0 [shape = 'u32[]', space=smem, size = 0x4, offset = 0x4, fixed_abs, tag = 'smem constant byte address 0x4 - core index']
  #allocation1 [shape = 'u32[144,128]{1,0:T(1,128)}', space=vmem, size = 0x12000, scoped, tag = 'internal scratch']
  #allocation2 [shape = 'f32[16,64]{1,0:T(8,128)}', space=vmem, size = 0x2000, scoped, tag = 'scratch operand']
  %s0 = inlined_call_operand.vmem [shape: f32[16,64], index: 0, kind: input, shape index: {}]
  %s1 = inlined_call_operand.vmem [shape: f32[64,64], index: 1, kind: input, shape index: {}]
  %s2 = inlined_call_operand.vmem [shape: f32[16,64], index: 2, kind: output, shape index: {}]
  %s3 = sld [smem:[#allocation0]]
  $region26: #{copyhead_forward.23} parent=0
    _
  %s5 = ssub.s32 1, %s3
  %s6 = scalar_select 0, %s5, %s3
  // Predicated region
  $region2: #{copyhead_forward.23} parent=0 // pred_check
    _
  $region3: #{copyhead_forward.23} parent=0 // pred_check_branch
    %8 = sbr.rel (0) target = $region5
  $region4: #{copyhead_forward.23} parent=0 // pred_region
    _
  $region5: #{copyhead_forward.23} parent=0 // pred_fallthru
    _
  // Predicated region
  $region6: #{copyhead_forward.23} parent=0 // pred_check
    _
  $region7: #{copyhead_forward.23} parent=0 // pred_check_branch
    %10 = sbr.rel (0) target = $region9
  $region8: #{copyhead_forward.23} parent=0 // pred_region
    _
  $region9: #{copyhead_forward.23} parent=0 // pred_fallthru
    _
  %p12 = scmp.eq.s32.totalorder 0, 0
  // Predicated region
  $region10: #{copyhead_forward.23} parent=0 // pred_check
    %p13 = pneg %p12
  $region11: #{copyhead_forward.23} parent=0 // pred_check_branch
    %15 = sbr.rel (%p13) target = $region13
  $region12: #{copyhead_forward.23} parent=0 // pred_region
    %vm16 = vcmask 523264
    %17 = vst.msk [vmem:[#allocation2] sm:$0xff] %vm16, 0.0
    %18 = vst.msk [vmem:[#allocation2 + $0x8] sm:$0xff] %vm16, 0.0
  $region13: #{copyhead_forward.23} parent=0 // pred_fallthru
    _
  %v19 = vld [vmem:[%s0] sm:$0xff]
  %v20 = vld [vmem:[%s0 + $0x8] sm:$0xff]
  %v21 = vpack.c.bf16 %v20, %v19
  %v22 = vld [vmem:[%s1] sm:$0xff]
  %v23 = vld [vmem:[%s1 + $0x8] sm:$0xff]
  %v24 = vld [vmem:[%s1 + $0x10] sm:$0xff]
  %v25 = vld [vmem:[%s1 + $0x18] sm:$0xff]
  %v26 = vld [vmem:[%s1 + $0x20] sm:$0xff]
  %v27 = vld [vmem:[%s1 + $0x28] sm:$0xff]
  %v28 = vld [vmem:[%s1 + $0x30] sm:$0xff]
  %v29 = vld [vmem:[%s1 + $0x38] sm:$0xff]
  %v30 = vpack.c.bf16 %v23, %v22
  %v31 = vpack.c.bf16 %v25, %v24
  %v32 = vpack.c.bf16 %v27, %v26
  %v33 = vpack.c.bf16 %v29, %v28
  %v34 = vld [vmem:[#allocation2] sm:$0xff]
  %v35 = vld [vmem:[#allocation2 + $0x8] sm:$0xff]
  %vm36 = vcmask 523264
  %v38 = vsel %vm36, %v21, 0
  %40 = vmatprep.subr.bf16.mxu0 0
  %41 = vmatpush1.bf16.msra.mxu0 %v30
  %42 = vmatprep.subr.bf16.mxu0 0
  %43 = vmatpush1.bf16.msra.mxu0 %v31
  %44 = vmatprep.subr.bf16.mxu0 0
  %45 = vmatpush1.bf16.msra.mxu0 %v32
  %46 = vmatprep.subr.bf16.mxu0 0
  %47 = vmatpush1.bf16.msra.mxu0 %v33
  %48 = vmatprep.subr.bf16.mxu0 0
  %49 = vmatpush1.bf16.msra.mxu0 0
  %50 = vmatprep.subr.bf16.mxu0 0
  %51 = vmatpush1.bf16.msra.mxu0 0
  %52 = vmatprep.subr.bf16.mxu0 0
  %53 = vmatpush1.bf16.msra.mxu0 0
  %54 = vmatprep.subr.bf16.mxu0 0
  %55 = vmatpush1.bf16.msra.mxu0 0
  %56 = vmatprep.subr.bf16.mxu0 0
  %57 = vmatpush1.bf16.msra.mxu0 0
  %58 = vmatprep.subr.bf16.mxu0 0
  %59 = vmatpush1.bf16.msra.mxu0 0
  %60 = vmatprep.subr.bf16.mxu0 0
  %61 = vmatpush1.bf16.msra.mxu0 0
  %62 = vmatprep.subr.bf16.mxu0 0
  %63 = vmatpush1.bf16.msra.mxu0 0
  %64 = vmatprep.subr.bf16.mxu0 0
  %65 = vmatpush1.bf16.msra.mxu0 0
  %66 = vmatprep.subr.bf16.mxu0 0
  %67 = vmatpush1.bf16.msra.mxu0 0
  %68 = vmatprep.subr.bf16.mxu0 0
  %69 = vmatpush1.bf16.msra.mxu0 0
  %70 = vmatprep.subr.bf16.mxu0 0
  %71 = vmatpush1.bf16.msra.mxu0 0
  %72 = vmatprep.mubr.bf16.mxu0 0
  %73 = vmatmul.mubr.bf16.gmra.mrb[0].mxu0 %v38
  %v74 = vpop.f32.mrb[0].mxu0
  %v75 = vadd.f32 0.0, %v74
  %v76 = vpop.f32.mrb[0].mxu0
  %v77 = vpop.f32.mrb[0].mxu0
  %v78 = vadd.f32 0.0, %v77
  %v79 = vpop.f32.mrb[0].mxu0
  %80 = vdwg.mxu0
  %v81 = vadd.f32 %v34, %v75
  %v82 = vadd.f32 %v35, %v78
  %83 = vst.msk [vmem:[#allocation2] sm:$0xff] %vm36, %v81
  %84 = vst.msk [vmem:[#allocation2 + $0x8] sm:$0xff] %vm36, %v82
  // Predicated region
  $region14: #{copyhead_forward.23} parent=0 // pred_check
    %p85 = pneg %p12
  $region15: #{copyhead_forward.23} parent=0 // pred_check_branch
    %87 = sbr.rel (%p85) target = $region17
  $region16: #{copyhead_forward.23} parent=0 // pred_region
    %v88 = vld [vmem:[#allocation2] sm:$0xff]
    %v89 = vld [vmem:[#allocation2 + $0x8] sm:$0xff]
    %90 = vst.msk [vmem:[%s2] sm:$0xff] %vm36, %v88
    %91 = vst.msk [vmem:[%s2 + $0x8] sm:$0xff] %vm36, %v89
  $region17: #{copyhead_forward.23} parent=0 // pred_fallthru
    _
  // Predicated region
  $region18: #{copyhead_forward.23} parent=0 // pred_check
    _
  $region19: #{copyhead_forward.23} parent=0 // pred_check_branch
    %93 = sbr.rel (0) target = $region21
  $region20: #{copyhead_forward.23} parent=0 // pred_region
    _
  $region21: #{copyhead_forward.23} parent=0 // pred_fallthru
    _
  // Predicated region
  $region22: #{copyhead_forward.23} parent=0 // pred_check
    _
  $region23: #{copyhead_forward.23} parent=0 // pred_check_branch
    %95 = sbr.rel (0) target = $region25
  $region24: #{copyhead_forward.23} parent=0 // pred_region
    _
  $region25: #{copyhead_forward.23} parent=0 // pred_fallthru
    _

// kernel: copyhead_forward.24
$region0: #{copyhead_forward.24}
  #allocation0 [shape = 'u32[]', space=smem, size = 0x4, offset = 0x4, fixed_abs, tag = 'smem constant byte address 0x4 - core index']
  #allocation1 [shape = 'u32[144,128]{1,0:T(1,128)}', space=vmem, size = 0x12000, scoped, tag = 'internal scratch']
  #allocation2 [shape = 'f32[16,128]{1,0:T(8,128)}', space=vmem, size = 0x2000, scoped, tag = 'scratch operand']
  %s0 = inlined_call_operand.vmem [shape: f32[16,64], index: 0, kind: input, shape index: {}]
  %s1 = inlined_call_operand.vmem [shape: f32[64,128], index: 1, kind: input, shape index: {}]
  %s2 = inlined_call_operand.vmem [shape: f32[16,128], index: 2, kind: output, shape index: {}]
  %s3 = sld [smem:[#allocation0]]
  $region26: #{copyhead_forward.24} parent=0
    _
  %s5 = ssub.s32 1, %s3
  %s6 = scalar_select 0, %s5, %s3
  // Predicated region
  $region2: #{copyhead_forward.24} parent=0 // pred_check
    _
  $region3: #{copyhead_forward.24} parent=0 // pred_check_branch
    %8 = sbr.rel (0) target = $region5
  $region4: #{copyhead_forward.24} parent=0 // pred_region
    _
  $region5: #{copyhead_forward.24} parent=0 // pred_fallthru
    _
  // Predicated region
  $region6: #{copyhead_forward.24} parent=0 // pred_check
    _
  $region7: #{copyhead_forward.24} parent=0 // pred_check_branch
    %10 = sbr.rel (0) target = $region9
  $region8: #{copyhead_forward.24} parent=0 // pred_region
    _
  $region9: #{copyhead_forward.24} parent=0 // pred_fallthru
    _
  %p12 = scmp.eq.s32.totalorder 0, 0
  // Predicated region
  $region10: #{copyhead_forward.24} parent=0 // pred_check
    %p13 = pneg %p12
  $region11: #{copyhead_forward.24} parent=0 // pred_check_branch
    %15 = sbr.rel (%p13) target = $region13
  $region12: #{copyhead_forward.24} parent=0 // pred_region
    %16 = vst [vmem:[#allocation2] sm:$0xff] 0.0
    %17 = vst [vmem:[#allocation2 + $0x8] sm:$0xff] 0.0
  $region13: #{copyhead_forward.24} parent=0 // pred_fallthru
    _
  %v18 = vld [vmem:[%s0] sm:$0xff]
  %v19 = vld [vmem:[%s0 + $0x8] sm:$0xff]
  %v20 = vpack.c.bf16 %v19, %v18
  %v21 = vld [vmem:[%s1] sm:$0xff]
  %v22 = vld [vmem:[%s1 + $0x8] sm:$0xff]
  %v23 = vld [vmem:[%s1 + $0x10] sm:$0xff]
  %v24 = vld [vmem:[%s1 + $0x18] sm:$0xff]
  %v25 = vld [vmem:[%s1 + $0x20] sm:$0xff]
  %v26 = vld [vmem:[%s1 + $0x28] sm:$0xff]
  %v27 = vld [vmem:[%s1 + $0x30] sm:$0xff]
  %v28 = vld [vmem:[%s1 + $0x38] sm:$0xff]
  %v29 = vpack.c.bf16 %v22, %v21
  %v30 = vpack.c.bf16 %v24, %v23
  %v31 = vpack.c.bf16 %v26, %v25
  %v32 = vpack.c.bf16 %v28, %v27
  %v33 = vld [vmem:[#allocation2] sm:$0xff]
  %v34 = vld [vmem:[#allocation2 + $0x8] sm:$0xff]
  %vm35 = vcmask 523264
  %v37 = vsel %vm35, %v20, 0
  %39 = vmatprep.subr.bf16.mxu0 0
  %40 = vmatpush1.bf16.msra.mxu0 %v29
  %41 = vmatprep.subr.bf16.mxu0 0
  %42 = vmatpush1.bf16.msra.mxu0 %v30
  %43 = vmatprep.subr.bf16.mxu0 0
  %44 = vmatpush1.bf16.msra.mxu0 %v31
  %45 = vmatprep.subr.bf16.mxu0 0
  %46 = vmatpush1.bf16.msra.mxu0 %v32
  %47 = vmatprep.subr.bf16.mxu0 0
  %48 = vmatpush1.bf16.msra.mxu0 0
  %49 = vmatprep.subr.bf16.mxu0 0
  %50 = vmatpush1.bf16.msra.mxu0 0
  %51 = vmatprep.subr.bf16.mxu0 0
  %52 = vmatpush1.bf16.msra.mxu0 0
  %53 = vmatprep.subr.bf16.mxu0 0
  %54 = vmatpush1.bf16.msra.mxu0 0
  %55 = vmatprep.subr.bf16.mxu0 0
  %56 = vmatpush1.bf16.msra.mxu0 0
  %57 = vmatprep.subr.bf16.mxu0 0
  %58 = vmatpush1.bf16.msra.mxu0 0
  %59 = vmatprep.subr.bf16.mxu0 0
  %60 = vmatpush1.bf16.msra.mxu0 0
  %61 = vmatprep.subr.bf16.mxu0 0
  %62 = vmatpush1.bf16.msra.mxu0 0
  %63 = vmatprep.subr.bf16.mxu0 0
  %64 = vmatpush1.bf16.msra.mxu0 0
  %65 = vmatprep.subr.bf16.mxu0 0
  %66 = vmatpush1.bf16.msra.mxu0 0
  %67 = vmatprep.subr.bf16.mxu0 0
  %68 = vmatpush1.bf16.msra.mxu0 0
  %69 = vmatprep.subr.bf16.mxu0 0
  %70 = vmatpush1.bf16.msra.mxu0 0
  %71 = vmatprep.mubr.bf16.mxu0 0
  %72 = vmatmul.mubr.bf16.gmra.mrb[0].mxu0 %v37
  %v73 = vpop.f32.mrb[0].mxu0
  %v74 = vadd.f32 0.0, %v73
  %v75 = vpop.f32.mrb[0].mxu0
  %v76 = vpop.f32.mrb[0].mxu0
  %v77 = vadd.f32 0.0, %v76
  %v78 = vpop.f32.mrb[0].mxu0
  %79 = vdwg.mxu0
  %v80 = vadd.f32 %v33, %v74
  %v81 = vadd.f32 %v34, %v77
  %82 = vst [vmem:[#allocation2] sm:$0xff] %v80
  %83 = vst [vmem:[#allocation2 + $0x8] sm:$0xff] %v81
  // Predicated region
  $region14: #{copyhead_forward.24} parent=0 // pred_check
    %p84 = pneg %p12
  $region15: #{copyhead_forward.24} parent=0 // pred_check_branch
    %86 = sbr.rel (%p84) target = $region17
  $region16: #{copyhead_forward.24} parent=0 // pred_region
    %v87 = vld [vmem:[#allocation2] sm:$0xff]
    %v88 = vld [vmem:[#allocation2 + $0x8] sm:$0xff]
    %89 = vst [vmem:[%s2] sm:$0xff] %v87
    %90 = vst [vmem:[%s2 + $0x8] sm:$0xff] %v88
  $region17: #{copyhead_forward.24} parent=0 // pred_fallthru
    _
  // Predicated region
  $region18: #{copyhead_forward.24} parent=0 // pred_check
    _
  $region19: #{copyhead_forward.24} parent=0 // pred_check_branch
    %92 = sbr.rel (0) target = $region21
  $region20: #{copyhead_forward.24} parent=0 // pred_region
    _
  $region21: #{copyhead_forward.24} parent=0 // pred_fallthru
    _
  // Predicated region
  $region22: #{copyhead_forward.24} parent=0 // pred_check
    _
  $region23: #{copyhead_forward.24} parent=0 // pred_check_branch
    %94 = sbr.rel (0) target = $region25
  $region24: #{copyhead_forward.24} parent=0 // pred_region
    _
  $region25: #{copyhead_forward.24} parent=0 // pred_fallthru
    _

// kernel: copyhead_forward.25
$region0: #{copyhead_forward.25}
  #allocation0 [shape = 'u32[]', space=smem, size = 0x4, offset = 0x4, fixed_abs, tag = 'smem constant byte address 0x4 - core index']
  #allocation1 [shape = 'u32[144,128]{1,0:T(1,128)}', space=vmem, size = 0x12000, scoped, tag = 'internal scratch']
  %s0 = inlined_call_operand.vmem [shape: f32[2,8,64], index: 0, kind: input, shape index: {}]
  %s1 = inlined_call_operand.vmem [shape: f32[2,8,64], index: 1, kind: input, shape index: {}]
  %s2 = inlined_call_operand.vmem [shape: f32[2,8,64], index: 2, kind: input, shape index: {}]
  %s3 = inlined_call_operand.vmem [shape: f32[2,8,64], index: 3, kind: output, shape index: {}]
  %s4 = sld [smem:[#allocation0]]
  $region45: #{copyhead_forward.25} parent=0
    _
  %s6 = ssub.s32 1, %s4
  %s7 = scalar_select 0, %s6, %s4
  loop: start=0, step=1, limit=4
  $region2: #{copyhead_forward.25} parent=0 // loop_pre_header
    _
  $region3: #{copyhead_forward.25} parent=0 // loop_header
    %s9 = sphi 0, %s13
    %p10 = scmp.ge.s32.totalorder %s9, 4
    %s19 = sphi 0, %s21
    %s22 = sphi 0, %s19
    %s23 = sphi 0, %s22
    %s39 = sphi 0, %s23
    %s45 = sphi 0, %s47
    %s48 = sphi 0, %s45
    %s49 = sphi 0, %s48
    %s65 = sphi 0, %s49
    %s71 = sphi 0, %s73
    %s74 = sphi 0, %s71
    %s75 = sphi 0, %s74
    %s91 = sphi 0, %s75
    %s97 = sphi 0, %s99
    %s100 = sphi 0, %s97
    %s101 = sphi 0, %s100
    %s117 = sphi 0, %s101
  $region4: #{copyhead_forward.25} parent=0 // loop_header_branch
    %12 = sbr.rel (%p10) target = $region8
  $region5: #{copyhead_forward.25} parent=0 // loop_body
    %s14 = ssub.s32 %s9, 1
    %s15 = ssub.s32 %s9, 2
    %s16 = sadd.s32 %s9, 1
    %s17 = ssub.s32 %s9, %s16
    %p18 = scmp.eq.s32.totalorder %s17, 0
    %s20 = sadd.s32 %s19, 1
    %s21 = scalar_select %p18, %s19, %s20
    %p24 = pneg %p18
    %p25 = scmp.eq.s32.totalorder %s9, 1
    %p26 = por %p24, %p25
    %p27 = scmp.ne.s32.totalorder %s19, %s22
    %p28 = scmp.eq.s32.totalorder %s9, 0
    %p29 = por %p27, %p28
    %p30 = scmp.ne.s32.totalorder %s19, %s22
    %p31 = scmp.eq.s32.totalorder %s14, 1
    %p32 = por %p30, %p31
    %p33 = scmp.ne.s32.totalorder %s22, %s23
    %p34 = scmp.eq.s32.totalorder %s14, 0
    %p35 = por %p33, %p34
    %p36 = scmp.ne.s32.totalorder %s22, %s23
    %p37 = scmp.eq.s32.totalorder %s15, 1
    %p38 = por %p36, %p37
    %p40 = scmp.ne.s32.totalorder %s23, %s39
    %p41 = scmp.eq.s32.totalorder %s15, 0
    %p42 = por %p40, %p41
    %s43 = ssub.s32 %s9, %s16
    %p44 = scmp.eq.s32.totalorder %s43, 0
    %s46 = sadd.s32 %s45, 1
    %s47 = scalar_select %p44, %s45, %s46
    %p50 = pneg %p44
    %p51 = scmp.eq.s32.totalorder %s9, 1
    %p52 = por %p50, %p51
    %p53 = scmp.ne.s32.totalorder %s45, %s48
    %p54 = scmp.eq.s32.totalorder %s9, 0
    %p55 = por %p53, %p54
    %p56 = scmp.ne.s32.totalorder %s45, %s48
    %p57 = scmp.eq.s32.totalorder %s14, 1
    %p58 = por %p56, %p57
    %p59 = scmp.ne.s32.totalorder %s48, %s49
    %p60 = scmp.eq.s32.totalorder %s14, 0
    %p61 = por %p59, %p60
    %p62 = scmp.ne.s32.totalorder %s48, %s49
    %p63 = scmp.eq.s32.totalorder %s15, 1
    %p64 = por %p62, %p63
    %p66 = scmp.ne.s32.totalorder %s49, %s65
    %p67 = scmp.eq.s32.totalorder %s15, 0
    %p68 = por %p66, %p67
    %s69 = ssub.s32 %s9, %s16
    %p70 = scmp.eq.s32.totalorder %s69, 0
    %s72 = sadd.s32 %s71, 1
    %s73 = scalar_select %p70, %s71, %s72
    %p76 = pneg %p70
    %p77 = scmp.eq.s32.totalorder %s9, 1
    %p78 = por %p76, %p77
    %p79 = scmp.ne.s32.totalorder %s71, %s74
    %p80 = scmp.eq.s32.totalorder %s9, 0
    %p81 = por %p79, %p80
    %p82 = scmp.ne.s32.totalorder %s71, %s74
    %p83 = scmp.eq.s32.totalorder %s14, 1
    %p84 = por %p82, %p83
    %p85 = scmp.ne.s32.totalorder %s74, %s75
    %p86 = scmp.eq.s32.totalorder %s14, 0
    %p87 = por %p85, %p86
    %p88 = scmp.ne.s32.totalorder %s74, %s75
    %p89 = scmp.eq.s32.totalorder %s15, 1
    %p90 = por %p88, %p89
    %p92 = scmp.ne.s32.totalorder %s75, %s91
    %p93 = scmp.eq.s32.totalorder %s15, 0
    %p94 = por %p92, %p93
    %s95 = ssub.s32 %s9, %s16
    %p96 = scmp.eq.s32.totalorder %s95, 0
    %s98 = sadd.s32 %s97, 1
    %s99 = scalar_select %p96, %s97, %s98
    %p102 = pneg %p96
    %p103 = scmp.eq.s32.totalorder %s9, 1
    %p104 = por %p102, %p103
    %p105 = scmp.ne.s32.totalorder %s97, %s100
    %p106 = scmp.eq.s32.totalorder %s9, 0
    %p107 = por %p105, %p106
    %p108 = scmp.ne.s32.totalorder %s97, %s100
    %p109 = scmp.eq.s32.totalorder %s14, 1
    %p110 = por %p108, %p109
    %p111 = scmp.ne.s32.totalorder %s100, %s101
    %p112 = scmp.eq.s32.totalorder %s14, 0
    %p113 = por %p111, %p112
    %p114 = scmp.ne.s32.totalorder %s100, %s101
    %p115 = scmp.eq.s32.totalorder %s15, 1
    %p116 = por %p114, %p115
    %p118 = scmp.ne.s32.totalorder %s101, %s117
    %p119 = scmp.eq.s32.totalorder %s15, 0
    %p120 = por %p118, %p119
    %p121 = scmp.le.s32.totalorder 1, %s9
    %p122 = scmp.lt.s32.totalorder %s9, 3
    %p123 = pnand %p121, %p122
    %p124 = pneg %p123
    // Predicated region
    $region9: #{copyhead_forward.25} parent=5 // pred_check
      _
    $region10: #{copyhead_forward.25} parent=5 // pred_check_branch
      %126 = sbr.rel (%p123) target = $region12
    $region11: #{copyhead_forward.25} parent=5 // pred_region
      %s127 = ssub.s32 %s9, 1
    $region12: #{copyhead_forward.25} parent=5 // pred_fallthru
      _
    %p128 = scmp.lt.s32.totalorder %s9, 2
    // Predicated region
    $region13: #{copyhead_forward.25} parent=5 // pred_check
      %p129 = pneg %p128
    $region14: #{copyhead_forward.25} parent=5 // pred_check_branch
      %131 = sbr.rel (%p129) target = $region16
    $region15: #{copyhead_forward.25} parent=5 // pred_region
      // Predicated region
      $region17: #{copyhead_forward.25} parent=15 // pred_check
        %p132 = pneg %p29
      $region18: #{copyhead_forward.25} parent=15 // pred_check_branch
        %134 = sbr.rel (%p132) target = $region20
      $region19: #{copyhead_forward.25} parent=15 // pred_region
        %p135 = scmp.lt.s32.totalorder %s9, 1
        %s136 = scalar_select %p135, %s9, 1
        %s137 = smul.addr %s136, 8
        %s138 = scalar_lea.vmem %s0, %s137
      $region20: #{copyhead_forward.25} parent=15 // pred_fallthru
        _
      // Predicated region
      $region21: #{copyhead_forward.25} parent=15 // pred_check
        %p139 = pneg %p55
      $region22: #{copyhead_forward.25} parent=15 // pred_check_branch
        %141 = sbr.rel (%p139) target = $region24
      $region23: #{copyhead_forward.25} parent=15 // pred_region
        %p142 = scmp.lt.s32.totalorder %s9, 1
        %s143 = scalar_select %p142, %s9, 1
        %s144 = smul.addr %s143, 8
        %s145 = scalar_lea.vmem %s1, %s144
      $region24: #{copyhead_forward.25} parent=15 // pred_fallthru
        _
      // Predicated region
      $region25: #{copyhead_forward.25} parent=15 // pred_check
        %p146 = pneg %p81
      $region26: #{copyhead_forward.25} parent=15 // pred_check_branch
        %148 = sbr.rel (%p146) target = $region28
      $region27: #{copyhead_forward.25} parent=15 // pred_region
        %p149 = scmp.lt.s32.totalorder %s9, 1
        %s150 = scalar_select %p149, %s9, 1
        %s151 = smul.addr %s150, 8
        %s152 = scalar_lea.vmem %s2, %s151
      $region28: #{copyhead_forward.25} parent=15 // pred_fallthru
        _
    $region16: #{copyhead_forward.25} parent=5 // pred_fallthru
      _
    %p153 = scmp.le.s32.totalorder 1, %s9
    %p154 = scmp.lt.s32.totalorder %s9, 3
    %p155 = pnand %p153, %p154
    %p156 = pneg %p155
    // Predicated region
    $region29: #{copyhead_forward.25} parent=5 // pred_check
      _
    $region30: #{copyhead_forward.25} parent=5 // pred_check_branch
      %158 = sbr.rel (%p155) target = $region32
    $region31: #{copyhead_forward.25} parent=5 // pred_region
      %s159 = ssub.s32 %s9, 1
      %p160 = scmp.lt.s32.totalorder %s14, 1
      %s161 = scalar_select %p160, %s14, 1
      %s162 = smul.addr %s161, 8
      %s163 = scalar_lea.vmem %s0, %s162
      %p164 = pneg %p35
      %p165 = pneg %p32
      %p166 = scmp.lt.s32.totalorder %s14, 1
      %s167 = scalar_select %p166, %s14, 1
      %s168 = smul.addr %s167, 8
      %s169 = scalar_lea.vmem %s1, %s168
      %p170 = pneg %p61
      %p171 = pneg %p58
      %p172 = scmp.lt.s32.totalorder %s14, 1
      %s173 = scalar_select %p172, %s14, 1
      %s174 = smul.addr %s173, 8
      %s175 = scalar_lea.vmem %s2, %s174
      %p176 = pneg %p87
      %p177 = pneg %p84
      %p178 = pneg %p113
      %p179 = pneg %p110
      %p180 = scmp.lt.s32.totalorder %s14, 1
      %s181 = scalar_select %p180, %s14, 1
      %s182 = smul.addr %s181, 8
      %s183 = scalar_lea.vmem %s3, %s182
      %p184 = scmp.lt.s32.totalorder %s14, 1
      %s185 = scalar_select %p184, %s14, 1
      %s186 = smul.addr %s185, 8
      %s187 = scalar_lea.vmem %s0, %s186
      %p188 = scmp.lt.s32.totalorder %s14, 1
      %s189 = scalar_select %p188, %s14, 1
      %s190 = smul.addr %s189, 8
      %s191 = scalar_lea.vmem %s1, %s190
      %p192 = scmp.lt.s32.totalorder %s14, 1
      %s193 = scalar_select %p192, %s14, 1
      %s194 = smul.addr %s193, 8
      %s195 = scalar_lea.vmem %s2, %s194
      %p196 = scmp.lt.s32.totalorder %s14, 1
      %s197 = scalar_select %p196, %s14, 1
      %s198 = smul.addr %s197, 8
      %s199 = scalar_lea.vmem %s3, %s198
      %v201 = vld [vmem:[%s187] sm:$0xff]
      %v202 = vpack.c.bf16 %v201, %v201
      %v203 = vld [vmem:[%s191] sm:$0xff]
      %v204 = vpack.c.bf16 %v203, %v203
      %v205 = vld [vmem:[%s195] sm:$0xff]
      %v206 = vpack.c.bf16 %v205, %v205
      %vm207 = vcmask 130048
      %v209 = vsel %vm207, %v202, 0
      %v212 = vsel %vm207, %v204, 0
      %214 = vmatprep.subr.bf16.mxu0 0
      %215 = vmatpush1.bf16.xpose.msra.mxu0 %v212
      %216 = vmatprep.subr.bf16.mxu0 0
      %217 = vmatpush1.bf16.xpose.msra.mxu0 0
      %218 = vmatprep.subr.bf16.mxu0 0
      %219 = vmatpush1.bf16.xpose.msra.mxu0 0
      %220 = vmatprep.subr.bf16.mxu0 0
      %221 = vmatpush1.bf16.xpose.msra.mxu0 0
      %222 = vmatprep.subr.bf16.mxu0 0
      %223 = vmatpush1.bf16.xpose.msra.mxu0 0
      %224 = vmatprep.subr.bf16.mxu0 0
      %225 = vmatpush1.bf16.xpose.msra.mxu0 0
      %226 = vmatprep.subr.bf16.mxu0 0
      %227 = vmatpush1.bf16.xpose.msra.mxu0 0
      %228 = vmatprep.subr.bf16.mxu0 0
      %229 = vmatpush1.bf16.xpose.msra.mxu0 0
      %230 = vmatprep.subr.bf16.mxu0 0
      %231 = vmatpush1.bf16.xpose.msra.mxu0 0
      %232 = vmatprep.subr.bf16.mxu0 0
      %233 = vmatpush1.bf16.xpose.msra.mxu0 0
      %234 = vmatprep.subr.bf16.mxu0 0
      %235 = vmatpush1.bf16.xpose.msra.mxu0 0
      %236 = vmatprep.subr.bf16.mxu0 0
      %237 = vmatpush1.bf16.xpose.msra.mxu0 0
      %238 = vmatprep.subr.bf16.mxu0 0
      %239 = vmatpush1.bf16.xpose.msra.mxu0 0
      %240 = vmatprep.subr.bf16.mxu0 0
      %241 = vmatpush1.bf16.xpose.msra.mxu0 0
      %242 = vmatprep.subr.bf16.mxu0 0
      %243 = vmatpush1.bf16.xpose.msra.mxu0 0
      %244 = vmatprep.subr.bf16.mxu0 0
      %245 = vmatpush1.bf16.xpose.msra.mxu0 0
      %246 = vmatprep.mubr.bf16.mxu0 0
      %247 = vmatmul.mubr.bf16.gmra.mrb[0].mxu0 %v209
      %v248 = vpop.f32.mrb[0].mxu0
      %v249 = vadd.f32 0.0, %v248
      %v250 = vpop.f32.mrb[0].mxu0
      %v251 = vpop.f32.mrb[0].mxu0
      %v252 = vpop.f32.mrb[0].mxu0
      %253 = vdwg.mxu0
      %v254 = vmul.f32 %v249, 0.25
      %vm255 = vcmask 64512
      %v256 = vsel %vm255, %v254, -inf
      %257 = vmax.xlane.f32.xlu0 %v256
      %v258 = vpop.xlane.xlu0 %257
      %v259 = vsub.f32 %v254, %v258
      %v260 = vmul.f32 %v259, 1.442695
      %v261 = vpow.pop %v260
      %v262 = vsel %vm255, %v261, 0.0
      %263 = vadd.xlane.f32.xlu0 %v262
      %v264 = vpop.xlane.xlu0 %263
      %v265 = vrcp.pop %v264
      %v266 = vmul.f32 %v261, %v265
      %v267 = vpack.c.bf16 %v266, %v266
      %v269 = vsel %vm255, %v267, 0
      %vm271 = vcmask 1043456
      %v273 = vsel %vm271, %v206, 0
      %275 = vmatprep.subr.bf16.mxu0 0
      %276 = vmatpush1.bf16.msra.mxu0 %v273
      %277 = vmatprep.subr.bf16.mxu0 0
      %278 = vmatpush1.bf16.msra.mxu0 0
      %279 = vmatprep.subr.bf16.mxu0 0
      %280 = vmatpush1.bf16.msra.mxu0 0
      %281 = vmatprep.subr.bf16.mxu0 0
      %282 = vmatpush1.bf16.msra.mxu0 0
      %283 = vmatprep.subr.bf16.mxu0 0
      %284 = vmatpush1.bf16.msra.mxu0 0
      %285 = vmatprep.subr.bf16.mxu0 0
      %286 = vmatpush1.bf16.msra.mxu0 0
      %287 = vmatprep.subr.bf16.mxu0 0
      %288 = vmatpush1.bf16.msra.mxu0 0
      %289 = vmatprep.subr.bf16.mxu0 0
      %290 = vmatpush1.bf16.msra.mxu0 0
      %291 = vmatprep.subr.bf16.mxu0 0
      %292 = vmatpush1.bf16.msra.mxu0 0
      %293 = vmatprep.subr.bf16.mxu0 0
      %294 = vmatpush1.bf16.msra.mxu0 0
      %295 = vmatprep.subr.bf16.mxu0 0
      %296 = vmatpush1.bf16.msra.mxu0 0
      %297 = vmatprep.subr.bf16.mxu0 0
      %298 = vmatpush1.bf16.msra.mxu0 0
      %299 = vmatprep.subr.bf16.mxu0 0
      %300 = vmatpush1.bf16.msra.mxu0 0
      %301 = vmatprep.subr.bf16.mxu0 0
      %302 = vmatpush1.bf16.msra.mxu0 0
      %303 = vmatprep.subr.bf16.mxu0 0
      %304 = vmatpush1.bf16.msra.mxu0 0
      %305 = vmatprep.subr.bf16.mxu0 0
      %306 = vmatpush1.bf16.msra.mxu0 0
      %307 = vmatprep.mubr.bf16.mxu0 0
      %308 = vmatmul.mubr.bf16.gmra.mrb[0].mxu0 %v269
      %v309 = vpop.f32.mrb[0].mxu0
      %v310 = vadd.f32 0.0, %v309
      %v311 = vpop.f32.mrb[0].mxu0
      %v312 = vpop.f32.mrb[0].mxu0
      %v313 = vpop.f32.mrb[0].mxu0
      %314 = vdwg.mxu0
      %315 = vst.msk [vmem:[%s199] sm:$0xff] %vm207, %v310
      %v316 = vld [vmem:[%s187] sm:$0xff]
      %v317 = vpack.c.bf16 %v316, %v316
      %v318 = vld [vmem:[%s191] sm:$0xff]
      %v319 = vpack.c.bf16 %v318, %v318
      %v320 = vld [vmem:[%s195] sm:$0xff]
      %v321 = vpack.c.bf16 %v320, %v320
      %323 = vrot.lane.b32.xlu0 %v317, 112
      %v324 = vpop.permute.xlu0 %323
      %326 = vrot.lane.b32.xlu0 %v319, 112
      %v327 = vpop.permute.xlu0 %326
      %v329 = vsel %vm207, %v324, 0
      %v332 = vsel %vm207, %v327, 0
      %334 = vmatprep.subr.bf16.mxu0 0
      %335 = vmatpush1.bf16.xpose.msra.mxu0 %v332
      %336 = vmatprep.subr.bf16.mxu0 0
      %337 = vmatpush1.bf16.xpose.msra.mxu0 0
      %338 = vmatprep.subr.bf16.mxu0 0
      %339 = vmatpush1.bf16.xpose.msra.mxu0 0
      %340 = vmatprep.subr.bf16.mxu0 0
      %341 = vmatpush1.bf16.xpose.msra.mxu0 0
      %342 = vmatprep.subr.bf16.mxu0 0
      %343 = vmatpush1.bf16.xpose.msra.mxu0 0
      %344 = vmatprep.subr.bf16.mxu0 0
      %345 = vmatpush1.bf16.xpose.msra.mxu0 0
      %346 = vmatprep.subr.bf16.mxu0 0
      %347 = vmatpush1.bf16.xpose.msra.mxu0 0
      %348 = vmatprep.subr.bf16.mxu0 0
      %349 = vmatpush1.bf16.xpose.msra.mxu0 0
      %350 = vmatprep.subr.bf16.mxu0 0
      %351 = vmatpush1.bf16.xpose.msra.mxu0 0
      %352 = vmatprep.subr.bf16.mxu0 0
      %353 = vmatpush1.bf16.xpose.msra.mxu0 0
      %354 = vmatprep.subr.bf16.mxu0 0
      %355 = vmatpush1.bf16.xpose.msra.mxu0 0
      %356 = vmatprep.subr.bf16.mxu0 0
      %357 = vmatpush1.bf16.xpose.msra.mxu0 0
      %358 = vmatprep.subr.bf16.mxu0 0
      %359 = vmatpush1.bf16.xpose.msra.mxu0 0
      %360 = vmatprep.subr.bf16.mxu0 0
      %361 = vmatpush1.bf16.xpose.msra.mxu0 0
      %362 = vmatprep.subr.bf16.mxu0 0
      %363 = vmatpush1.bf16.xpose.msra.mxu0 0
      %364 = vmatprep.subr.bf16.mxu0 0
      %365 = vmatpush1.bf16.xpose.msra.mxu0 0
      %366 = vmatprep.mubr.bf16.mxu0 0
      %367 = vmatmul.mubr.bf16.gmra.mrb[0].mxu0 %v329
      %v368 = vpop.f32.mrb[0].mxu0
      %v369 = vadd.f32 0.0, %v368
      %v370 = vpop.f32.mrb[0].mxu0
      %v371 = vpop.f32.mrb[0].mxu0
      %v372 = vpop.f32.mrb[0].mxu0
      %373 = vdwg.mxu0
      %v374 = vmul.f32 %v369, 0.25
      %v375 = vsel %vm255, %v374, -inf
      %376 = vmax.xlane.f32.xlu0 %v375
      %v377 = vpop.xlane.xlu0 %376
      %v378 = vsub.f32 %v374, %v377
      %v379 = vmul.f32 %v378, 1.442695
      %v380 = vpow.pop %v379
      %v381 = vsel %vm255, %v380, 0.0
      %382 = vadd.xlane.f32.xlu0 %v381
      %v383 = vpop.xlane.xlu0 %382
      %v384 = vrcp.pop %v383
      %v385 = vmul.f32 %v380, %v384
      %v386 = vpack.c.bf16 %v385, %v385
      %388 = vrot.lane.b32.xlu0 %v321, 112
      %v389 = vpop.permute.xlu0 %388
      %v391 = vsel %vm255, %v386, 0
      %v394 = vsel %vm271, %v389, 0
      %396 = vmatprep.subr.bf16.mxu0 0
      %397 = vmatpush1.bf16.msra.mxu0 %v394
      %398 = vmatprep.subr.bf16.mxu0 0
      %399 = vmatpush1.bf16.msra.mxu0 0
      %400 = vmatprep.subr.bf16.mxu0 0
      %401 = vmatpush1.bf16.msra.mxu0 0
      %402 = vmatprep.subr.bf16.mxu0 0
      %403 = vmatpush1.bf16.msra.mxu0 0
      %404 = vmatprep.subr.bf16.mxu0 0
      %405 = vmatpush1.bf16.msra.mxu0 0
      %406 = vmatprep.subr.bf16.mxu0 0
      %407 = vmatpush1.bf16.msra.mxu0 0
      %408 = vmatprep.subr.bf16.mxu0 0
      %409 = vmatpush1.bf16.msra.mxu0 0
      %410 = vmatprep.subr.bf16.mxu0 0
      %411 = vmatpush1.bf16.msra.mxu0 0
      %412 = vmatprep.subr.bf16.mxu0 0
      %413 = vmatpush1.bf16.msra.mxu0 0
      %414 = vmatprep.subr.bf16.mxu0 0
      %415 = vmatpush1.bf16.msra.mxu0 0
      %416 = vmatprep.subr.bf16.mxu0 0
      %417 = vmatpush1.bf16.msra.mxu0 0
      %418 = vmatprep.subr.bf16.mxu0 0
      %419 = vmatpush1.bf16.msra.mxu0 0
      %420 = vmatprep.subr.bf16.mxu0 0
      %421 = vmatpush1.bf16.msra.mxu0 0
      %422 = vmatprep.subr.bf16.mxu0 0
      %423 = vmatpush1.bf16.msra.mxu0 0
      %424 = vmatprep.subr.bf16.mxu0 0
      %425 = vmatpush1.bf16.msra.mxu0 0
      %426 = vmatprep.subr.bf16.mxu0 0
      %427 = vmatpush1.bf16.msra.mxu0 0
      %428 = vmatprep.mubr.bf16.mxu0 0
      %429 = vmatmul.mubr.bf16.gmra.mrb[0].mxu0 %v391
      %v430 = vpop.f32.mrb[0].mxu0
      %v431 = vadd.f32 0.0, %v430
      %v432 = vpop.f32.mrb[0].mxu0
      %v433 = vpop.f32.mrb[0].mxu0
      %v434 = vpop.f32.mrb[0].mxu0
      %435 = vdwg.mxu0
      %437 = vrot.lane.b32.xlu0 %v431, 16
      %v438 = vpop.permute.xlu0 %437
      %vm440 = vcmask 261248
      %441 = vst.msk [vmem:[%s199] sm:$0xff] %vm440, %v438
      %v442 = vld [vmem:[%s187] sm:$0xff]
      %v443 = vpack.c.bf16 %v442, %v442
      %v444 = vld [vmem:[%s191] sm:$0xff]
      %v445 = vpack.c.bf16 %v444, %v444
      %v446 = vld [vmem:[%s195] sm:$0xff]
      %v447 = vpack.c.bf16 %v446, %v446
      %449 = vrot.lane.b32.xlu0 %v443, 96
      %v450 = vpop.permute.xlu0 %449
      %452 = vrot.lane.b32.xlu0 %v445, 96
      %v453 = vpop.permute.xlu0 %452
      %v455 = vsel %vm207, %v450, 0
      %v458 = vsel %vm207, %v453, 0
      %460 = vmatprep.subr.bf16.mxu0 0
      %461 = vmatpush1.bf16.xpose.msra.mxu0 %v458
      %462 = vmatprep.subr.bf16.mxu0 0
      %463 = vmatpush1.bf16.xpose.msra.mxu0 0
      %464 = vmatprep.subr.bf16.mxu0 0
      %465 = vmatpush1.bf16.xpose.msra.mxu0 0
      %466 = vmatprep.subr.bf16.mxu0 0
      %467 = vmatpush1.bf16.xpose.msra.mxu0 0
      %468 = vmatprep.subr.bf16.mxu0 0
      %469 = vmatpush1.bf16.xpose.msra.mxu0 0
      %470 = vmatprep.subr.bf16.mxu0 0
      %471 = vmatpush1.bf16.xpose.msra.mxu0 0
      %472 = vmatprep.subr.bf16.mxu0 0
      %473 = vmatpush1.bf16.xpose.msra.mxu0 0
      %474 = vmatprep.subr.bf16.mxu0 0
      %475 = vmatpush1.bf16.xpose.msra.mxu0 0
      %476 = vmatprep.subr.bf16.mxu0 0
      %477 = vmatpush1.bf16.xpose.msra.mxu0 0
      %478 = vmatprep.subr.bf16.mxu0 0
      %479 = vmatpush1.bf16.xpose.msra.mxu0 0
      %480 = vmatprep.subr.bf16.mxu0 0
      %481 = vmatpush1.bf16.xpose.msra.mxu0 0
      %482 = vmatprep.subr.bf16.mxu0 0
      %483 = vmatpush1.bf16.xpose.msra.mxu0 0
      %484 = vmatprep.subr.bf16.mxu0 0
      %485 = vmatpush1.bf16.xpose.msra.mxu0 0
      %486 = vmatprep.subr.bf16.mxu0 0
      %487 = vmatpush1.bf16.xpose.msra.mxu0 0
      %488 = vmatprep.subr.bf16.mxu0 0
      %489 = vmatpush1.bf16.xpose.msra.mxu0 0
      %490 = vmatprep.subr.bf16.mxu0 0
      %491 = vmatpush1.bf16.xpose.msra.mxu0 0
      %492 = vmatprep.mubr.bf16.mxu0 0
      %493 = vmatmul.mubr.bf16.gmra.mrb[0].mxu0 %v455
      %v494 = vpop.f32.mrb[0].mxu0
      %v495 = vadd.f32 0.0, %v494
      %v496 = vpop.f32.mrb[0].mxu0
      %v497 = vpop.f32.mrb[0].mxu0
      %v498 = vpop.f32.mrb[0].mxu0
      %499 = vdwg.mxu0
      %v500 = vmul.f32 %v495, 0.25
      %v501 = vsel %vm255, %v500, -inf
      %502 = vmax.xlane.f32.xlu0 %v501
      %v503 = vpop.xlane.xlu0 %502
      %v504 = vsub.f32 %v500, %v503
      %v505 = vmul.f32 %v504, 1.442695
      %v506 = vpow.pop %v505
      %v507 = vsel %vm255, %v506, 0.0
      %508 = vadd.xlane.f32.xlu0 %v507
      %v509 = vpop.xlane.xlu0 %508
      %v510 = vrcp.pop %v509
      %v511 = vmul.f32 %v506, %v510
      %v512 = vpack.c.bf16 %v511, %v511
      %514 = vrot.lane.b32.xlu0 %v447, 96
      %v515 = vpop.permute.xlu0 %514
      %v517 = vsel %vm255, %v512, 0
      %v520 = vsel %vm271, %v515, 0
      %522 = vmatprep.subr.bf16.mxu0 0
      %523 = vmatpush1.bf16.msra.mxu0 %v520
      %524 = vmatprep.subr.bf16.mxu0 0
      %525 = vmatpush1.bf16.msra.mxu0 0
      %526 = vmatprep.subr.bf16.mxu0 0
      %527 = vmatpush1.bf16.msra.mxu0 0
      %528 = vmatprep.subr.bf16.mxu0 0
      %529 = vmatpush1.bf16.msra.mxu0 0
      %530 = vmatprep.subr.bf16.mxu0 0
      %531 = vmatpush1.bf16.msra.mxu0 0
      %532 = vmatprep.subr.bf16.mxu0 0
      %533 = vmatpush1.bf16.msra.mxu0 0
      %534 = vmatprep.subr.bf16.mxu0 0
      %535 = vmatpush1.bf16.msra.mxu0 0
      %536 = vmatprep.subr.bf16.mxu0 0
      %537 = vmatpush1.bf16.msra.mxu0 0
      %538 = vmatprep.subr.bf16.mxu0 0
      %539 = vmatpush1.bf16.msra.mxu0 0
      %540 = vmatprep.subr.bf16.mxu0 0
      %541 = vmatpush1.bf16.msra.mxu0 0
      %542 = vmatprep.subr.bf16.mxu0 0
      %543 = vmatpush1.bf16.msra.mxu0 0
      %544 = vmatprep.subr.bf16.mxu0 0
      %545 = vmatpush1.bf16.msra.mxu0 0
      %546 = vmatprep.subr.bf16.mxu0 0
      %547 = vmatpush1.bf16.msra.mxu0 0
      %548 = vmatprep.subr.bf16.mxu0 0
      %549 = vmatpush1.bf16.msra.mxu0 0
      %550 = vmatprep.subr.bf16.mxu0 0
      %551 = vmatpush1.bf16.msra.mxu0 0
      %552 = vmatprep.subr.bf16.mxu0 0
      %553 = vmatpush1.bf16.msra.mxu0 0
      %554 = vmatprep.mubr.bf16.mxu0 0
      %555 = vmatmul.mubr.bf16.gmra.mrb[0].mxu0 %v517
      %v556 = vpop.f32.mrb[0].mxu0
      %v557 = vadd.f32 0.0, %v556
      %v558 = vpop.f32.mrb[0].mxu0
      %v559 = vpop.f32.mrb[0].mxu0
      %v560 = vpop.f32.mrb[0].mxu0
      %561 = vdwg.mxu0
      %563 = vrot.lane.b32.xlu0 %v557, 32
      %v564 = vpop.permute.xlu0 %563
      %vm566 = vcmask 392448
      %567 = vst.msk [vmem:[%s199] sm:$0xff] %vm566, %v564
      %v568 = vld [vmem:[%s187] sm:$0xff]
      %v569 = vpack.c.bf16 %v568, %v568
      %v570 = vld [vmem:[%s191] sm:$0xff]
      %v571 = vpack.c.bf16 %v570, %v570
      %v572 = vld [vmem:[%s195] sm:$0xff]
      %v573 = vpack.c.bf16 %v572, %v572
      %575 = vrot.lane.b32.xlu0 %v569, 80
      %v576 = vpop.permute.xlu0 %575
      %578 = vrot.lane.b32.xlu0 %v571, 80
      %v579 = vpop.permute.xlu0 %578
      %v581 = vsel %vm207, %v576, 0
      %v584 = vsel %vm207, %v579, 0
      %586 = vmatprep.subr.bf16.mxu0 0
      %587 = vmatpush1.bf16.xpose.msra.mxu0 %v584
      %588 = vmatprep.subr.bf16.mxu0 0
      %589 = vmatpush1.bf16.xpose.msra.mxu0 0
      %590 = vmatprep.subr.bf16.mxu0 0
      %591 = vmatpush1.bf16.xpose.msra.mxu0 0
      %592 = vmatprep.subr.bf16.mxu0 0
      %593 = vmatpush1.bf16.xpose.msra.mxu0 0
      %594 = vmatprep.subr.bf16.mxu0 0
      %595 = vmatpush1.bf16.xpose.msra.mxu0 0
      %596 = vmatprep.subr.bf16.mxu0 0
      %597 = vmatpush1.bf16.xpose.msra.mxu0 0
      %598 = vmatprep.subr.bf16.mxu0 0
      %599 = vmatpush1.bf16.xpose.msra.mxu0 0
      %600 = vmatprep.subr.bf16.mxu0 0
      %601 = vmatpush1.bf16.xpose.msra.mxu0 0
      %602 = vmatprep.subr.bf16.mxu0 0
      %603 = vmatpush1.bf16.xpose.msra.mxu0 0
      %604 = vmatprep.subr.bf16.mxu0 0
      %605 = vmatpush1.bf16.xpose.msra.mxu0 0
      %606 = vmatprep.subr.bf16.mxu0 0
      %607 = vmatpush1.bf16.xpose.msra.mxu0 0
      %608 = vmatprep.subr.bf16.mxu0 0
      %609 = vmatpush1.bf16.xpose.msra.mxu0 0
      %610 = vmatprep.subr.bf16.mxu0 0
      %611 = vmatpush1.bf16.xpose.msra.mxu0 0
      %612 = vmatprep.subr.bf16.mxu0 0
      %613 = vmatpush1.bf16.xpose.msra.mxu0 0
      %614 = vmatprep.subr.bf16.mxu0 0
      %615 = vmatpush1.bf16.xpose.msra.mxu0 0
      %616 = vmatprep.subr.bf16.mxu0 0
      %617 = vmatpush1.bf16.xpose.msra.mxu0 0
      %618 = vmatprep.mubr.bf16.mxu0 0
      %619 = vmatmul.mubr.bf16.gmra.mrb[0].mxu0 %v581
      %v620 = vpop.f32.mrb[0].mxu0
      %v621 = vadd.f32 0.0, %v620
      %v622 = vpop.f32.mrb[0].mxu0
      %v623 = vpop.f32.mrb[0].mxu0
      %v624 = vpop.f32.mrb[0].mxu0
      %625 = vdwg.mxu0
      %v626 = vmul.f32 %v621, 0.25
      %v627 = vsel %vm255, %v626, -inf
      %628 = vmax.xlane.f32.xlu0 %v627
      %v629 = vpop.xlane.xlu0 %628
      %v630 = vsub.f32 %v626, %v629
      %v631 = vmul.f32 %v630, 1.442695
      %v632 = vpow.pop %v631
      %v633 = vsel %vm255, %v632, 0.0
      %634 = vadd.xlane.f32.xlu0 %v633
      %v635 = vpop.xlane.xlu0 %634
      %v636 = vrcp.pop %v635
      %v637 = vmul.f32 %v632, %v636
      %v638 = vpack.c.bf16 %v637, %v637
      %640 = vrot.lane.b32.xlu0 %v573, 80
      %v641 = vpop.permute.xlu0 %640
      %v643 = vsel %vm255, %v638, 0
      %v646 = vsel %vm271, %v641, 0
      %648 = vmatprep.subr.bf16.mxu0 0
      %649 = vmatpush1.bf16.msra.mxu0 %v646
      %650 = vmatprep.subr.bf16.mxu0 0
      %651 = vmatpush1.bf16.msra.mxu0 0
      %652 = vmatprep.subr.bf16.mxu0 0
      %653 = vmatpush1.bf16.msra.mxu0 0
      %654 = vmatprep.subr.bf16.mxu0 0
      %655 = vmatpush1.bf16.msra.mxu0 0
      %656 = vmatprep.subr.bf16.mxu0 0
      %657 = vmatpush1.bf16.msra.mxu0 0
      %658 = vmatprep.subr.bf16.mxu0 0
      %659 = vmatpush1.bf16.msra.mxu0 0
      %660 = vmatprep.subr.bf16.mxu0 0
      %661 = vmatpush1.bf16.msra.mxu0 0
      %662 = vmatprep.subr.bf16.mxu0 0
      %663 = vmatpush1.bf16.msra.mxu0 0
      %664 = vmatprep.subr.bf16.mxu0 0
      %665 = vmatpush1.bf16.msra.mxu0 0
      %666 = vmatprep.subr.bf16.mxu0 0
      %667 = vmatpush1.bf16.msra.mxu0 0
      %668 = vmatprep.subr.bf16.mxu0 0
      %669 = vmatpush1.bf16.msra.mxu0 0
      %670 = vmatprep.subr.bf16.mxu0 0
      %671 = vmatpush1.bf16.msra.mxu0 0
      %672 = vmatprep.subr.bf16.mxu0 0
      %673 = vmatpush1.bf16.msra.mxu0 0
      %674 = vmatprep.subr.bf16.mxu0 0
      %675 = vmatpush1.bf16.msra.mxu0 0
      %676 = vmatprep.subr.bf16.mxu0 0
      %677 = vmatpush1.bf16.msra.mxu0 0
      %678 = vmatprep.subr.bf16.mxu0 0
      %679 = vmatpush1.bf16.msra.mxu0 0
      %680 = vmatprep.mubr.bf16.mxu0 0
      %681 = vmatmul.mubr.bf16.gmra.mrb[0].mxu0 %v643
      %v682 = vpop.f32.mrb[0].mxu0
      %v683 = vadd.f32 0.0, %v682
      %v684 = vpop.f32.mrb[0].mxu0
      %v685 = vpop.f32.mrb[0].mxu0
      %v686 = vpop.f32.mrb[0].mxu0
      %687 = vdwg.mxu0
      %689 = vrot.lane.b32.xlu0 %v683, 48
      %v690 = vpop.permute.xlu0 %689
      %vm692 = vcmask 523648
      %693 = vst.msk [vmem:[%s199] sm:$0xff] %vm692, %v690
      %p694 = scmp.lt.s32.totalorder %s14, 1
      %s695 = scalar_select %p694, %s14, 1
      %s696 = smul.addr %s695, 8
      %s697 = scalar_lea.vmem %s3, %s696
      // Predicated region
      $region33: #{copyhead_forward.25} parent=31 // pred_check
        %p698 = pneg %p110
      $region34: #{copyhead_forward.25} parent=31 // pred_check_branch
        %700 = sbr.rel (%p698) target = $region36
      $region35: #{copyhead_forward.25} parent=31 // pred_region
        _
      $region36: #{copyhead_forward.25} parent=31 // pred_fallthru
        _
    $region32: #{copyhead_forward.25} parent=5 // pred_fallthru
      _
    %p701 = scmp.le.s32.totalorder 2, %s9
    // Predicated region
    $region37: #{copyhead_forward.25} parent=5 // pred_check
      %p702 = pneg %p701
    $region38: #{copyhead_forward.25} parent=5 // pred_check_branch
      %704 = sbr.rel (%p702) target = $region40
    $region39: #{copyhead_forward.25} parent=5 // pred_region
      %s705 = ssub.s32 %s9, 2
      // Predicated region
      $region41: #{copyhead_forward.25} parent=39 // pred_check
        %p706 = pneg %p116
      $region42: #{copyhead_forward.25} parent=39 // pred_check_branch
        %708 = sbr.rel (%p706) target = $region44
      $region43: #{copyhead_forward.25} parent=39 // pred_region
        %p709 = scmp.lt.s32.totalorder %s15, 1
        %s710 = scalar_select %p709, %s15, 1
        %s711 = smul.addr %s710, 8
        %s712 = scalar_lea.vmem %s3, %s711
      $region44: #{copyhead_forward.25} parent=39 // pred_fallthru
        _
    $region40: #{copyhead_forward.25} parent=5 // pred_fallthru
      _
  $region6: #{copyhead_forward.25} parent=0 // loop_footer
    %s13 = sadd.s32 1, %s9
  $region7: #{copyhead_forward.25} parent=0 // loop_footer_branch
    %8 = sbr.rel target = $region3
  $region8: #{copyhead_forward.25} parent=0 // loop_exit
    _

// kernel: copyhead_forward.27
$region0: #{copyhead_forward.27}
  #allocation0 [shape = 'u32[]', space=smem, size = 0x4, offset = 0x4, fixed_abs, tag = 'smem constant byte address 0x4 - core index']
  #allocation1 [shape = 'u32[144,128]{1,0:T(1,128)}', space=vmem, size = 0x12000, scoped, tag = 'internal scratch']
  %s0 = inlined_call_operand.vmem [shape: f32[16,64], index: 0, kind: input, shape index: {}]
  %s1 = inlined_call_operand.vmem [shape: f32[1,64], index: 1, kind: input, shape index: {}]
  %s2 = inlined_call_operand.vmem [shape: f32[1,64], index: 2, kind: input, shape index: {}]
  %s3 = inlined_call_operand.vmem [shape: f32[16,64], index: 3, kind: output, shape index: {}]
  %s4 = sld [smem:[#allocation0]]
  $region22: #{copyhead_forward.27} parent=0
    _
  %s6 = ssub.s32 1, %s4
  %s7 = scalar_select 0, %s6, %s4
  // Predicated region
  $region2: #{copyhead_forward.27} parent=0 // pred_check
    _
  $region3: #{copyhead_forward.27} parent=0 // pred_check_branch
    %9 = sbr.rel (0) target = $region5
  $region4: #{copyhead_forward.27} parent=0 // pred_region
    _
  $region5: #{copyhead_forward.27} parent=0 // pred_fallthru
    _
  // Predicated region
  $region6: #{copyhead_forward.27} parent=0 // pred_check
    _
  $region7: #{copyhead_forward.27} parent=0 // pred_check_branch
    %11 = sbr.rel (0) target = $region9
  $region8: #{copyhead_forward.27} parent=0 // pred_region
    _
  $region9: #{copyhead_forward.27} parent=0 // pred_fallthru
    _
  // Predicated region
  $region10: #{copyhead_forward.27} parent=0 // pred_check
    _
  $region11: #{copyhead_forward.27} parent=0 // pred_check_branch
    %13 = sbr.rel (0) target = $region13
  $region12: #{copyhead_forward.27} parent=0 // pred_region
    _
  $region13: #{copyhead_forward.27} parent=0 // pred_fallthru
    _
  %v14 = vld [vmem:[%s0] sm:$0xff]
  %v15 = vld [vmem:[%s0 + $0x8] sm:$0xff]
  %v16 = vmul.f32 %v14, 2.0
  %v17 = vmul.f32 %v15, 2.0
  %vm18 = vcmask 523264
  %v19 = vsel %vm18, %v16, 0.0
  %20 = vadd.xlane.f32.xlu0 %v19
  %v21 = vpop.xlane.xlu0 %20
  %v22 = vsel %vm18, %v17, 0.0
  %23 = vadd.xlane.f32.xlu0 %v22
  %v24 = vpop.xlane.xlu0 %23
  %v25 = vrcp.pop 64.0
  %v26 = vmul.f32 %v21, %v25
  %v27 = vmul.f32 %v24, %v25
  %v28 = vsub.f32 %v16, %v26
  %v29 = vsub.f32 %v17, %v27
  %v30 = vmul.f32 %v28, %v28
  %v31 = vmul.f32 %v29, %v29
  %v32 = vsel %vm18, %v30, 0.0
  %33 = vadd.xlane.f32.xlu0 %v32
  %v34 = vpop.xlane.xlu0 %33
  %v35 = vsel %vm18, %v31, 0.0
  %36 = vadd.xlane.f32.xlu0 %v35
  %v37 = vpop.xlane.xlu0 %36
  %v38 = vmul.f32 %v34, %v25
  %v39 = vmul.f32 %v37, %v25
  %v40 = vadd.f32 %v38, 1e-05
  %v41 = vadd.f32 %v39, 1e-05
  %v42 = vrsqrt.pop %v40
  %v43 = vrsqrt.pop %v41
  %v44 = vmul.f32 %v28, %v42
  %v45 = vmul.f32 %v29, %v43
  %v46 = vld [vmem:[%s1] sm:$0x1]
  %v48 = vlaneseq
  %v49 = vshrl.u32 %v48, 7
  %v50 = vsub.s32 0, %v49
  %v51 = vrot.slane %v46, %v50
  %v53 = vmul.f32 %v44, %v51
  %v54 = vmul.f32 %v45, %v51
  %v55 = vld [vmem:[%s2] sm:$0x1]
  %v57 = vlaneseq
  %v58 = vshrl.u32 %v57, 7
  %v59 = vsub.s32 0, %v58
  %v60 = vrot.slane %v55, %v59
  %v62 = vadd.f32 %v53, %v60
  %v63 = vadd.f32 %v54, %v60
  %64 = vst.msk [vmem:[%s3] sm:$0xff] %vm18, %v62
  %65 = vst.msk [vmem:[%s3 + $0x8] sm:$0xff] %vm18, %v63
  // Predicated region
  $region14: #{copyhead_forward.27} parent=0 // pred_check
    _
  $region15: #{copyhead_forward.27} parent=0 // pred_check_branch
    %67 = sbr.rel (0) target = $region17
  $region16: #{copyhead_forward.27} parent=0 // pred_region
    _
  $region17: #{copyhead_forward.27} parent=0 // pred_fallthru
    _
  // Predicated region
  $region18: #{copyhead_forward.27} parent=0 // pred_check
    _
  $region19: #{copyhead_forward.27} parent=0 // pred_check_branch
    %69 = sbr.rel (0) target = $region21
  $region20: #{copyhead_forward.27} parent=0 // pred_region
    _
  $region21: #{copyhead_forward.27} parent=0 // pred_fallthru
    _

// kernel: copyhead_forward.28
$region0: #{copyhead_forward.28}
  #allocation0 [shape = 'u32[]', space=smem, size = 0x4, offset = 0x4, fixed_abs, tag = 'smem constant byte address 0x4 - core index']
  #allocation1 [shape = 'u32[144,128]{1,0:T(1,128)}', space=vmem, size = 0x12000, scoped, tag = 'internal scratch']
  #allocation2 [shape = 'f32[16,256]{1,0:T(8,128)}', space=vmem, size = 0x4000, scoped, tag = 'scratch operand']
  %s0 = inlined_call_operand.vmem [shape: f32[16,64], index: 0, kind: input, shape index: {}]
  %s1 = inlined_call_operand.vmem [shape: f32[64,256], index: 1, kind: input, shape index: {}]
  %s2 = inlined_call_operand.vmem [shape: f32[1,256], index: 2, kind: input, shape index: {}]
  %s3 = inlined_call_operand.vmem [shape: f32[16,256], index: 3, kind: output, shape index: {}]
  %s4 = sld [smem:[#allocation0]]
  $region30: #{copyhead_forward.28} parent=0
    _
  %s6 = ssub.s32 1, %s4
  %s7 = scalar_select 0, %s6, %s4
  // Predicated region
  $region2: #{copyhead_forward.28} parent=0 // pred_check
    _
  $region3: #{copyhead_forward.28} parent=0 // pred_check_branch
    %9 = sbr.rel (0) target = $region5
  $region4: #{copyhead_forward.28} parent=0 // pred_region
    _
  $region5: #{copyhead_forward.28} parent=0 // pred_fallthru
    _
  // Predicated region
  $region6: #{copyhead_forward.28} parent=0 // pred_check
    _
  $region7: #{copyhead_forward.28} parent=0 // pred_check_branch
    %11 = sbr.rel (0) target = $region9
  $region8: #{copyhead_forward.28} parent=0 // pred_region
    _
  $region9: #{copyhead_forward.28} parent=0 // pred_fallthru
    _
  // Predicated region
  $region10: #{copyhead_forward.28} parent=0 // pred_check
    _
  $region11: #{copyhead_forward.28} parent=0 // pred_check_branch
    %13 = sbr.rel (0) target = $region13
  $region12: #{copyhead_forward.28} parent=0 // pred_region
    _
  $region13: #{copyhead_forward.28} parent=0 // pred_fallthru
    _
  %p15 = scmp.eq.s32.totalorder 0, 0
  // Predicated region
  $region14: #{copyhead_forward.28} parent=0 // pred_check
    %p16 = pneg %p15
  $region15: #{copyhead_forward.28} parent=0 // pred_check_branch
    %18 = sbr.rel (%p16) target = $region17
  $region16: #{copyhead_forward.28} parent=0 // pred_region
    %19 = vst [vmem:[#allocation2] sm:$0xff] 0.0
    %20 = vst [vmem:[#allocation2 + $0x8] sm:$0xff] 0.0
    %21 = vst [vmem:[#allocation2 + $0x10] sm:$0xff] 0.0
    %22 = vst [vmem:[#allocation2 + $0x18] sm:$0xff] 0.0
  $region17: #{copyhead_forward.28} parent=0 // pred_fallthru
    _
  %v23 = vld [vmem:[%s0] sm:$0xff]
  %v24 = vld [vmem:[%s0 + $0x8] sm:$0xff]
  %v25 = vpack.c.bf16 %v24, %v23
  %v26 = vld [vmem:[%s1] sm:$0xff]
  %v27 = vld [vmem:[%s1 + $0x8] sm:$0xff]
  %v28 = vld [vmem:[%s1 + $0x10] sm:$0xff]
  %v29 = vld [vmem:[%s1 + $0x18] sm:$0xff]
  %v30 = vld [vmem:[%s1 + $0x20] sm:$0xff]
  %v31 = vld [vmem:[%s1 + $0x28] sm:$0xff]
  %v32 = vld [vmem:[%s1 + $0x30] sm:$0xff]
  %v33 = vld [vmem:[%s1 + $0x38] sm:$0xff]
  %v34 = vld [vmem:[%s1 + $0x40] sm:$0xff]
  %v35 = vld [vmem:[%s1 + $0x48] sm:$0xff]
  %v36 = vld [vmem:[%s1 + $0x50] sm:$0xff]
  %v37 = vld [vmem:[%s1 + $0x58] sm:$0xff]
  %v38 = vld [vmem:[%s1 + $0x60] sm:$0xff]
  %v39 = vld [vmem:[%s1 + $0x68] sm:$0xff]
  %v40 = vld [vmem:[%s1 + $0x70] sm:$0xff]
  %v41 = vld [vmem:[%s1 + $0x78] sm:$0xff]
  %v42 = vpack.c.bf16 %v28, %v26
  %v43 = vpack.c.bf16 %v29, %v27
  %v44 = vpack.c.bf16 %v32, %v30
  %v45 = vpack.c.bf16 %v33, %v31
  %v46 = vpack.c.bf16 %v36, %v34
  %v47 = vpack.c.bf16 %v37, %v35
  %v48 = vpack.c.bf16 %v40, %v38
  %v49 = vpack.c.bf16 %v41, %v39
  %v50 = vld [vmem:[#allocation2] sm:$0xff]
  %v51 = vld [vmem:[#allocation2 + $0x8] sm:$0xff]
  %v52 = vld [vmem:[#allocation2 + $0x10] sm:$0xff]
  %v53 = vld [vmem:[#allocation2 + $0x18] sm:$0xff]
  %vm54 = vcmask 523264
  %v56 = vsel %vm54, %v25, 0
  %58 = vmatprep.subr.bf16.mxu0 %v43
  %59 = vmatpush1.bf16.msra.mxu0 %v42
  %60 = vmatprep.subr.bf16.mxu0 %v45
  %61 = vmatpush1.bf16.msra.mxu0 %v44
  %62 = vmatprep.subr.bf16.mxu0 %v47
  %63 = vmatpush1.bf16.msra.mxu0 %v46
  %64 = vmatprep.subr.bf16.mxu0 %v49
  %65 = vmatpush1.bf16.msra.mxu0 %v48
  %66 = vmatprep.subr.bf16.mxu0 0
  %67 = vmatpush1.bf16.msra.mxu0 0
  %68 = vmatprep.subr.bf16.mxu0 0
  %69 = vmatpush1.bf16.msra.mxu0 0
  %70 = vmatprep.subr.bf16.mxu0 0
  %71 = vmatpush1.bf16.msra.mxu0 0
  %72 = vmatprep.subr.bf16.mxu0 0
  %73 = vmatpush1.bf16.msra.mxu0 0
  %74 = vmatprep.subr.bf16.mxu0 0
  %75 = vmatpush1.bf16.msra.mxu0 0
  %76 = vmatprep.subr.bf16.mxu0 0
  %77 = vmatpush1.bf16.msra.mxu0 0
  %78 = vmatprep.subr.bf16.mxu0 0
  %79 = vmatpush1.bf16.msra.mxu0 0
  %80 = vmatprep.subr.bf16.mxu0 0
  %81 = vmatpush1.bf16.msra.mxu0 0
  %82 = vmatprep.subr.bf16.mxu0 0
  %83 = vmatpush1.bf16.msra.mxu0 0
  %84 = vmatprep.subr.bf16.mxu0 0
  %85 = vmatpush1.bf16.msra.mxu0 0
  %86 = vmatprep.subr.bf16.mxu0 0
  %87 = vmatpush1.bf16.msra.mxu0 0
  %88 = vmatprep.subr.bf16.mxu0 0
  %89 = vmatpush1.bf16.msra.mxu0 0
  %90 = vmatprep.mubr.bf16.mxu0 0
  %91 = vmatmul.mubr.bf16.gmra.mrb[0].mxu0 %v56
  %v92 = vpop.f32.mrb[0].mxu0
  %v93 = vadd.f32 0.0, %v92
  %v94 = vpop.f32.mrb[0].mxu0
  %v95 = vadd.f32 0.0, %v94
  %v96 = vpop.f32.mrb[0].mxu0
  %v97 = vadd.f32 0.0, %v96
  %v98 = vpop.f32.mrb[0].mxu0
  %v99 = vadd.f32 0.0, %v98
  %100 = vdwg.mxu0
  %v101 = vadd.f32 %v50, %v93
  %v102 = vadd.f32 %v51, %v95
  %v103 = vadd.f32 %v52, %v97
  %v104 = vadd.f32 %v53, %v99
  %105 = vst [vmem:[#allocation2] sm:$0xff] %v101
  %106 = vst [vmem:[#allocation2 + $0x8] sm:$0xff] %v102
  %107 = vst [vmem:[#allocation2 + $0x10] sm:$0xff] %v103
  %108 = vst [vmem:[#allocation2 + $0x18] sm:$0xff] %v104
  // Predicated region
  $region18: #{copyhead_forward.28} parent=0 // pred_check
    %p109 = pneg %p15
  $region19: #{copyhead_forward.28} parent=0 // pred_check_branch
    %111 = sbr.rel (%p109) target = $region21
  $region20: #{copyhead_forward.28} parent=0 // pred_region
    %v112 = vld [vmem:[#allocation2] sm:$0xff]
    %v113 = vld [vmem:[#allocation2 + $0x8] sm:$0xff]
    %v114 = vld [vmem:[#allocation2 + $0x10] sm:$0xff]
    %v115 = vld [vmem:[#allocation2 + $0x18] sm:$0xff]
    %v116 = vld [vmem:[%s2] sm:$0x3]
    %v118 = vlaneseq
    %v119 = vshrl.u32 %v118, 7
    %v120 = vsub.s32 0, %v119
    %v121 = vrot.slane %v116, %v120
    %v122 = vlaneseq
    %v123 = vshrl.u32 %v122, 7
    %v124 = vsub.s32 1, %v123
    %v125 = vrot.slane %v116, %v124
    %v128 = vadd.f32 %v112, %v121
    %v129 = vadd.f32 %v113, %v125
    %v130 = vadd.f32 %v114, %v121
    %v131 = vadd.f32 %v115, %v125
    %v132 = vmul.f32 %v128, 0.5
    %v133 = vmul.f32 %v129, 0.5
    %v134 = vmul.f32 %v130, 0.5
    %v135 = vmul.f32 %v131, 0.5
    %v136 = vmul.f32 %v128, 0.70710677
    %v137 = vmul.f32 %v129, 0.70710677
    %v138 = vmul.f32 %v130, 0.70710677
    %v139 = vmul.f32 %v131, 0.70710677
    %v140 = verf.f32.pop %v136
    %v141 = verf.f32.pop %v137
    %v142 = verf.f32.pop %v138
    %v143 = verf.f32.pop %v139
    %v144 = vadd.f32 %v140, 1.0
    %v145 = vadd.f32 %v141, 1.0
    %v146 = vadd.f32 %v142, 1.0
    %v147 = vadd.f32 %v143, 1.0
    %v148 = vmul.f32 %v132, %v144
    %v149 = vmul.f32 %v133, %v145
    %v150 = vmul.f32 %v134, %v146
    %v151 = vmul.f32 %v135, %v147
    %152 = vst [vmem:[%s3] sm:$0xff] %v148
    %153 = vst [vmem:[%s3 + $0x8] sm:$0xff] %v149
    %154 = vst [vmem:[%s3 + $0x10] sm:$0xff] %v150
    %155 = vst [vmem:[%s3 + $0x18] sm:$0xff] %v151
  $region21: #{copyhead_forward.28} parent=0 // pred_fallthru
    _
  // Predicated region
  $region22: #{copyhead_forward.28} parent=0 // pred_check
    _
  $region23: #{copyhead_forward.28} parent=0 // pred_check_branch
    %157 = sbr.rel (0) target = $region25
  $region24: #{copyhead_forward.28} parent=0 // pred_region
    _
  $region25: #{copyhead_forward.28} parent=0 // pred_fallthru
    _
  // Predicated region
  $region26: #{copyhead_forward.28} parent=0 // pred_check
    _
  $region27: #{copyhead_forward.28} parent=0 // pred_check_branch
    %159 = sbr.rel (0) target = $region29
  $region28: #{copyhead_forward.28} parent=0 // pred_region
    _
  $region29: #{copyhead_forward.28} parent=0 // pred_fallthru
    _

// kernel: copyhead_forward.29
$region0: #{copyhead_forward.29}
  #allocation0 [shape = 'u32[]', space=smem, size = 0x4, offset = 0x4, fixed_abs, tag = 'smem constant byte address 0x4 - core index']
  #allocation1 [shape = 'u32[144,128]{1,0:T(1,128)}', space=vmem, size = 0x12000, scoped, tag = 'internal scratch']
  #allocation2 [shape = 'f32[16,64]{1,0:T(8,128)}', space=vmem, size = 0x2000, scoped, tag = 'scratch operand']
  %s0 = inlined_call_operand.vmem [shape: f32[16,256], index: 0, kind: input, shape index: {}]
  %s1 = inlined_call_operand.vmem [shape: f32[256,64], index: 1, kind: input, shape index: {}]
  %s2 = inlined_call_operand.vmem [shape: f32[1,64], index: 2, kind: input, shape index: {}]
  %s3 = inlined_call_operand.vmem [shape: f32[16,64], index: 3, kind: output, shape index: {}]
  %s4 = sld [smem:[#allocation0]]
  $region30: #{copyhead_forward.29} parent=0
    _
  %s6 = ssub.s32 1, %s4
  %s7 = scalar_select 0, %s6, %s4
  // Predicated region
  $region2: #{copyhead_forward.29} parent=0 // pred_check
    _
  $region3: #{copyhead_forward.29} parent=0 // pred_check_branch
    %9 = sbr.rel (0) target = $region5
  $region4: #{copyhead_forward.29} parent=0 // pred_region
    _
  $region5: #{copyhead_forward.29} parent=0 // pred_fallthru
    _
  // Predicated region
  $region6: #{copyhead_forward.29} parent=0 // pred_check
    _
  $region7: #{copyhead_forward.29} parent=0 // pred_check_branch
    %11 = sbr.rel (0) target = $region9
  $region8: #{copyhead_forward.29} parent=0 // pred_region
    _
  $region9: #{copyhead_forward.29} parent=0 // pred_fallthru
    _
  // Predicated region
  $region10: #{copyhead_forward.29} parent=0 // pred_check
    _
  $region11: #{copyhead_forward.29} parent=0 // pred_check_branch
    %13 = sbr.rel (0) target = $region13
  $region12: #{copyhead_forward.29} parent=0 // pred_region
    _
  $region13: #{copyhead_forward.29} parent=0 // pred_fallthru
    _
  %p15 = scmp.eq.s32.totalorder 0, 0
  // Predicated region
  $region14: #{copyhead_forward.29} parent=0 // pred_check
    %p16 = pneg %p15
  $region15: #{copyhead_forward.29} parent=0 // pred_check_branch
    %18 = sbr.rel (%p16) target = $region17
  $region16: #{copyhead_forward.29} parent=0 // pred_region
    %vm19 = vcmask 523264
    %20 = vst.msk [vmem:[#allocation2] sm:$0xff] %vm19, 0.0
    %21 = vst.msk [vmem:[#allocation2 + $0x8] sm:$0xff] %vm19, 0.0
  $region17: #{copyhead_forward.29} parent=0 // pred_fallthru
    _
  %v22 = vld [vmem:[%s0] sm:$0xff]
  %v23 = vld [vmem:[%s0 + $0x8] sm:$0xff]
  %v24 = vld [vmem:[%s0 + $0x10] sm:$0xff]
  %v25 = vld [vmem:[%s0 + $0x18] sm:$0xff]
  %v26 = vpack.c.bf16 %v24, %v22
  %v27 = vpack.c.bf16 %v25, %v23
  %v28 = vld [vmem:[%s1] sm:$0xff]
  %v29 = vld [vmem:[%s1 + $0x8] sm:$0xff]
  %v30 = vld [vmem:[%s1 + $0x10] sm:$0xff]
  %v31 = vld [vmem:[%s1 + $0x18] sm:$0xff]
  %v32 = vld [vmem:[%s1 + $0x20] sm:$0xff]
  %v33 = vld [vmem:[%s1 + $0x28] sm:$0xff]
  %v34 = vld [vmem:[%s1 + $0x30] sm:$0xff]
  %v35 = vld [vmem:[%s1 + $0x38] sm:$0xff]
  %v36 = vld [vmem:[%s1 + $0x40] sm:$0xff]
  %v37 = vld [vmem:[%s1 + $0x48] sm:$0xff]
  %v38 = vld [vmem:[%s1 + $0x50] sm:$0xff]
  %v39 = vld [vmem:[%s1 + $0x58] sm:$0xff]
  %v40 = vld [vmem:[%s1 + $0x60] sm:$0xff]
  %v41 = vld [vmem:[%s1 + $0x68] sm:$0xff]
  %v42 = vld [vmem:[%s1 + $0x70] sm:$0xff]
  %v43 = vld [vmem:[%s1 + $0x78] sm:$0xff]
  %v44 = vld [vmem:[%s1 + $0x80] sm:$0xff]
  %v45 = vld [vmem:[%s1 + $0x88] sm:$0xff]
  %v46 = vld [vmem:[%s1 + $0x90] sm:$0xff]
  %v47 = vld [vmem:[%s1 + $0x98] sm:$0xff]
  %v48 = vld [vmem:[%s1 + $0xa0] sm:$0xff]
  %v49 = vld [vmem:[%s1 + $0xa8] sm:$0xff]
  %v50 = vld [vmem:[%s1 + $0xb0] sm:$0xff]
  %v51 = vld [vmem:[%s1 + $0xb8] sm:$0xff]
  %v52 = vld [vmem:[%s1 + $0xc0] sm:$0xff]
  %v53 = vld [vmem:[%s1 + $0xc8] sm:$0xff]
  %v54 = vld [vmem:[%s1 + $0xd0] sm:$0xff]
  %v55 = vld [vmem:[%s1 + $0xd8] sm:$0xff]
  %v56 = vld [vmem:[%s1 + $0xe0] sm:$0xff]
  %v57 = vld [vmem:[%s1 + $0xe8] sm:$0xff]
  %v58 = vld [vmem:[%s1 + $0xf0] sm:$0xff]
  %v59 = vld [vmem:[%s1 + $0xf8] sm:$0xff]
  %v60 = vpack.c.bf16 %v29, %v28
  %v61 = vpack.c.bf16 %v31, %v30
  %v62 = vpack.c.bf16 %v33, %v32
  %v63 = vpack.c.bf16 %v35, %v34
  %v64 = vpack.c.bf16 %v37, %v36
  %v65 = vpack.c.bf16 %v39, %v38
  %v66 = vpack.c.bf16 %v41, %v40
  %v67 = vpack.c.bf16 %v43, %v42
  %v68 = vpack.c.bf16 %v45, %v44
  %v69 = vpack.c.bf16 %v47, %v46
  %v70 = vpack.c.bf16 %v49, %v48
  %v71 = vpack.c.bf16 %v51, %v50
  %v72 = vpack.c.bf16 %v53, %v52
  %v73 = vpack.c.bf16 %v55, %v54
  %v74 = vpack.c.bf16 %v57, %v56
  %v75 = vpack.c.bf16 %v59, %v58
  %v76 = vld [vmem:[#allocation2] sm:$0xff]
  %v77 = vld [vmem:[#allocation2 + $0x8] sm:$0xff]
  %78 = vmatprep.subr.bf16.mxu0 0
  %79 = vmatpush1.bf16.msra.mxu0 %v60
  %80 = vmatprep.subr.bf16.mxu0 0
  %81 = vmatpush1.bf16.msra.mxu0 %v61
  %82 = vmatprep.subr.bf16.mxu0 0
  %83 = vmatpush1.bf16.msra.mxu0 %v62
  %84 = vmatprep.subr.bf16.mxu0 0
  %85 = vmatpush1.bf16.msra.mxu0 %v63
  %86 = vmatprep.subr.bf16.mxu0 0
  %87 = vmatpush1.bf16.msra.mxu0 %v64
  %88 = vmatprep.subr.bf16.mxu0 0
  %89 = vmatpush1.bf16.msra.mxu0 %v65
  %90 = vmatprep.subr.bf16.mxu0 0
  %91 = vmatpush1.bf16.msra.mxu0 %v66
  %92 = vmatprep.subr.bf16.mxu0 0
  %93 = vmatpush1.bf16.msra.mxu0 %v67
  %94 = vmatprep.subr.bf16.mxu0 0
  %95 = vmatpush1.bf16.msra.mxu0 %v68
  %96 = vmatprep.subr.bf16.mxu0 0
  %97 = vmatpush1.bf16.msra.mxu0 %v69
  %98 = vmatprep.subr.bf16.mxu0 0
  %99 = vmatpush1.bf16.msra.mxu0 %v70
  %100 = vmatprep.subr.bf16.mxu0 0
  %101 = vmatpush1.bf16.msra.mxu0 %v71
  %102 = vmatprep.subr.bf16.mxu0 0
  %103 = vmatpush1.bf16.msra.mxu0 %v72
  %104 = vmatprep.subr.bf16.mxu0 0
  %105 = vmatpush1.bf16.msra.mxu0 %v73
  %106 = vmatprep.subr.bf16.mxu0 0
  %107 = vmatpush1.bf16.msra.mxu0 %v74
  %108 = vmatprep.subr.bf16.mxu0 0
  %109 = vmatpush1.bf16.msra.mxu0 %v75
  %110 = vmatprep.mubr.bf16.mxu0 %v27
  %111 = vmatmul.mubr.bf16.gmra.mrb[0].mxu0 %v26
  %v112 = vpop.f32.mrb[0].mxu0
  %v113 = vadd.f32 0.0, %v112
  %v114 = vpop.f32.mrb[0].mxu0
  %v115 = vpop.f32.mrb[0].mxu0
  %v116 = vadd.f32 0.0, %v115
  %v117 = vpop.f32.mrb[0].mxu0
  %118 = vdwg.mxu0
  %v119 = vadd.f32 %v76, %v113
  %v120 = vadd.f32 %v77, %v116
  %vm121 = vcmask 523264
  %122 = vst.msk [vmem:[#allocation2] sm:$0xff] %vm121, %v119
  %123 = vst.msk [vmem:[#allocation2 + $0x8] sm:$0xff] %vm121, %v120
  // Predicated region
  $region18: #{copyhead_forward.29} parent=0 // pred_check
    %p124 = pneg %p15
  $region19: #{copyhead_forward.29} parent=0 // pred_check_branch
    %126 = sbr.rel (%p124) target = $region21
  $region20: #{copyhead_forward.29} parent=0 // pred_region
    %v127 = vld [vmem:[#allocation2] sm:$0xff]
    %v128 = vld [vmem:[#allocation2 + $0x8] sm:$0xff]
    %v129 = vld [vmem:[%s2] sm:$0x1]
    %v131 = vlaneseq
    %v132 = vshrl.u32 %v131, 7
    %v133 = vsub.s32 0, %v132
    %v134 = vrot.slane %v129, %v133
    %v136 = vadd.f32 %v127, %v134
    %v137 = vadd.f32 %v128, %v134
    %138 = vst.msk [vmem:[%s3] sm:$0xff] %vm121, %v136
    %139 = vst.msk [vmem:[%s3 + $0x8] sm:$0xff] %vm121, %v137
  $region21: #{copyhead_forward.29} parent=0 // pred_fallthru
    _
  // Predicated region
  $region22: #{copyhead_forward.29} parent=0 // pred_check
    _
  $region23: #{copyhead_forward.29} parent=0 // pred_check_branch
    %141 = sbr.rel (0) target = $region25
  $region24: #{copyhead_forward.29} parent=0 // pred_region
    _
  $region25: #{copyhead_forward.29} parent=0 // pred_fallthru
    _
  // Predicated region
  $region26: #{copyhead_forward.29} parent=0 // pred_check
    _
  $region27: #{copyhead_forward.29} parent=0 // pred_check_branch
    %143 = sbr.rel (0) target = $region29
  $region28: #{copyhead_forward.29} parent=0 // pred_region
    _
  $region29: #{copyhead_forward.29} parent=0 // pred_fallthru
    _

// kernel: copyhead_forward.30
$region0: #{copyhead_forward.30}
  #allocation0 [shape = 'u32[]', space=smem, size = 0x4, offset = 0x4, fixed_abs, tag = 'smem constant byte address 0x4 - core index']
  #allocation1 [shape = 'u32[144,128]{1,0:T(1,128)}', space=vmem, size = 0x12000, scoped, tag = 'internal scratch']
  %s0 = inlined_call_operand.vmem [shape: f32[16,64], index: 0, kind: input, shape index: {}]
  %s1 = inlined_call_operand.vmem [shape: f32[16,64], index: 1, kind: input, shape index: {}]
  %s2 = inlined_call_operand.vmem [shape: f32[1,64], index: 2, kind: input, shape index: {}]
  %s3 = inlined_call_operand.vmem [shape: f32[1,64], index: 3, kind: input, shape index: {}]
  %s4 = inlined_call_operand.vmem [shape: f32[16,64], index: 4, kind: output, shape index: {}]
  %s5 = sld [smem:[#allocation0]]
  $region26: #{copyhead_forward.30} parent=0
    _
  %s7 = ssub.s32 1, %s5
  %s8 = scalar_select 0, %s7, %s5
  // Predicated region
  $region2: #{copyhead_forward.30} parent=0 // pred_check
    _
  $region3: #{copyhead_forward.30} parent=0 // pred_check_branch
    %10 = sbr.rel (0) target = $region5
  $region4: #{copyhead_forward.30} parent=0 // pred_region
    _
  $region5: #{copyhead_forward.30} parent=0 // pred_fallthru
    _
  // Predicated region
  $region6: #{copyhead_forward.30} parent=0 // pred_check
    _
  $region7: #{copyhead_forward.30} parent=0 // pred_check_branch
    %12 = sbr.rel (0) target = $region9
  $region8: #{copyhead_forward.30} parent=0 // pred_region
    _
  $region9: #{copyhead_forward.30} parent=0 // pred_fallthru
    _
  // Predicated region
  $region10: #{copyhead_forward.30} parent=0 // pred_check
    _
  $region11: #{copyhead_forward.30} parent=0 // pred_check_branch
    %14 = sbr.rel (0) target = $region13
  $region12: #{copyhead_forward.30} parent=0 // pred_region
    _
  $region13: #{copyhead_forward.30} parent=0 // pred_fallthru
    _
  // Predicated region
  $region14: #{copyhead_forward.30} parent=0 // pred_check
    _
  $region15: #{copyhead_forward.30} parent=0 // pred_check_branch
    %16 = sbr.rel (0) target = $region17
  $region16: #{copyhead_forward.30} parent=0 // pred_region
    _
  $region17: #{copyhead_forward.30} parent=0 // pred_fallthru
    _
  %v17 = vld [vmem:[%s0] sm:$0xff]
  %v18 = vld [vmem:[%s0 + $0x8] sm:$0xff]
  %v19 = vld [vmem:[%s1] sm:$0xff]
  %v20 = vld [vmem:[%s1 + $0x8] sm:$0xff]
  %v21 = vadd.f32 %v17, %v19
  %v22 = vadd.f32 %v18, %v20
  %vm23 = vcmask 523264
  %v24 = vsel %vm23, %v21, 0.0
  %25 = vadd.xlane.f32.xlu0 %v24
  %v26 = vpop.xlane.xlu0 %25
  %v27 = vsel %vm23, %v22, 0.0
  %28 = vadd.xlane.f32.xlu0 %v27
  %v29 = vpop.xlane.xlu0 %28
  %v30 = vrcp.pop 64.0
  %v31 = vmul.f32 %v26, %v30
  %v32 = vmul.f32 %v29, %v30
  %v33 = vsub.f32 %v21, %v31
  %v34 = vsub.f32 %v22, %v32
  %v35 = vmul.f32 %v33, %v33
  %v36 = vmul.f32 %v34, %v34
  %v37 = vsel %vm23, %v35, 0.0
  %38 = vadd.xlane.f32.xlu0 %v37
  %v39 = vpop.xlane.xlu0 %38
  %v40 = vsel %vm23, %v36, 0.0
  %41 = vadd.xlane.f32.xlu0 %v40
  %v42 = vpop.xlane.xlu0 %41
  %v43 = vmul.f32 %v39, %v30
  %v44 = vmul.f32 %v42, %v30
  %v45 = vadd.f32 %v43, 1e-05
  %v46 = vadd.f32 %v44, 1e-05
  %v47 = vrsqrt.pop %v45
  %v48 = vrsqrt.pop %v46
  %v49 = vmul.f32 %v33, %v47
  %v50 = vmul.f32 %v34, %v48
  %v51 = vld [vmem:[%s2] sm:$0x1]
  %v53 = vlaneseq
  %v54 = vshrl.u32 %v53, 7
  %v55 = vsub.s32 0, %v54
  %v56 = vrot.slane %v51, %v55
  %v58 = vmul.f32 %v49, %v56
  %v59 = vmul.f32 %v50, %v56
  %v60 = vld [vmem:[%s3] sm:$0x1]
  %v62 = vlaneseq
  %v63 = vshrl.u32 %v62, 7
  %v64 = vsub.s32 0, %v63
  %v65 = vrot.slane %v60, %v64
  %v67 = vadd.f32 %v58, %v65
  %v68 = vadd.f32 %v59, %v65
  %69 = vst.msk [vmem:[%s4] sm:$0xff] %vm23, %v67
  %70 = vst.msk [vmem:[%s4 + $0x8] sm:$0xff] %vm23, %v68
  // Predicated region
  $region18: #{copyhead_forward.30} parent=0 // pred_check
    _
  $region19: #{copyhead_forward.30} parent=0 // pred_check_branch
    %72 = sbr.rel (0) target = $region21
  $region20: #{copyhead_forward.30} parent=0 // pred_region
    _
  $region21: #{copyhead_forward.30} parent=0 // pred_fallthru
    _
  // Predicated region
  $region22: #{copyhead_forward.30} parent=0 // pred_check
    _
  $region23: #{copyhead_forward.30} parent=0 // pred_check_branch
    %74 = sbr.rel (0) target = $region25
  $region24: #{copyhead_forward.30} parent=0 // pred_region
    _
  $region25: #{copyhead_forward.30} parent=0 // pred_fallthru
    _

// kernel: copyhead_forward.31
$region0: #{copyhead_forward.31}
  #allocation0 [shape = 'u32[]', space=smem, size = 0x4, offset = 0x4, fixed_abs, tag = 'smem constant byte address 0x4 - core index']
  #allocation1 [shape = 'u32[144,128]{1,0:T(1,128)}', space=vmem, size = 0x12000, scoped, tag = 'internal scratch']
  #allocation2 [shape = 'f32[16,192]{1,0:T(8,128)}', space=vmem, size = 0x4000, scoped, tag = 'scratch operand']
  %s0 = inlined_call_operand.vmem [shape: f32[16,64], index: 0, kind: input, shape index: {}]
  %s1 = inlined_call_operand.vmem [shape: f32[64,192], index: 1, kind: input, shape index: {}]
  %s2 = inlined_call_operand.vmem [shape: f32[16,192], index: 2, kind: output, shape index: {}]
  %s3 = sld [smem:[#allocation0]]
  $region26: #{copyhead_forward.31} parent=0
    _
  %s5 = ssub.s32 1, %s3
  %s6 = scalar_select 0, %s5, %s3
  // Predicated region
  $region2: #{copyhead_forward.31} parent=0 // pred_check
    _
  $region3: #{copyhead_forward.31} parent=0 // pred_check_branch
    %8 = sbr.rel (0) target = $region5
  $region4: #{copyhead_forward.31} parent=0 // pred_region
    _
  $region5: #{copyhead_forward.31} parent=0 // pred_fallthru
    _
  // Predicated region
  $region6: #{copyhead_forward.31} parent=0 // pred_check
    _
  $region7: #{copyhead_forward.31} parent=0 // pred_check_branch
    %10 = sbr.rel (0) target = $region9
  $region8: #{copyhead_forward.31} parent=0 // pred_region
    _
  $region9: #{copyhead_forward.31} parent=0 // pred_fallthru
    _
  %p12 = scmp.eq.s32.totalorder 0, 0
  // Predicated region
  $region10: #{copyhead_forward.31} parent=0 // pred_check
    %p13 = pneg %p12
  $region11: #{copyhead_forward.31} parent=0 // pred_check_branch
    %15 = sbr.rel (%p13) target = $region13
  $region12: #{copyhead_forward.31} parent=0 // pred_region
    %16 = vst [vmem:[#allocation2] sm:$0xff] 0.0
    %vm17 = vcmask 523264
    %18 = vst.msk [vmem:[#allocation2 + $0x8] sm:$0xff] %vm17, 0.0
    %19 = vst [vmem:[#allocation2 + $0x10] sm:$0xff] 0.0
    %20 = vst.msk [vmem:[#allocation2 + $0x18] sm:$0xff] %vm17, 0.0
  $region13: #{copyhead_forward.31} parent=0 // pred_fallthru
    _
  %v21 = vld [vmem:[%s0] sm:$0xff]
  %v22 = vld [vmem:[%s0 + $0x8] sm:$0xff]
  %v23 = vpack.c.bf16 %v22, %v21
  %v24 = vld [vmem:[%s1] sm:$0xff]
  %v25 = vld [vmem:[%s1 + $0x8] sm:$0xff]
  %v26 = vld [vmem:[%s1 + $0x10] sm:$0xff]
  %v27 = vld [vmem:[%s1 + $0x18] sm:$0xff]
  %v28 = vld [vmem:[%s1 + $0x20] sm:$0xff]
  %v29 = vld [vmem:[%s1 + $0x28] sm:$0xff]
  %v30 = vld [vmem:[%s1 + $0x30] sm:$0xff]
  %v31 = vld [vmem:[%s1 + $0x38] sm:$0xff]
  %v32 = vld [vmem:[%s1 + $0x40] sm:$0xff]
  %v33 = vld [vmem:[%s1 + $0x48] sm:$0xff]
  %v34 = vld [vmem:[%s1 + $0x50] sm:$0xff]
  %v35 = vld [vmem:[%s1 + $0x58] sm:$0xff]
  %v36 = vld [vmem:[%s1 + $0x60] sm:$0xff]
  %v37 = vld [vmem:[%s1 + $0x68] sm:$0xff]
  %v38 = vld [vmem:[%s1 + $0x70] sm:$0xff]
  %v39 = vld [vmem:[%s1 + $0x78] sm:$0xff]
  %v40 = vpack.c.bf16 %v26, %v24
  %v41 = vpack.c.bf16 %v27, %v25
  %v42 = vpack.c.bf16 %v30, %v28
  %v43 = vpack.c.bf16 %v31, %v29
  %v44 = vpack.c.bf16 %v34, %v32
  %v45 = vpack.c.bf16 %v35, %v33
  %v46 = vpack.c.bf16 %v38, %v36
  %v47 = vpack.c.bf16 %v39, %v37
  %v48 = vld [vmem:[#allocation2] sm:$0xff]
  %v49 = vld [vmem:[#allocation2 + $0x8] sm:$0xff]
  %v50 = vld [vmem:[#allocation2 + $0x10] sm:$0xff]
  %v51 = vld [vmem:[#allocation2 + $0x18] sm:$0xff]
  %vm52 = vcmask 523264
  %v54 = vsel %vm52, %v23, 0
  %56 = vmatprep.subr.bf16.mxu0 %v41
  %57 = vmatpush1.bf16.msra.mxu0 %v40
  %58 = vmatprep.subr.bf16.mxu0 %v43
  %59 = vmatpush1.bf16.msra.mxu0 %v42
  %60 = vmatprep.subr.bf16.mxu0 %v45
  %61 = vmatpush1.bf16.msra.mxu0 %v44
  %62 = vmatprep.subr.bf16.mxu0 %v47
  %63 = vmatpush1.bf16.msra.mxu0 %v46
  %64 = vmatprep.subr.bf16.mxu0 0
  %65 = vmatpush1.bf16.msra.mxu0 0
  %66 = vmatprep.subr.bf16.mxu0 0
  %67 = vmatpush1.bf16.msra.mxu0 0
  %68 = vmatprep.subr.bf16.mxu0 0
  %69 = vmatpush1.bf16.msra.mxu0 0
  %70 = vmatprep.subr.bf16.mxu0 0
  %71 = vmatpush1.bf16.msra.mxu0 0
  %72 = vmatprep.subr.bf16.mxu0 0
  %73 = vmatpush1.bf16.msra.mxu0 0
  %74 = vmatprep.subr.bf16.mxu0 0
  %75 = vmatpush1.bf16.msra.mxu0 0
  %76 = vmatprep.subr.bf16.mxu0 0
  %77 = vmatpush1.bf16.msra.mxu0 0
  %78 = vmatprep.subr.bf16.mxu0 0
  %79 = vmatpush1.bf16.msra.mxu0 0
  %80 = vmatprep.subr.bf16.mxu0 0
  %81 = vmatpush1.bf16.msra.mxu0 0
  %82 = vmatprep.subr.bf16.mxu0 0
  %83 = vmatpush1.bf16.msra.mxu0 0
  %84 = vmatprep.subr.bf16.mxu0 0
  %85 = vmatpush1.bf16.msra.mxu0 0
  %86 = vmatprep.subr.bf16.mxu0 0
  %87 = vmatpush1.bf16.msra.mxu0 0
  %88 = vmatprep.mubr.bf16.mxu0 0
  %89 = vmatmul.mubr.bf16.gmra.mrb[0].mxu0 %v54
  %v90 = vpop.f32.mrb[0].mxu0
  %v91 = vadd.f32 0.0, %v90
  %v92 = vpop.f32.mrb[0].mxu0
  %v93 = vadd.f32 0.0, %v92
  %v94 = vpop.f32.mrb[0].mxu0
  %v95 = vadd.f32 0.0, %v94
  %v96 = vpop.f32.mrb[0].mxu0
  %v97 = vadd.f32 0.0, %v96
  %98 = vdwg.mxu0
  %v99 = vadd.f32 %v48, %v91
  %v100 = vadd.f32 %v49, %v93
  %v101 = vadd.f32 %v50, %v95
  %v102 = vadd.f32 %v51, %v97
  %103 = vst [vmem:[#allocation2] sm:$0xff] %v99
  %104 = vst.msk [vmem:[#allocation2 + $0x8] sm:$0xff] %vm52, %v100
  %105 = vst [vmem:[#allocation2 + $0x10] sm:$0xff] %v101
  %106 = vst.msk [vmem:[#allocation2 + $0x18] sm:$0xff] %vm52, %v102
  // Predicated region
  $region14: #{copyhead_forward.31} parent=0 // pred_check
    %p107 = pneg %p12
  $region15: #{copyhead_forward.31} parent=0 // pred_check_branch
    %109 = sbr.rel (%p107) target = $region17
  $region16: #{copyhead_forward.31} parent=0 // pred_region
    %v110 = vld [vmem:[#allocation2] sm:$0xff]
    %v111 = vld [vmem:[#allocation2 + $0x8] sm:$0xff]
    %v112 = vld [vmem:[#allocation2 + $0x10] sm:$0xff]
    %v113 = vld [vmem:[#allocation2 + $0x18] sm:$0xff]
    %114 = vst [vmem:[%s2] sm:$0xff] %v110
    %115 = vst.msk [vmem:[%s2 + $0x8] sm:$0xff] %vm52, %v111
    %116 = vst [vmem:[%s2 + $0x10] sm:$0xff] %v112
    %117 = vst.msk [vmem:[%s2 + $0x18] sm:$0xff] %vm52, %v113
  $region17: #{copyhead_forward.31} parent=0 // pred_fallthru
    _
  // Predicated region
  $region18: #{copyhead_forward.31} parent=0 // pred_check
    _
  $region19: #{copyhead_forward.31} parent=0 // pred_check_branch
    %119 = sbr.rel (0) target = $region21
  $region20: #{copyhead_forward.31} parent=0 // pred_region
    _
  $region21: #{copyhead_forward.31} parent=0 // pred_fallthru
    _
  // Predicated region
  $region22: #{copyhead_forward.31} parent=0 // pred_check
    _
  $region23: #{copyhead_forward.31} parent=0 // pred_check_branch
    %121 = sbr.rel (0) target = $region25
  $region24: #{copyhead_forward.31} parent=0 // pred_region
    _
  $region25: #{copyhead_forward.31} parent=0 // pred_fallthru
    _

// kernel: copyhead_forward.45
$region0: #{copyhead_forward.45}
  #allocation0 [shape = 'u32[]', space=smem, size = 0x4, offset = 0x4, fixed_abs, tag = 'smem constant byte address 0x4 - core index']
  #allocation1 [shape = 'u32[144,128]{1,0:T(1,128)}', space=vmem, size = 0x12000, scoped, tag = 'internal scratch']
  #allocation2 [shape = 'f32[2,1]{1,0:T(2,128)}', space=vmem, size = 0x400, scoped, tag = 'scratch operand']
  #allocation3 [shape = 'f32[1,1]{1,0:T(1,128)S(1)}', space=vmem, size = 0x200, scoped, tag = 'scoped memory for copyhead_forward.45']
  %s0 = inlined_call_operand.vmem [shape: f32[2,64], index: 0, kind: input, shape index: {}]
  %s1 = inlined_call_operand.vmem [shape: f32[64,1], index: 1, kind: input, shape index: {}]
  %s2 = inlined_call_operand.<no memory space> [shape: f32[1,1], index: 2, kind: input, shape index: {}]
  %s3 = inlined_call_operand.vmem [shape: f32[2,1], index: 3, kind: output, shape index: {}]
  %s4 = sld [smem:[#allocation0]]
  $region30: #{copyhead_forward.45} parent=0
    _
  %s6 = ssub.s32 1, %s4
  %s7 = scalar_select 0, %s6, %s4
  %v8 = vstv %s2
  %9 = vst [vmem:[#allocation3] sm:$0x1] %v8
  // Predicated region
  $region2: #{copyhead_forward.45} parent=0 // pred_check
    _
  $region3: #{copyhead_forward.45} parent=0 // pred_check_branch
    %11 = sbr.rel (0) target = $region5
  $region4: #{copyhead_forward.45} parent=0 // pred_region
    _
  $region5: #{copyhead_forward.45} parent=0 // pred_fallthru
    _
  // Predicated region
  $region6: #{copyhead_forward.45} parent=0 // pred_check
    _
  $region7: #{copyhead_forward.45} parent=0 // pred_check_branch
    %13 = sbr.rel (0) target = $region9
  $region8: #{copyhead_forward.45} parent=0 // pred_region
    _
  $region9: #{copyhead_forward.45} parent=0 // pred_fallthru
    _
  // Predicated region
  $region10: #{copyhead_forward.45} parent=0 // pred_check
    _
  $region11: #{copyhead_forward.45} parent=0 // pred_check_branch
    %15 = sbr.rel (0) target = $region13
  $region12: #{copyhead_forward.45} parent=0 // pred_region
    _
  $region13: #{copyhead_forward.45} parent=0 // pred_fallthru
    _
  %p17 = scmp.eq.s32.totalorder 0, 0
  // Predicated region
  $region14: #{copyhead_forward.45} parent=0 // pred_check
    %p18 = pneg %p17
  $region15: #{copyhead_forward.45} parent=0 // pred_check_branch
    %20 = sbr.rel (%p18) target = $region17
  $region16: #{copyhead_forward.45} parent=0 // pred_region
    %vm21 = vcmask 1024
    %22 = vst.msk [vmem:[#allocation2] sm:$0x3] %vm21, 0.0
  $region17: #{copyhead_forward.45} parent=0 // pred_fallthru
    _
  %v23 = vld [vmem:[%s0] sm:$0x3]
  %v24 = vpack.c.bf16 %v23, %v23
  %v25 = vld [vmem:[%s1] sm:$0xff]
  %v26 = vld [vmem:[%s1 + $0x8] sm:$0xff]
  %v27 = vld [vmem:[%s1 + $0x10] sm:$0xff]
  %v28 = vld [vmem:[%s1 + $0x18] sm:$0xff]
  %v29 = vld [vmem:[%s1 + $0x20] sm:$0xff]
  %v30 = vld [vmem:[%s1 + $0x28] sm:$0xff]
  %v31 = vld [vmem:[%s1 + $0x30] sm:$0xff]
  %v32 = vld [vmem:[%s1 + $0x38] sm:$0xff]
  %v33 = vpack.c.bf16 %v26, %v25
  %v34 = vpack.c.bf16 %v28, %v27
  %v35 = vpack.c.bf16 %v30, %v29
  %v36 = vpack.c.bf16 %v32, %v31
  %v37 = vld [vmem:[#allocation2] sm:$0x3]
  %vm38 = vcmask 523264
  %v40 = vsel %vm38, %v24, 0
  %42 = vmatprep.subr.bf16.mxu0 0
  %43 = vmatpush1.bf16.msra.mxu0 %v33
  %44 = vmatprep.subr.bf16.mxu0 0
  %45 = vmatpush1.bf16.msra.mxu0 %v34
  %46 = vmatprep.subr.bf16.mxu0 0
  %47 = vmatpush1.bf16.msra.mxu0 %v35
  %48 = vmatprep.subr.bf16.mxu0 0
  %49 = vmatpush1.bf16.msra.mxu0 %v36
  %50 = vmatprep.subr.bf16.mxu0 0
  %51 = vmatpush1.bf16.msra.mxu0 0
  %52 = vmatprep.subr.bf16.mxu0 0
  %53 = vmatpush1.bf16.msra.mxu0 0
  %54 = vmatprep.subr.bf16.mxu0 0
  %55 = vmatpush1.bf16.msra.mxu0 0
  %56 = vmatprep.subr.bf16.mxu0 0
  %57 = vmatpush1.bf16.msra.mxu0 0
  %58 = vmatprep.subr.bf16.mxu0 0
  %59 = vmatpush1.bf16.msra.mxu0 0
  %60 = vmatprep.subr.bf16.mxu0 0
  %61 = vmatpush1.bf16.msra.mxu0 0
  %62 = vmatprep.subr.bf16.mxu0 0
  %63 = vmatpush1.bf16.msra.mxu0 0
  %64 = vmatprep.subr.bf16.mxu0 0
  %65 = vmatpush1.bf16.msra.mxu0 0
  %66 = vmatprep.subr.bf16.mxu0 0
  %67 = vmatpush1.bf16.msra.mxu0 0
  %68 = vmatprep.subr.bf16.mxu0 0
  %69 = vmatpush1.bf16.msra.mxu0 0
  %70 = vmatprep.subr.bf16.mxu0 0
  %71 = vmatpush1.bf16.msra.mxu0 0
  %72 = vmatprep.subr.bf16.mxu0 0
  %73 = vmatpush1.bf16.msra.mxu0 0
  %74 = vmatprep.mubr.bf16.mxu0 0
  %75 = vmatmul.mubr.bf16.gmra.mrb[0].mxu0 %v40
  %v76 = vpop.f32.mrb[0].mxu0
  %v77 = vadd.f32 0.0, %v76
  %v78 = vpop.f32.mrb[0].mxu0
  %v79 = vpop.f32.mrb[0].mxu0
  %v80 = vpop.f32.mrb[0].mxu0
  %81 = vdwg.mxu0
  %v82 = vadd.f32 %v37, %v77
  %vm83 = vcmask 1024
  %84 = vst.msk [vmem:[#allocation2] sm:$0x3] %vm83, %v82
  // Predicated region
  $region18: #{copyhead_forward.45} parent=0 // pred_check
    %p85 = pneg %p17
  $region19: #{copyhead_forward.45} parent=0 // pred_check_branch
    %87 = sbr.rel (%p85) target = $region21
  $region20: #{copyhead_forward.45} parent=0 // pred_region
    %v88 = vld [vmem:[#allocation2] sm:$0x3]
    %v89 = vld [vmem:[#allocation3] sm:$0x1]
    %v91 = vlaneseq
    %v92 = vshrl.u32 %v91, 7
    %v93 = vsub.s32 0, %v92
    %v94 = vrot.slane %v89, %v93
    %v96 = vadd.f32 %v88, %v94
    %v97 = vxor.u32 %v96, 2147483648
    %v98 = vmul.f32 %v97, 1.442695
    %v99 = vpow.pop %v98
    %v100 = vadd.f32 %v99, 1.0
    %v101 = vrcp.pop %v100
    %v102 = vmul.f32 1.0, %v101
    %103 = vst.msk [vmem:[%s3] sm:$0x3] %vm83, %v102
  $region21: #{copyhead_forward.45} parent=0 // pred_fallthru
    _
  // Predicated region
  $region22: #{copyhead_forward.45} parent=0 // pred_check
    _
  $region23: #{copyhead_forward.45} parent=0 // pred_check_branch
    %105 = sbr.rel (0) target = $region25
  $region24: #{copyhead_forward.45} parent=0 // pred_region
    _
  $region25: #{copyhead_forward.45} parent=0 // pred_fallthru
    _
  // Predicated region
  $region26: #{copyhead_forward.45} parent=0 // pred_check
    _
  $region27: #{copyhead_forward.45} parent=0 // pred_check_branch
    %107 = sbr.rel (0) target = $region29
  $region28: #{copyhead_forward.45} parent=0 // pred_region
    _
  $region29: #{copyhead_forward.45} parent=0 // pred_fallthru
    _

</llo_original>
